<compile_context>
chip_gen: v6e
topology: v6e:2x2x1
jax: 0.10.0
libtpu: 0.0.40
codegen_flags: <defaults>
</compile_context>

<pallas_src>
import jax
import jax.numpy as jnp
from jax import lax
from jax.experimental import pallas as pl
from jax.experimental.pallas import tpu as pltpu


def lstm_mlp_kernel(xall_ref,                        # (T*Bp, 4H) layer-1 input proj (b1 folded)
                    whh1_ref,                        # (H, 4H)
                    wih2_ref, whh2_ref, b2_ref,      # (H,4H) (H,4H) (1,4H)
                    wfc_a_ref, wfc_b_ref, bfc_ref,   # (H,256) (H,256) (1,256)
                    wfc1_ref, bfc1_ref,              # (256,64) (1,64)
                    wfc2_ref, bfc2_ref,              # (64,O)   (1,O)
                    out_ref):                        # (Bp, O)
    H = whh1_ref.shape[0]
    Bp = out_ref.shape[0]
    T = xall_ref.shape[0] // Bp

    xall = xall_ref[...]                             # (T*Bp, 4H), resident
    whh1 = whh1_ref[...]
    wih2 = wih2_ref[...]
    whh2 = whh2_ref[...]

    # ---- hoisted broadcasts / masks (loop below is unrolled; JAX does not
    # CSE broadcast_in_dim inside loop bodies) ------------------------------
    b2b = jnp.broadcast_to(b2_ref[...], (Bp, 4 * H))
    lane = lax.broadcasted_iota(jnp.int32, (Bp, 4 * H), 1)
    tanh_mask = (lane >= 2 * H) & (lane < 3 * H)      # PyTorch gate order i,f,g,o

    def gate_update(gates, c):
        # Single-tanh gate nonlinearity: sigmoid(x) = 0.5*(1 + tanh(x/2)).
        # Pre-scale the i/f/o lanes by 0.5, run ONE tanh over the full
        # (Bp,4H) vreg, then affine-fix the i/f/o lanes.
        pre = jnp.where(tanh_mask, gates, 0.5 * gates)
        t = jnp.tanh(pre)
        act = jnp.where(tanh_mask, t, 0.5 * t + 0.5)
        i = act[:, 0 * H:1 * H]
        f = act[:, 1 * H:2 * H]
        g = act[:, 2 * H:3 * H]
        o = act[:, 3 * H:4 * H]
        c_new = f * c + i * g
        h_new = o * jnp.tanh(c_new)
        return h_new, c_new

    zeros = jnp.zeros((Bp, H), jnp.float32)
    h1, c1, h2, c2 = zeros, zeros, zeros, zeros

    # ---- recurrence: fully unrolled (T static & small) --------------------
    for t in range(T):
        # Layer 1: only the recurrent matmul remains on the serial path; the
        # input projection was folded into the gathered xall slab.
        g1 = xall[t * Bp:(t + 1) * Bp, :] + jnp.dot(
            h1, whh1, preferred_element_type=jnp.float32)
        h1, c1 = gate_update(g1, c1)

        # Layer 2: un-fused.  h2@whh2 depends only on the previous step, so
        # it can overlap layer-1 work; no lane concat on the critical path.
        g2 = (jnp.dot(h1, wih2, preferred_element_type=jnp.float32)
              + jnp.dot(h2, whh2, preferred_element_type=jnp.float32)
              + b2b)
        h2, c2 = gate_update(g2, c2)

    # ---- epilogue MLP ------------------------------------------------------
    # torch.cat((hidden[-2], hidden[-1]), 1) @ wfc == h1 @ wfc[:H] + h2 @ wfc[H:]
    hid = jnp.maximum(
        jnp.dot(h1, wfc_a_ref[...], preferred_element_type=jnp.float32)
        + jnp.dot(h2, wfc_b_ref[...], preferred_element_type=jnp.float32)
        + bfc_ref[...], 0.0)
    hid = jnp.maximum(
        jnp.dot(hid, wfc1_ref[...], preferred_element_type=jnp.float32)
        + bfc1_ref[...], 0.0)
    out = (jnp.dot(hid, wfc2_ref[...], preferred_element_type=jnp.float32)
           + bfc2_ref[...])
    out_ref[...] = out.astype(out_ref.dtype)


def prepare_params(params):
    """One-time (off the forward path) weight plumbing for the kernel."""
    H = params["whh1"].shape[0]
    return dict(
        # Lookup-then-linear is linear: fuse Embedding @ wih1 + b1 into a
        # (V, 4H) table so the kernel never touches E-dim activations.
        xtable=params["embedding"] @ params["wih1"] + params["b1"],
        whh1=params["whh1"],
        wih2=params["wih2"], whh2=params["whh2"], b2=params["b2"],
        # fc weight split so the epilogue avoids a lane-axis concat of [h1,h2].
        wfc_a=params["wfc"][:H], wfc_b=params["wfc"][H:], bfc=params["bfc"],
        wfc1=params["wfc1"], bfc1=params["bfc1"],
        wfc2=params["wfc2"], bfc2=params["bfc2"],
    )


@jax.jit
def network_forward(prepped, text):
    B, T = text.shape
    fourH = prepped["whh1"].shape[1]
    O = prepped["wfc2"].shape[1]
    Bp = ((B + 7) // 8) * 8          # pad batch to one sublane tile

    # Gather the fused layer-1 input projection in time-major order:
    # rows [t*Bp + b] hold (emb(token[b,t]) @ wih1 + b1); padded rows are zero
    # (they evolve independently and are sliced away at the end).
    xall = prepped["xtable"][text.T.reshape(-1)]                # (T*B, 4H)
    if Bp != B:
        xall = xall.reshape(T, B, fourH)
        xall = jnp.pad(xall, ((0, 0), (0, Bp - B), (0, 0)))
        xall = xall.reshape(T * Bp, fourH)

    args = (xall,
            prepped["whh1"],
            prepped["wih2"], prepped["whh2"], prepped["b2"],
            prepped["wfc_a"], prepped["wfc_b"], prepped["bfc"],
            prepped["wfc1"], prepped["bfc1"],
            prepped["wfc2"], prepped["bfc2"])

    vspec = pl.BlockSpec(memory_space=pltpu.MemorySpace.VMEM)
    out_p = pl.pallas_call(
        lstm_mlp_kernel,
        out_shape=jax.ShapeDtypeStruct((Bp, O), jnp.float32),
        in_specs=[vspec] * len(args),
        out_specs=vspec,
    )(*args)
    return out_p[:B]


def reference_forward(params, text):
    # Pure-JAX reference (same math, original weight layout) for correctness.
    emb = params["embedding"][text]
    B, T, _ = emb.shape
    H = params["whh1"].shape[0]

    def cell(x, h, c, wih, whh, b):
        g = x @ wih + h @ whh + b
        i = jax.nn.sigmoid(g[:, :H]); f = jax.nn.sigmoid(g[:, H:2 * H])
        gg = jnp.tanh(g[:, 2 * H:3 * H]); o = jax.nn.sigmoid(g[:, 3 * H:])
        c = f * c + i * gg
        return o * jnp.tanh(c), c

    h1 = c1 = h2 = c2 = jnp.zeros((B, H), jnp.float32)
    for t in range(T):
        h1, c1 = cell(emb[:, t, :], h1, c1, params["wih1"], params["whh1"], params["b1"])
        h2, c2 = cell(h1, h2, c2, params["wih2"], params["whh2"], params["b2"])
    hid = jnp.concatenate([h1, h2], axis=1)
    hid = jnp.maximum(hid @ params["wfc"] + params["bfc"], 0.0)
    hid = jnp.maximum(hid @ params["wfc1"] + params["bfc1"], 0.0)
    return hid @ params["wfc2"] + params["bfc2"]


def init_params(key, vocab_size, E, H, O):
    ks = jax.random.split(key, 13)
    s = 1.0 / float(jnp.sqrt(H))

    def u(k, shape):
        return jax.random.uniform(k, shape, jnp.float32, -s, s)

    # NOTE: PyTorch nn.LSTM has bias_ih + bias_hh per layer; b1/b2 here stand
    # for their sum (set b = bias_ih + bias_hh when importing real weights).
    return dict(
        embedding=jax.random.normal(ks[0], (vocab_size, E), jnp.float32) * 0.1,
        wih1=u(ks[1], (E, 4 * H)), whh1=u(ks[2], (H, 4 * H)), b1=u(ks[3], (1, 4 * H)),
        wih2=u(ks[4], (H, 4 * H)), whh2=u(ks[5], (H, 4 * H)), b2=u(ks[6], (1, 4 * H)),
        wfc=u(ks[7], (2 * H, 256)), bfc=u(ks[8], (1, 256)),
        wfc1=u(ks[9], (256, 64)), bfc1=u(ks[10], (1, 64)),
        wfc2=u(ks[11], (64, O)), bfc2=u(ks[12], (1, O)),
    )


if __name__ == "__main__":
    # Small shapes consistent with the module: batch=2, seq=8, vocab=50,
    # embedding_dim=32, hidden_dim=32, n_layers=2, output_dim=4.
    B, T, V, E, H, O = 2, 8, 50, 32, 32, 4
    key = jax.random.PRNGKey(0)
    k_param, k_text = jax.random.split(key)

    params = init_params(k_param, V, E, H, O)
    text = jax.random.randint(k_text, (B, T), 0, V, dtype=jnp.int32)

    prepped = prepare_params(params)         # one-time, off the forward path
    out = network_forward(prepped, text)
    out = jax.block_until_ready(out)

    ref = reference_forward(params, text)
    assert out.shape == (B, O)
    assert jnp.allclose(out, ref, rtol=1e-4, atol=1e-4), "Pallas kernel mismatch vs JAX reference"

    # TODO(synk): nn.Dropout is identity in eval mode; training-mode dropout not implemented.
    print("KERNEL_OK")
</pallas_src>

<mosaic_0001>
module attributes {stable_mosaic.version = 11 : i64} {
  func.func @lstm_mlp_kernel(%arg0: memref<64x128xf32, #tpu.memory_space<vmem>>, %arg1: memref<32x128xf32, #tpu.memory_space<vmem>>, %arg2: memref<32x128xf32, #tpu.memory_space<vmem>>, %arg3: memref<32x128xf32, #tpu.memory_space<vmem>>, %arg4: memref<1x128xf32, #tpu.memory_space<vmem>>, %arg5: memref<32x256xf32, #tpu.memory_space<vmem>>, %arg6: memref<32x256xf32, #tpu.memory_space<vmem>>, %arg7: memref<1x256xf32, #tpu.memory_space<vmem>>, %arg8: memref<256x64xf32, #tpu.memory_space<vmem>>, %arg9: memref<1x64xf32, #tpu.memory_space<vmem>>, %arg10: memref<64x4xf32, #tpu.memory_space<vmem>>, %arg11: memref<1x4xf32, #tpu.memory_space<vmem>>, %arg12: memref<8x4xf32, #tpu.memory_space<vmem>>) attributes {dimension_semantics = [], scalar_prefetch = 0 : i64, scratch_operands = 0 : i64, tpu.core_type = #tpu.core_type<tc>} {
    %c0 = arith.constant 0 : index
    %c0_0 = arith.constant 0 : index
    %0 = vector.load %arg0[%c0, %c0_0] : memref<64x128xf32, #tpu.memory_space<vmem>>, vector<64x128xf32>
    %c0_1 = arith.constant 0 : index
    %c0_2 = arith.constant 0 : index
    %1 = vector.load %arg1[%c0_1, %c0_2] : memref<32x128xf32, #tpu.memory_space<vmem>>, vector<32x128xf32>
    %c0_3 = arith.constant 0 : index
    %c0_4 = arith.constant 0 : index
    %2 = vector.load %arg2[%c0_3, %c0_4] : memref<32x128xf32, #tpu.memory_space<vmem>>, vector<32x128xf32>
    %c0_5 = arith.constant 0 : index
    %c0_6 = arith.constant 0 : index
    %3 = vector.load %arg3[%c0_5, %c0_6] : memref<32x128xf32, #tpu.memory_space<vmem>>, vector<32x128xf32>
    %c0_7 = arith.constant 0 : index
    %c0_8 = arith.constant 0 : index
    %4 = vector.load %arg4[%c0_7, %c0_8] : memref<1x128xf32, #tpu.memory_space<vmem>>, vector<1x128xf32>
    %5 = vector.shape_cast %4 : vector<1x128xf32> to vector<1x128xf32>
    %6 = vector.broadcast %5 : vector<1x128xf32> to vector<8x128xf32>
    %7 = tpu.iota {dimensions = array<i32: 1>} : vector<8x128xi32>
    %c64_i32 = arith.constant 64 : i32
    %8 = vector.broadcast %c64_i32 : i32 to vector<8x128xi32>
    %9 = arith.cmpi sge, %7, %8 : vector<8x128xi32>
    %c96_i32 = arith.constant 96 : i32
    %10 = vector.broadcast %c96_i32 : i32 to vector<8x128xi32>
    %11 = arith.cmpi slt, %7, %10 : vector<8x128xi32>
    %12 = arith.andi %9, %11 : vector<8x128xi1>
    %cst = arith.constant 0.000000e+00 : f32
    %13 = vector.broadcast %cst : f32 to vector<8x32xf32>
    %14 = vector.extract_strided_slice %0 {offsets = [0, 0], sizes = [8, 128], strides = [1, 1]} : vector<64x128xf32> to vector<8x128xf32>
    %cst_9 = arith.constant dense<0.000000e+00> : vector<8x128xf32>
    %15 = tpu.matmul %13, %1, %cst_9 {dimension_numbers = #tpu.dot_dimension_numbers<[1], [0], [0], [1], [0, 0, 1, 1], [], []>} : vector<8x32xf32>, vector<32x128xf32>, vector<8x128xf32> -> vector<8x128xf32>
    %16 = arith.addf %14, %15 : vector<8x128xf32>
    %cst_10 = arith.constant 5.000000e-01 : f32
    %17 = vector.broadcast %cst_10 : f32 to vector<8x128xf32>
    %18 = arith.mulf %17, %16 : vector<8x128xf32>
    %19 = arith.select %12, %16, %18 : vector<8x128xi1>, vector<8x128xf32>
    %20 = math.tanh %19 : vector<8x128xf32>
    %cst_11 = arith.constant 5.000000e-01 : f32
    %21 = vector.broadcast %cst_11 : f32 to vector<8x128xf32>
    %22 = arith.mulf %21, %20 : vector<8x128xf32>
    %cst_12 = arith.constant 5.000000e-01 : f32
    %23 = vector.broadcast %cst_12 : f32 to vector<8x128xf32>
    %24 = arith.addf %22, %23 : vector<8x128xf32>
    %25 = arith.select %12, %20, %24 : vector<8x128xi1>, vector<8x128xf32>
    %26 = vector.extract_strided_slice %25 {offsets = [0, 0], sizes = [8, 32], strides = [1, 1]} : vector<8x128xf32> to vector<8x32xf32>
    %27 = vector.extract_strided_slice %25 {offsets = [0, 32], sizes = [8, 32], strides = [1, 1]} : vector<8x128xf32> to vector<8x32xf32>
    %28 = vector.extract_strided_slice %25 {offsets = [0, 64], sizes = [8, 32], strides = [1, 1]} : vector<8x128xf32> to vector<8x32xf32>
    %29 = vector.extract_strided_slice %25 {offsets = [0, 96], sizes = [8, 32], strides = [1, 1]} : vector<8x128xf32> to vector<8x32xf32>
    %30 = arith.mulf %27, %13 : vector<8x32xf32>
    %31 = arith.mulf %26, %28 : vector<8x32xf32>
    %32 = arith.addf %30, %31 : vector<8x32xf32>
    %33 = math.tanh %32 : vector<8x32xf32>
    %34 = arith.mulf %29, %33 : vector<8x32xf32>
    %cst_13 = arith.constant dense<0.000000e+00> : vector<8x128xf32>
    %35 = tpu.matmul %34, %2, %cst_13 {dimension_numbers = #tpu.dot_dimension_numbers<[1], [0], [0], [1], [0, 0, 1, 1], [], []>} : vector<8x32xf32>, vector<32x128xf32>, vector<8x128xf32> -> vector<8x128xf32>
    %cst_14 = arith.constant dense<0.000000e+00> : vector<8x128xf32>
    %36 = tpu.matmul %13, %3, %cst_14 {dimension_numbers = #tpu.dot_dimension_numbers<[1], [0], [0], [1], [0, 0, 1, 1], [], []>} : vector<8x32xf32>, vector<32x128xf32>, vector<8x128xf32> -> vector<8x128xf32>
    %37 = arith.addf %35, %36 : vector<8x128xf32>
    %38 = arith.addf %37, %6 : vector<8x128xf32>
    %cst_15 = arith.constant 5.000000e-01 : f32
    %39 = vector.broadcast %cst_15 : f32 to vector<8x128xf32>
    %40 = arith.mulf %39, %38 : vector<8x128xf32>
    %41 = arith.select %12, %38, %40 : vector<8x128xi1>, vector<8x128xf32>
    %42 = math.tanh %41 : vector<8x128xf32>
    %cst_16 = arith.constant 5.000000e-01 : f32
    %43 = vector.broadcast %cst_16 : f32 to vector<8x128xf32>
    %44 = arith.mulf %43, %42 : vector<8x128xf32>
    %cst_17 = arith.constant 5.000000e-01 : f32
    %45 = vector.broadcast %cst_17 : f32 to vector<8x128xf32>
    %46 = arith.addf %44, %45 : vector<8x128xf32>
    %47 = arith.select %12, %42, %46 : vector<8x128xi1>, vector<8x128xf32>
    %48 = vector.extract_strided_slice %47 {offsets = [0, 0], sizes = [8, 32], strides = [1, 1]} : vector<8x128xf32> to vector<8x32xf32>
    %49 = vector.extract_strided_slice %47 {offsets = [0, 32], sizes = [8, 32], strides = [1, 1]} : vector<8x128xf32> to vector<8x32xf32>
    %50 = vector.extract_strided_slice %47 {offsets = [0, 64], sizes = [8, 32], strides = [1, 1]} : vector<8x128xf32> to vector<8x32xf32>
    %51 = vector.extract_strided_slice %47 {offsets = [0, 96], sizes = [8, 32], strides = [1, 1]} : vector<8x128xf32> to vector<8x32xf32>
    %52 = arith.mulf %49, %13 : vector<8x32xf32>
    %53 = arith.mulf %48, %50 : vector<8x32xf32>
    %54 = arith.addf %52, %53 : vector<8x32xf32>
    %55 = math.tanh %54 : vector<8x32xf32>
    %56 = arith.mulf %51, %55 : vector<8x32xf32>
    %57 = vector.extract_strided_slice %0 {offsets = [8, 0], sizes = [8, 128], strides = [1, 1]} : vector<64x128xf32> to vector<8x128xf32>
    %cst_18 = arith.constant dense<0.000000e+00> : vector<8x128xf32>
    %58 = tpu.matmul %34, %1, %cst_18 {dimension_numbers = #tpu.dot_dimension_numbers<[1], [0], [0], [1], [0, 0, 1, 1], [], []>} : vector<8x32xf32>, vector<32x128xf32>, vector<8x128xf32> -> vector<8x128xf32>
    %59 = arith.addf %57, %58 : vector<8x128xf32>
    %cst_19 = arith.constant 5.000000e-01 : f32
    %60 = vector.broadcast %cst_19 : f32 to vector<8x128xf32>
    %61 = arith.mulf %60, %59 : vector<8x128xf32>
    %62 = arith.select %12, %59, %61 : vector<8x128xi1>, vector<8x128xf32>
    %63 = math.tanh %62 : vector<8x128xf32>
    %cst_20 = arith.constant 5.000000e-01 : f32
    %64 = vector.broadcast %cst_20 : f32 to vector<8x128xf32>
    %65 = arith.mulf %64, %63 : vector<8x128xf32>
    %cst_21 = arith.constant 5.000000e-01 : f32
    %66 = vector.broadcast %cst_21 : f32 to vector<8x128xf32>
    %67 = arith.addf %65, %66 : vector<8x128xf32>
    %68 = arith.select %12, %63, %67 : vector<8x128xi1>, vector<8x128xf32>
    %69 = vector.extract_strided_slice %68 {offsets = [0, 0], sizes = [8, 32], strides = [1, 1]} : vector<8x128xf32> to vector<8x32xf32>
    %70 = vector.extract_strided_slice %68 {offsets = [0, 32], sizes = [8, 32], strides = [1, 1]} : vector<8x128xf32> to vector<8x32xf32>
    %71 = vector.extract_strided_slice %68 {offsets = [0, 64], sizes = [8, 32], strides = [1, 1]} : vector<8x128xf32> to vector<8x32xf32>
    %72 = vector.extract_strided_slice %68 {offsets = [0, 96], sizes = [8, 32], strides = [1, 1]} : vector<8x128xf32> to vector<8x32xf32>
    %73 = arith.mulf %70, %32 : vector<8x32xf32>
    %74 = arith.mulf %69, %71 : vector<8x32xf32>
    %75 = arith.addf %73, %74 : vector<8x32xf32>
    %76 = math.tanh %75 : vector<8x32xf32>
    %77 = arith.mulf %72, %76 : vector<8x32xf32>
    %cst_22 = arith.constant dense<0.000000e+00> : vector<8x128xf32>
    %78 = tpu.matmul %77, %2, %cst_22 {dimension_numbers = #tpu.dot_dimension_numbers<[1], [0], [0], [1], [0, 0, 1, 1], [], []>} : vector<8x32xf32>, vector<32x128xf32>, vector<8x128xf32> -> vector<8x128xf32>
    %cst_23 = arith.constant dense<0.000000e+00> : vector<8x128xf32>
    %79 = tpu.matmul %56, %3, %cst_23 {dimension_numbers = #tpu.dot_dimension_numbers<[1], [0], [0], [1], [0, 0, 1, 1], [], []>} : vector<8x32xf32>, vector<32x128xf32>, vector<8x128xf32> -> vector<8x128xf32>
    %80 = arith.addf %78, %79 : vector<8x128xf32>
    %81 = arith.addf %80, %6 : vector<8x128xf32>
    %cst_24 = arith.constant 5.000000e-01 : f32
    %82 = vector.broadcast %cst_24 : f32 to vector<8x128xf32>
    %83 = arith.mulf %82, %81 : vector<8x128xf32>
    %84 = arith.select %12, %81, %83 : vector<8x128xi1>, vector<8x128xf32>
    %85 = math.tanh %84 : vector<8x128xf32>
    %cst_25 = arith.constant 5.000000e-01 : f32
    %86 = vector.broadcast %cst_25 : f32 to vector<8x128xf32>
    %87 = arith.mulf %86, %85 : vector<8x128xf32>
    %cst_26 = arith.constant 5.000000e-01 : f32
    %88 = vector.broadcast %cst_26 : f32 to vector<8x128xf32>
    %89 = arith.addf %87, %88 : vector<8x128xf32>
    %90 = arith.select %12, %85, %89 : vector<8x128xi1>, vector<8x128xf32>
    %91 = vector.extract_strided_slice %90 {offsets = [0, 0], sizes = [8, 32], strides = [1, 1]} : vector<8x128xf32> to vector<8x32xf32>
    %92 = vector.extract_strided_slice %90 {offsets = [0, 32], sizes = [8, 32], strides = [1, 1]} : vector<8x128xf32> to vector<8x32xf32>
    %93 = vector.extract_strided_slice %90 {offsets = [0, 64], sizes = [8, 32], strides = [1, 1]} : vector<8x128xf32> to vector<8x32xf32>
    %94 = vector.extract_strided_slice %90 {offsets = [0, 96], sizes = [8, 32], strides = [1, 1]} : vector<8x128xf32> to vector<8x32xf32>
    %95 = arith.mulf %92, %54 : vector<8x32xf32>
    %96 = arith.mulf %91, %93 : vector<8x32xf32>
    %97 = arith.addf %95, %96 : vector<8x32xf32>
    %98 = math.tanh %97 : vector<8x32xf32>
    %99 = arith.mulf %94, %98 : vector<8x32xf32>
    %100 = vector.extract_strided_slice %0 {offsets = [16, 0], sizes = [8, 128], strides = [1, 1]} : vector<64x128xf32> to vector<8x128xf32>
    %cst_27 = arith.constant dense<0.000000e+00> : vector<8x128xf32>
    %101 = tpu.matmul %77, %1, %cst_27 {dimension_numbers = #tpu.dot_dimension_numbers<[1], [0], [0], [1], [0, 0, 1, 1], [], []>} : vector<8x32xf32>, vector<32x128xf32>, vector<8x128xf32> -> vector<8x128xf32>
    %102 = arith.addf %100, %101 : vector<8x128xf32>
    %cst_28 = arith.constant 5.000000e-01 : f32
    %103 = vector.broadcast %cst_28 : f32 to vector<8x128xf32>
    %104 = arith.mulf %103, %102 : vector<8x128xf32>
    %105 = arith.select %12, %102, %104 : vector<8x128xi1>, vector<8x128xf32>
    %106 = math.tanh %105 : vector<8x128xf32>
    %cst_29 = arith.constant 5.000000e-01 : f32
    %107 = vector.broadcast %cst_29 : f32 to vector<8x128xf32>
    %108 = arith.mulf %107, %106 : vector<8x128xf32>
    %cst_30 = arith.constant 5.000000e-01 : f32
    %109 = vector.broadcast %cst_30 : f32 to vector<8x128xf32>
    %110 = arith.addf %108, %109 : vector<8x128xf32>
    %111 = arith.select %12, %106, %110 : vector<8x128xi1>, vector<8x128xf32>
    %112 = vector.extract_strided_slice %111 {offsets = [0, 0], sizes = [8, 32], strides = [1, 1]} : vector<8x128xf32> to vector<8x32xf32>
    %113 = vector.extract_strided_slice %111 {offsets = [0, 32], sizes = [8, 32], strides = [1, 1]} : vector<8x128xf32> to vector<8x32xf32>
    %114 = vector.extract_strided_slice %111 {offsets = [0, 64], sizes = [8, 32], strides = [1, 1]} : vector<8x128xf32> to vector<8x32xf32>
    %115 = vector.extract_strided_slice %111 {offsets = [0, 96], sizes = [8, 32], strides = [1, 1]} : vector<8x128xf32> to vector<8x32xf32>
    %116 = arith.mulf %113, %75 : vector<8x32xf32>
    %117 = arith.mulf %112, %114 : vector<8x32xf32>
    %118 = arith.addf %116, %117 : vector<8x32xf32>
    %119 = math.tanh %118 : vector<8x32xf32>
    %120 = arith.mulf %115, %119 : vector<8x32xf32>
    %cst_31 = arith.constant dense<0.000000e+00> : vector<8x128xf32>
    %121 = tpu.matmul %120, %2, %cst_31 {dimension_numbers = #tpu.dot_dimension_numbers<[1], [0], [0], [1], [0, 0, 1, 1], [], []>} : vector<8x32xf32>, vector<32x128xf32>, vector<8x128xf32> -> vector<8x128xf32>
    %cst_32 = arith.constant dense<0.000000e+00> : vector<8x128xf32>
    %122 = tpu.matmul %99, %3, %cst_32 {dimension_numbers = #tpu.dot_dimension_numbers<[1], [0], [0], [1], [0, 0, 1, 1], [], []>} : vector<8x32xf32>, vector<32x128xf32>, vector<8x128xf32> -> vector<8x128xf32>
    %123 = arith.addf %121, %122 : vector<8x128xf32>
    %124 = arith.addf %123, %6 : vector<8x128xf32>
    %cst_33 = arith.constant 5.000000e-01 : f32
    %125 = vector.broadcast %cst_33 : f32 to vector<8x128xf32>
    %126 = arith.mulf %125, %124 : vector<8x128xf32>
    %127 = arith.select %12, %124, %126 : vector<8x128xi1>, vector<8x128xf32>
    %128 = math.tanh %127 : vector<8x128xf32>
    %cst_34 = arith.constant 5.000000e-01 : f32
    %129 = vector.broadcast %cst_34 : f32 to vector<8x128xf32>
    %130 = arith.mulf %129, %128 : vector<8x128xf32>
    %cst_35 = arith.constant 5.000000e-01 : f32
    %131 = vector.broadcast %cst_35 : f32 to vector<8x128xf32>
    %132 = arith.addf %130, %131 : vector<8x128xf32>
    %133 = arith.select %12, %128, %132 : vector<8x128xi1>, vector<8x128xf32>
    %134 = vector.extract_strided_slice %133 {offsets = [0, 0], sizes = [8, 32], strides = [1, 1]} : vector<8x128xf32> to vector<8x32xf32>
    %135 = vector.extract_strided_slice %133 {offsets = [0, 32], sizes = [8, 32], strides = [1, 1]} : vector<8x128xf32> to vector<8x32xf32>
    %136 = vector.extract_strided_slice %133 {offsets = [0, 64], sizes = [8, 32], strides = [1, 1]} : vector<8x128xf32> to vector<8x32xf32>
    %137 = vector.extract_strided_slice %133 {offsets = [0, 96], sizes = [8, 32], strides = [1, 1]} : vector<8x128xf32> to vector<8x32xf32>
    %138 = arith.mulf %135, %97 : vector<8x32xf32>
    %139 = arith.mulf %134, %136 : vector<8x32xf32>
    %140 = arith.addf %138, %139 : vector<8x32xf32>
    %141 = math.tanh %140 : vector<8x32xf32>
    %142 = arith.mulf %137, %141 : vector<8x32xf32>
    %143 = vector.extract_strided_slice %0 {offsets = [24, 0], sizes = [8, 128], strides = [1, 1]} : vector<64x128xf32> to vector<8x128xf32>
    %cst_36 = arith.constant dense<0.000000e+00> : vector<8x128xf32>
    %144 = tpu.matmul %120, %1, %cst_36 {dimension_numbers = #tpu.dot_dimension_numbers<[1], [0], [0], [1], [0, 0, 1, 1], [], []>} : vector<8x32xf32>, vector<32x128xf32>, vector<8x128xf32> -> vector<8x128xf32>
    %145 = arith.addf %143, %144 : vector<8x128xf32>
    %cst_37 = arith.constant 5.000000e-01 : f32
    %146 = vector.broadcast %cst_37 : f32 to vector<8x128xf32>
    %147 = arith.mulf %146, %145 : vector<8x128xf32>
    %148 = arith.select %12, %145, %147 : vector<8x128xi1>, vector<8x128xf32>
    %149 = math.tanh %148 : vector<8x128xf32>
    %cst_38 = arith.constant 5.000000e-01 : f32
    %150 = vector.broadcast %cst_38 : f32 to vector<8x128xf32>
    %151 = arith.mulf %150, %149 : vector<8x128xf32>
    %cst_39 = arith.constant 5.000000e-01 : f32
    %152 = vector.broadcast %cst_39 : f32 to vector<8x128xf32>
    %153 = arith.addf %151, %152 : vector<8x128xf32>
    %154 = arith.select %12, %149, %153 : vector<8x128xi1>, vector<8x128xf32>
    %155 = vector.extract_strided_slice %154 {offsets = [0, 0], sizes = [8, 32], strides = [1, 1]} : vector<8x128xf32> to vector<8x32xf32>
    %156 = vector.extract_strided_slice %154 {offsets = [0, 32], sizes = [8, 32], strides = [1, 1]} : vector<8x128xf32> to vector<8x32xf32>
    %157 = vector.extract_strided_slice %154 {offsets = [0, 64], sizes = [8, 32], strides = [1, 1]} : vector<8x128xf32> to vector<8x32xf32>
    %158 = vector.extract_strided_slice %154 {offsets = [0, 96], sizes = [8, 32], strides = [1, 1]} : vector<8x128xf32> to vector<8x32xf32>
    %159 = arith.mulf %156, %118 : vector<8x32xf32>
    %160 = arith.mulf %155, %157 : vector<8x32xf32>
    %161 = arith.addf %159, %160 : vector<8x32xf32>
    %162 = math.tanh %161 : vector<8x32xf32>
    %163 = arith.mulf %158, %162 : vector<8x32xf32>
    %cst_40 = arith.constant dense<0.000000e+00> : vector<8x128xf32>
    %164 = tpu.matmul %163, %2, %cst_40 {dimension_numbers = #tpu.dot_dimension_numbers<[1], [0], [0], [1], [0, 0, 1, 1], [], []>} : vector<8x32xf32>, vector<32x128xf32>, vector<8x128xf32> -> vector<8x128xf32>
    %cst_41 = arith.constant dense<0.000000e+00> : vector<8x128xf32>
    %165 = tpu.matmul %142, %3, %cst_41 {dimension_numbers = #tpu.dot_dimension_numbers<[1], [0], [0], [1], [0, 0, 1, 1], [], []>} : vector<8x32xf32>, vector<32x128xf32>, vector<8x128xf32> -> vector<8x128xf32>
    %166 = arith.addf %164, %165 : vector<8x128xf32>
    %167 = arith.addf %166, %6 : vector<8x128xf32>
    %cst_42 = arith.constant 5.000000e-01 : f32
    %168 = vector.broadcast %cst_42 : f32 to vector<8x128xf32>
    %169 = arith.mulf %168, %167 : vector<8x128xf32>
    %170 = arith.select %12, %167, %169 : vector<8x128xi1>, vector<8x128xf32>
    %171 = math.tanh %170 : vector<8x128xf32>
    %cst_43 = arith.constant 5.000000e-01 : f32
    %172 = vector.broadcast %cst_43 : f32 to vector<8x128xf32>
    %173 = arith.mulf %172, %171 : vector<8x128xf32>
    %cst_44 = arith.constant 5.000000e-01 : f32
    %174 = vector.broadcast %cst_44 : f32 to vector<8x128xf32>
    %175 = arith.addf %173, %174 : vector<8x128xf32>
    %176 = arith.select %12, %171, %175 : vector<8x128xi1>, vector<8x128xf32>
    %177 = vector.extract_strided_slice %176 {offsets = [0, 0], sizes = [8, 32], strides = [1, 1]} : vector<8x128xf32> to vector<8x32xf32>
    %178 = vector.extract_strided_slice %176 {offsets = [0, 32], sizes = [8, 32], strides = [1, 1]} : vector<8x128xf32> to vector<8x32xf32>
    %179 = vector.extract_strided_slice %176 {offsets = [0, 64], sizes = [8, 32], strides = [1, 1]} : vector<8x128xf32> to vector<8x32xf32>
    %180 = vector.extract_strided_slice %176 {offsets = [0, 96], sizes = [8, 32], strides = [1, 1]} : vector<8x128xf32> to vector<8x32xf32>
    %181 = arith.mulf %178, %140 : vector<8x32xf32>
    %182 = arith.mulf %177, %179 : vector<8x32xf32>
    %183 = arith.addf %181, %182 : vector<8x32xf32>
    %184 = math.tanh %183 : vector<8x32xf32>
    %185 = arith.mulf %180, %184 : vector<8x32xf32>
    %186 = vector.extract_strided_slice %0 {offsets = [32, 0], sizes = [8, 128], strides = [1, 1]} : vector<64x128xf32> to vector<8x128xf32>
    %cst_45 = arith.constant dense<0.000000e+00> : vector<8x128xf32>
    %187 = tpu.matmul %163, %1, %cst_45 {dimension_numbers = #tpu.dot_dimension_numbers<[1], [0], [0], [1], [0, 0, 1, 1], [], []>} : vector<8x32xf32>, vector<32x128xf32>, vector<8x128xf32> -> vector<8x128xf32>
    %188 = arith.addf %186, %187 : vector<8x128xf32>
    %cst_46 = arith.constant 5.000000e-01 : f32
    %189 = vector.broadcast %cst_46 : f32 to vector<8x128xf32>
    %190 = arith.mulf %189, %188 : vector<8x128xf32>
    %191 = arith.select %12, %188, %190 : vector<8x128xi1>, vector<8x128xf32>
    %192 = math.tanh %191 : vector<8x128xf32>
    %cst_47 = arith.constant 5.000000e-01 : f32
    %193 = vector.broadcast %cst_47 : f32 to vector<8x128xf32>
    %194 = arith.mulf %193, %192 : vector<8x128xf32>
    %cst_48 = arith.constant 5.000000e-01 : f32
    %195 = vector.broadcast %cst_48 : f32 to vector<8x128xf32>
    %196 = arith.addf %194, %195 : vector<8x128xf32>
    %197 = arith.select %12, %192, %196 : vector<8x128xi1>, vector<8x128xf32>
    %198 = vector.extract_strided_slice %197 {offsets = [0, 0], sizes = [8, 32], strides = [1, 1]} : vector<8x128xf32> to vector<8x32xf32>
    %199 = vector.extract_strided_slice %197 {offsets = [0, 32], sizes = [8, 32], strides = [1, 1]} : vector<8x128xf32> to vector<8x32xf32>
    %200 = vector.extract_strided_slice %197 {offsets = [0, 64], sizes = [8, 32], strides = [1, 1]} : vector<8x128xf32> to vector<8x32xf32>
    %201 = vector.extract_strided_slice %197 {offsets = [0, 96], sizes = [8, 32], strides = [1, 1]} : vector<8x128xf32> to vector<8x32xf32>
    %202 = arith.mulf %199, %161 : vector<8x32xf32>
    %203 = arith.mulf %198, %200 : vector<8x32xf32>
    %204 = arith.addf %202, %203 : vector<8x32xf32>
    %205 = math.tanh %204 : vector<8x32xf32>
    %206 = arith.mulf %201, %205 : vector<8x32xf32>
    %cst_49 = arith.constant dense<0.000000e+00> : vector<8x128xf32>
    %207 = tpu.matmul %206, %2, %cst_49 {dimension_numbers = #tpu.dot_dimension_numbers<[1], [0], [0], [1], [0, 0, 1, 1], [], []>} : vector<8x32xf32>, vector<32x128xf32>, vector<8x128xf32> -> vector<8x128xf32>
    %cst_50 = arith.constant dense<0.000000e+00> : vector<8x128xf32>
    %208 = tpu.matmul %185, %3, %cst_50 {dimension_numbers = #tpu.dot_dimension_numbers<[1], [0], [0], [1], [0, 0, 1, 1], [], []>} : vector<8x32xf32>, vector<32x128xf32>, vector<8x128xf32> -> vector<8x128xf32>
    %209 = arith.addf %207, %208 : vector<8x128xf32>
    %210 = arith.addf %209, %6 : vector<8x128xf32>
    %cst_51 = arith.constant 5.000000e-01 : f32
    %211 = vector.broadcast %cst_51 : f32 to vector<8x128xf32>
    %212 = arith.mulf %211, %210 : vector<8x128xf32>
    %213 = arith.select %12, %210, %212 : vector<8x128xi1>, vector<8x128xf32>
    %214 = math.tanh %213 : vector<8x128xf32>
    %cst_52 = arith.constant 5.000000e-01 : f32
    %215 = vector.broadcast %cst_52 : f32 to vector<8x128xf32>
    %216 = arith.mulf %215, %214 : vector<8x128xf32>
    %cst_53 = arith.constant 5.000000e-01 : f32
    %217 = vector.broadcast %cst_53 : f32 to vector<8x128xf32>
    %218 = arith.addf %216, %217 : vector<8x128xf32>
    %219 = arith.select %12, %214, %218 : vector<8x128xi1>, vector<8x128xf32>
    %220 = vector.extract_strided_slice %219 {offsets = [0, 0], sizes = [8, 32], strides = [1, 1]} : vector<8x128xf32> to vector<8x32xf32>
    %221 = vector.extract_strided_slice %219 {offsets = [0, 32], sizes = [8, 32], strides = [1, 1]} : vector<8x128xf32> to vector<8x32xf32>
    %222 = vector.extract_strided_slice %219 {offsets = [0, 64], sizes = [8, 32], strides = [1, 1]} : vector<8x128xf32> to vector<8x32xf32>
    %223 = vector.extract_strided_slice %219 {offsets = [0, 96], sizes = [8, 32], strides = [1, 1]} : vector<8x128xf32> to vector<8x32xf32>
    %224 = arith.mulf %221, %183 : vector<8x32xf32>
    %225 = arith.mulf %220, %222 : vector<8x32xf32>
    %226 = arith.addf %224, %225 : vector<8x32xf32>
    %227 = math.tanh %226 : vector<8x32xf32>
    %228 = arith.mulf %223, %227 : vector<8x32xf32>
    %229 = vector.extract_strided_slice %0 {offsets = [40, 0], sizes = [8, 128], strides = [1, 1]} : vector<64x128xf32> to vector<8x128xf32>
    %cst_54 = arith.constant dense<0.000000e+00> : vector<8x128xf32>
    %230 = tpu.matmul %206, %1, %cst_54 {dimension_numbers = #tpu.dot_dimension_numbers<[1], [0], [0], [1], [0, 0, 1, 1], [], []>} : vector<8x32xf32>, vector<32x128xf32>, vector<8x128xf32> -> vector<8x128xf32>
    %231 = arith.addf %229, %230 : vector<8x128xf32>
    %cst_55 = arith.constant 5.000000e-01 : f32
    %232 = vector.broadcast %cst_55 : f32 to vector<8x128xf32>
    %233 = arith.mulf %232, %231 : vector<8x128xf32>
    %234 = arith.select %12, %231, %233 : vector<8x128xi1>, vector<8x128xf32>
    %235 = math.tanh %234 : vector<8x128xf32>
    %cst_56 = arith.constant 5.000000e-01 : f32
    %236 = vector.broadcast %cst_56 : f32 to vector<8x128xf32>
    %237 = arith.mulf %236, %235 : vector<8x128xf32>
    %cst_57 = arith.constant 5.000000e-01 : f32
    %238 = vector.broadcast %cst_57 : f32 to vector<8x128xf32>
    %239 = arith.addf %237, %238 : vector<8x128xf32>
    %240 = arith.select %12, %235, %239 : vector<8x128xi1>, vector<8x128xf32>
    %241 = vector.extract_strided_slice %240 {offsets = [0, 0], sizes = [8, 32], strides = [1, 1]} : vector<8x128xf32> to vector<8x32xf32>
    %242 = vector.extract_strided_slice %240 {offsets = [0, 32], sizes = [8, 32], strides = [1, 1]} : vector<8x128xf32> to vector<8x32xf32>
    %243 = vector.extract_strided_slice %240 {offsets = [0, 64], sizes = [8, 32], strides = [1, 1]} : vector<8x128xf32> to vector<8x32xf32>
    %244 = vector.extract_strided_slice %240 {offsets = [0, 96], sizes = [8, 32], strides = [1, 1]} : vector<8x128xf32> to vector<8x32xf32>
    %245 = arith.mulf %242, %204 : vector<8x32xf32>
    %246 = arith.mulf %241, %243 : vector<8x32xf32>
    %247 = arith.addf %245, %246 : vector<8x32xf32>
    %248 = math.tanh %247 : vector<8x32xf32>
    %249 = arith.mulf %244, %248 : vector<8x32xf32>
    %cst_58 = arith.constant dense<0.000000e+00> : vector<8x128xf32>
    %250 = tpu.matmul %249, %2, %cst_58 {dimension_numbers = #tpu.dot_dimension_numbers<[1], [0], [0], [1], [0, 0, 1, 1], [], []>} : vector<8x32xf32>, vector<32x128xf32>, vector<8x128xf32> -> vector<8x128xf32>
    %cst_59 = arith.constant dense<0.000000e+00> : vector<8x128xf32>
    %251 = tpu.matmul %228, %3, %cst_59 {dimension_numbers = #tpu.dot_dimension_numbers<[1], [0], [0], [1], [0, 0, 1, 1], [], []>} : vector<8x32xf32>, vector<32x128xf32>, vector<8x128xf32> -> vector<8x128xf32>
    %252 = arith.addf %250, %251 : vector<8x128xf32>
    %253 = arith.addf %252, %6 : vector<8x128xf32>
    %cst_60 = arith.constant 5.000000e-01 : f32
    %254 = vector.broadcast %cst_60 : f32 to vector<8x128xf32>
    %255 = arith.mulf %254, %253 : vector<8x128xf32>
    %256 = arith.select %12, %253, %255 : vector<8x128xi1>, vector<8x128xf32>
    %257 = math.tanh %256 : vector<8x128xf32>
    %cst_61 = arith.constant 5.000000e-01 : f32
    %258 = vector.broadcast %cst_61 : f32 to vector<8x128xf32>
    %259 = arith.mulf %258, %257 : vector<8x128xf32>
    %cst_62 = arith.constant 5.000000e-01 : f32
    %260 = vector.broadcast %cst_62 : f32 to vector<8x128xf32>
    %261 = arith.addf %259, %260 : vector<8x128xf32>
    %262 = arith.select %12, %257, %261 : vector<8x128xi1>, vector<8x128xf32>
    %263 = vector.extract_strided_slice %262 {offsets = [0, 0], sizes = [8, 32], strides = [1, 1]} : vector<8x128xf32> to vector<8x32xf32>
    %264 = vector.extract_strided_slice %262 {offsets = [0, 32], sizes = [8, 32], strides = [1, 1]} : vector<8x128xf32> to vector<8x32xf32>
    %265 = vector.extract_strided_slice %262 {offsets = [0, 64], sizes = [8, 32], strides = [1, 1]} : vector<8x128xf32> to vector<8x32xf32>
    %266 = vector.extract_strided_slice %262 {offsets = [0, 96], sizes = [8, 32], strides = [1, 1]} : vector<8x128xf32> to vector<8x32xf32>
    %267 = arith.mulf %264, %226 : vector<8x32xf32>
    %268 = arith.mulf %263, %265 : vector<8x32xf32>
    %269 = arith.addf %267, %268 : vector<8x32xf32>
    %270 = math.tanh %269 : vector<8x32xf32>
    %271 = arith.mulf %266, %270 : vector<8x32xf32>
    %272 = vector.extract_strided_slice %0 {offsets = [48, 0], sizes = [8, 128], strides = [1, 1]} : vector<64x128xf32> to vector<8x128xf32>
    %cst_63 = arith.constant dense<0.000000e+00> : vector<8x128xf32>
    %273 = tpu.matmul %249, %1, %cst_63 {dimension_numbers = #tpu.dot_dimension_numbers<[1], [0], [0], [1], [0, 0, 1, 1], [], []>} : vector<8x32xf32>, vector<32x128xf32>, vector<8x128xf32> -> vector<8x128xf32>
    %274 = arith.addf %272, %273 : vector<8x128xf32>
    %cst_64 = arith.constant 5.000000e-01 : f32
    %275 = vector.broadcast %cst_64 : f32 to vector<8x128xf32>
    %276 = arith.mulf %275, %274 : vector<8x128xf32>
    %277 = arith.select %12, %274, %276 : vector<8x128xi1>, vector<8x128xf32>
    %278 = math.tanh %277 : vector<8x128xf32>
    %cst_65 = arith.constant 5.000000e-01 : f32
    %279 = vector.broadcast %cst_65 : f32 to vector<8x128xf32>
    %280 = arith.mulf %279, %278 : vector<8x128xf32>
    %cst_66 = arith.constant 5.000000e-01 : f32
    %281 = vector.broadcast %cst_66 : f32 to vector<8x128xf32>
    %282 = arith.addf %280, %281 : vector<8x128xf32>
    %283 = arith.select %12, %278, %282 : vector<8x128xi1>, vector<8x128xf32>
    %284 = vector.extract_strided_slice %283 {offsets = [0, 0], sizes = [8, 32], strides = [1, 1]} : vector<8x128xf32> to vector<8x32xf32>
    %285 = vector.extract_strided_slice %283 {offsets = [0, 32], sizes = [8, 32], strides = [1, 1]} : vector<8x128xf32> to vector<8x32xf32>
    %286 = vector.extract_strided_slice %283 {offsets = [0, 64], sizes = [8, 32], strides = [1, 1]} : vector<8x128xf32> to vector<8x32xf32>
    %287 = vector.extract_strided_slice %283 {offsets = [0, 96], sizes = [8, 32], strides = [1, 1]} : vector<8x128xf32> to vector<8x32xf32>
    %288 = arith.mulf %285, %247 : vector<8x32xf32>
    %289 = arith.mulf %284, %286 : vector<8x32xf32>
    %290 = arith.addf %288, %289 : vector<8x32xf32>
    %291 = math.tanh %290 : vector<8x32xf32>
    %292 = arith.mulf %287, %291 : vector<8x32xf32>
    %cst_67 = arith.constant dense<0.000000e+00> : vector<8x128xf32>
    %293 = tpu.matmul %292, %2, %cst_67 {dimension_numbers = #tpu.dot_dimension_numbers<[1], [0], [0], [1], [0, 0, 1, 1], [], []>} : vector<8x32xf32>, vector<32x128xf32>, vector<8x128xf32> -> vector<8x128xf32>
    %cst_68 = arith.constant dense<0.000000e+00> : vector<8x128xf32>
    %294 = tpu.matmul %271, %3, %cst_68 {dimension_numbers = #tpu.dot_dimension_numbers<[1], [0], [0], [1], [0, 0, 1, 1], [], []>} : vector<8x32xf32>, vector<32x128xf32>, vector<8x128xf32> -> vector<8x128xf32>
    %295 = arith.addf %293, %294 : vector<8x128xf32>
    %296 = arith.addf %295, %6 : vector<8x128xf32>
    %cst_69 = arith.constant 5.000000e-01 : f32
    %297 = vector.broadcast %cst_69 : f32 to vector<8x128xf32>
    %298 = arith.mulf %297, %296 : vector<8x128xf32>
    %299 = arith.select %12, %296, %298 : vector<8x128xi1>, vector<8x128xf32>
    %300 = math.tanh %299 : vector<8x128xf32>
    %cst_70 = arith.constant 5.000000e-01 : f32
    %301 = vector.broadcast %cst_70 : f32 to vector<8x128xf32>
    %302 = arith.mulf %301, %300 : vector<8x128xf32>
    %cst_71 = arith.constant 5.000000e-01 : f32
    %303 = vector.broadcast %cst_71 : f32 to vector<8x128xf32>
    %304 = arith.addf %302, %303 : vector<8x128xf32>
    %305 = arith.select %12, %300, %304 : vector<8x128xi1>, vector<8x128xf32>
    %306 = vector.extract_strided_slice %305 {offsets = [0, 0], sizes = [8, 32], strides = [1, 1]} : vector<8x128xf32> to vector<8x32xf32>
    %307 = vector.extract_strided_slice %305 {offsets = [0, 32], sizes = [8, 32], strides = [1, 1]} : vector<8x128xf32> to vector<8x32xf32>
    %308 = vector.extract_strided_slice %305 {offsets = [0, 64], sizes = [8, 32], strides = [1, 1]} : vector<8x128xf32> to vector<8x32xf32>
    %309 = vector.extract_strided_slice %305 {offsets = [0, 96], sizes = [8, 32], strides = [1, 1]} : vector<8x128xf32> to vector<8x32xf32>
    %310 = arith.mulf %307, %269 : vector<8x32xf32>
    %311 = arith.mulf %306, %308 : vector<8x32xf32>
    %312 = arith.addf %310, %311 : vector<8x32xf32>
    %313 = math.tanh %312 : vector<8x32xf32>
    %314 = arith.mulf %309, %313 : vector<8x32xf32>
    %315 = vector.extract_strided_slice %0 {offsets = [56, 0], sizes = [8, 128], strides = [1, 1]} : vector<64x128xf32> to vector<8x128xf32>
    %cst_72 = arith.constant dense<0.000000e+00> : vector<8x128xf32>
    %316 = tpu.matmul %292, %1, %cst_72 {dimension_numbers = #tpu.dot_dimension_numbers<[1], [0], [0], [1], [0, 0, 1, 1], [], []>} : vector<8x32xf32>, vector<32x128xf32>, vector<8x128xf32> -> vector<8x128xf32>
    %317 = arith.addf %315, %316 : vector<8x128xf32>
    %cst_73 = arith.constant 5.000000e-01 : f32
    %318 = vector.broadcast %cst_73 : f32 to vector<8x128xf32>
    %319 = arith.mulf %318, %317 : vector<8x128xf32>
    %320 = arith.select %12, %317, %319 : vector<8x128xi1>, vector<8x128xf32>
    %321 = math.tanh %320 : vector<8x128xf32>
    %cst_74 = arith.constant 5.000000e-01 : f32
    %322 = vector.broadcast %cst_74 : f32 to vector<8x128xf32>
    %323 = arith.mulf %322, %321 : vector<8x128xf32>
    %cst_75 = arith.constant 5.000000e-01 : f32
    %324 = vector.broadcast %cst_75 : f32 to vector<8x128xf32>
    %325 = arith.addf %323, %324 : vector<8x128xf32>
    %326 = arith.select %12, %321, %325 : vector<8x128xi1>, vector<8x128xf32>
    %327 = vector.extract_strided_slice %326 {offsets = [0, 0], sizes = [8, 32], strides = [1, 1]} : vector<8x128xf32> to vector<8x32xf32>
    %328 = vector.extract_strided_slice %326 {offsets = [0, 32], sizes = [8, 32], strides = [1, 1]} : vector<8x128xf32> to vector<8x32xf32>
    %329 = vector.extract_strided_slice %326 {offsets = [0, 64], sizes = [8, 32], strides = [1, 1]} : vector<8x128xf32> to vector<8x32xf32>
    %330 = vector.extract_strided_slice %326 {offsets = [0, 96], sizes = [8, 32], strides = [1, 1]} : vector<8x128xf32> to vector<8x32xf32>
    %331 = arith.mulf %328, %290 : vector<8x32xf32>
    %332 = arith.mulf %327, %329 : vector<8x32xf32>
    %333 = arith.addf %331, %332 : vector<8x32xf32>
    %334 = math.tanh %333 : vector<8x32xf32>
    %335 = arith.mulf %330, %334 : vector<8x32xf32>
    %cst_76 = arith.constant dense<0.000000e+00> : vector<8x128xf32>
    %336 = tpu.matmul %335, %2, %cst_76 {dimension_numbers = #tpu.dot_dimension_numbers<[1], [0], [0], [1], [0, 0, 1, 1], [], []>} : vector<8x32xf32>, vector<32x128xf32>, vector<8x128xf32> -> vector<8x128xf32>
    %cst_77 = arith.constant dense<0.000000e+00> : vector<8x128xf32>
    %337 = tpu.matmul %314, %3, %cst_77 {dimension_numbers = #tpu.dot_dimension_numbers<[1], [0], [0], [1], [0, 0, 1, 1], [], []>} : vector<8x32xf32>, vector<32x128xf32>, vector<8x128xf32> -> vector<8x128xf32>
    %338 = arith.addf %336, %337 : vector<8x128xf32>
    %339 = arith.addf %338, %6 : vector<8x128xf32>
    %cst_78 = arith.constant 5.000000e-01 : f32
    %340 = vector.broadcast %cst_78 : f32 to vector<8x128xf32>
    %341 = arith.mulf %340, %339 : vector<8x128xf32>
    %342 = arith.select %12, %339, %341 : vector<8x128xi1>, vector<8x128xf32>
    %343 = math.tanh %342 : vector<8x128xf32>
    %cst_79 = arith.constant 5.000000e-01 : f32
    %344 = vector.broadcast %cst_79 : f32 to vector<8x128xf32>
    %345 = arith.mulf %344, %343 : vector<8x128xf32>
    %cst_80 = arith.constant 5.000000e-01 : f32
    %346 = vector.broadcast %cst_80 : f32 to vector<8x128xf32>
    %347 = arith.addf %345, %346 : vector<8x128xf32>
    %348 = arith.select %12, %343, %347 : vector<8x128xi1>, vector<8x128xf32>
    %349 = vector.extract_strided_slice %348 {offsets = [0, 0], sizes = [8, 32], strides = [1, 1]} : vector<8x128xf32> to vector<8x32xf32>
    %350 = vector.extract_strided_slice %348 {offsets = [0, 32], sizes = [8, 32], strides = [1, 1]} : vector<8x128xf32> to vector<8x32xf32>
    %351 = vector.extract_strided_slice %348 {offsets = [0, 64], sizes = [8, 32], strides = [1, 1]} : vector<8x128xf32> to vector<8x32xf32>
    %352 = vector.extract_strided_slice %348 {offsets = [0, 96], sizes = [8, 32], strides = [1, 1]} : vector<8x128xf32> to vector<8x32xf32>
    %353 = arith.mulf %350, %312 : vector<8x32xf32>
    %354 = arith.mulf %349, %351 : vector<8x32xf32>
    %355 = arith.addf %353, %354 : vector<8x32xf32>
    %356 = math.tanh %355 : vector<8x32xf32>
    %357 = arith.mulf %352, %356 : vector<8x32xf32>
    %c0_81 = arith.constant 0 : index
    %c0_82 = arith.constant 0 : index
    %358 = vector.load %arg5[%c0_81, %c0_82] : memref<32x256xf32, #tpu.memory_space<vmem>>, vector<32x256xf32>
    %cst_83 = arith.constant dense<0.000000e+00> : vector<8x256xf32>
    %359 = tpu.matmul %335, %358, %cst_83 {dimension_numbers = #tpu.dot_dimension_numbers<[1], [0], [0], [1], [0, 0, 1, 1], [], []>} : vector<8x32xf32>, vector<32x256xf32>, vector<8x256xf32> -> vector<8x256xf32>
    %c0_84 = arith.constant 0 : index
    %c0_85 = arith.constant 0 : index
    %360 = vector.load %arg6[%c0_84, %c0_85] : memref<32x256xf32, #tpu.memory_space<vmem>>, vector<32x256xf32>
    %cst_86 = arith.constant dense<0.000000e+00> : vector<8x256xf32>
    %361 = tpu.matmul %357, %360, %cst_86 {dimension_numbers = #tpu.dot_dimension_numbers<[1], [0], [0], [1], [0, 0, 1, 1], [], []>} : vector<8x32xf32>, vector<32x256xf32>, vector<8x256xf32> -> vector<8x256xf32>
    %362 = arith.addf %359, %361 : vector<8x256xf32>
    %c0_87 = arith.constant 0 : index
    %c0_88 = arith.constant 0 : index
    %363 = vector.load %arg7[%c0_87, %c0_88] : memref<1x256xf32, #tpu.memory_space<vmem>>, vector<1x256xf32>
    %364 = vector.broadcast %363 : vector<1x256xf32> to vector<8x256xf32>
    %365 = arith.addf %362, %364 : vector<8x256xf32>
    %cst_89 = arith.constant 0.000000e+00 : f32
    %366 = vector.broadcast %cst_89 : f32 to vector<8x256xf32>
    %367 = arith.maximumf %365, %366 : vector<8x256xf32>
    %c0_90 = arith.constant 0 : index
    %c0_91 = arith.constant 0 : index
    %368 = vector.load %arg8[%c0_90, %c0_91] : memref<256x64xf32, #tpu.memory_space<vmem>>, vector<256x64xf32>
    %cst_92 = arith.constant dense<0.000000e+00> : vector<8x64xf32>
    %369 = tpu.matmul %367, %368, %cst_92 {dimension_numbers = #tpu.dot_dimension_numbers<[1], [0], [0], [1], [0, 0, 1, 1], [], []>} : vector<8x256xf32>, vector<256x64xf32>, vector<8x64xf32> -> vector<8x64xf32>
    %c0_93 = arith.constant 0 : index
    %c0_94 = arith.constant 0 : index
    %370 = vector.load %arg9[%c0_93, %c0_94] : memref<1x64xf32, #tpu.memory_space<vmem>>, vector<1x64xf32>
    %371 = vector.broadcast %370 : vector<1x64xf32> to vector<8x64xf32>
    %372 = arith.addf %369, %371 : vector<8x64xf32>
    %cst_95 = arith.constant 0.000000e+00 : f32
    %373 = vector.broadcast %cst_95 : f32 to vector<8x64xf32>
    %374 = arith.maximumf %372, %373 : vector<8x64xf32>
    %c0_96 = arith.constant 0 : index
    %c0_97 = arith.constant 0 : index
    %375 = vector.load %arg10[%c0_96, %c0_97] : memref<64x4xf32, #tpu.memory_space<vmem>>, vector<64x4xf32>
    %cst_98 = arith.constant dense<0.000000e+00> : vector<8x4xf32>
    %376 = tpu.matmul %374, %375, %cst_98 {dimension_numbers = #tpu.dot_dimension_numbers<[1], [0], [0], [1], [0, 0, 1, 1], [], []>} : vector<8x64xf32>, vector<64x4xf32>, vector<8x4xf32> -> vector<8x4xf32>
    %c0_99 = arith.constant 0 : index
    %c0_100 = arith.constant 0 : index
    %377 = vector.load %arg11[%c0_99, %c0_100] : memref<1x4xf32, #tpu.memory_space<vmem>>, vector<1x4xf32>
    %378 = vector.broadcast %377 : vector<1x4xf32> to vector<8x4xf32>
    %379 = arith.addf %376, %378 : vector<8x4xf32>
    %c0_101 = arith.constant 0 : index
    %c0_102 = arith.constant 0 : index
    %380 = vector.load %arg12[%c0_101, %c0_102] : memref<8x4xf32, #tpu.memory_space<vmem>>, vector<8x4xf32>
    tpu.vector_store %arg12[%c0_101, %c0_102], %379 {strides = array<i32>} : memref<8x4xf32, #tpu.memory_space<vmem>>, vector<8x4xf32>,
    return
  }
}

</mosaic_0001>

<llo_original>
// kernel: network_forward.1
$region0: #{network_forward.1}
  #allocation0 [shape = 'u32[]', space=smem, size = 0x4, offset = 0x4, fixed_abs, tag = 'smem constant byte address 0x4 - core index']
  #allocation1 [shape = 'u32[144,128]{1,0:T(1,128)}', space=vmem, size = 0x12000, scoped, tag = 'internal scratch']
  %s0 = inlined_call_operand.vmem [shape: f32[64,128], index: 0, kind: input, shape index: {}]
  %s1 = inlined_call_operand.vmem [shape: f32[32,128], index: 1, kind: input, shape index: {}]
  %s2 = inlined_call_operand.vmem [shape: f32[32,128], index: 2, kind: input, shape index: {}]
  %s3 = inlined_call_operand.vmem [shape: f32[32,128], index: 3, kind: input, shape index: {}]
  %s4 = inlined_call_operand.vmem [shape: f32[1,128], index: 4, kind: input, shape index: {}]
  %s5 = inlined_call_operand.vmem [shape: f32[32,256], index: 5, kind: input, shape index: {}]
  %s6 = inlined_call_operand.vmem [shape: f32[32,256], index: 6, kind: input, shape index: {}]
  %s7 = inlined_call_operand.vmem [shape: f32[1,256], index: 7, kind: input, shape index: {}]
  %s8 = inlined_call_operand.vmem [shape: f32[256,64], index: 8, kind: input, shape index: {}]
  %s9 = inlined_call_operand.vmem [shape: f32[1,64], index: 9, kind: input, shape index: {}]
  %s10 = inlined_call_operand.vmem [shape: f32[64,4], index: 10, kind: input, shape index: {}]
  %s11 = inlined_call_operand.vmem [shape: f32[1,4], index: 11, kind: input, shape index: {}]
  %s12 = inlined_call_operand.vmem [shape: f32[8,4], index: 12, kind: output, shape index: {}]
  %s13 = sld [smem:[#allocation0]]
  $region58: #{network_forward.1} parent=0
    _
  %s15 = ssub.s32 1, %s13
  %s16 = scalar_select 0, %s15, %s13
  // Predicated region
  $region2: #{network_forward.1} parent=0 // pred_check
    _
  $region3: #{network_forward.1} parent=0 // pred_check_branch
    %18 = sbr.rel (0) target = $region5
  $region4: #{network_forward.1} parent=0 // pred_region
    _
  $region5: #{network_forward.1} parent=0 // pred_fallthru
    _
  // Predicated region
  $region6: #{network_forward.1} parent=0 // pred_check
    _
  $region7: #{network_forward.1} parent=0 // pred_check_branch
    %20 = sbr.rel (0) target = $region9
  $region8: #{network_forward.1} parent=0 // pred_region
    _
  $region9: #{network_forward.1} parent=0 // pred_fallthru
    _
  // Predicated region
  $region10: #{network_forward.1} parent=0 // pred_check
    _
  $region11: #{network_forward.1} parent=0 // pred_check_branch
    %22 = sbr.rel (0) target = $region13
  $region12: #{network_forward.1} parent=0 // pred_region
    _
  $region13: #{network_forward.1} parent=0 // pred_fallthru
    _
  // Predicated region
  $region14: #{network_forward.1} parent=0 // pred_check
    _
  $region15: #{network_forward.1} parent=0 // pred_check_branch
    %24 = sbr.rel (0) target = $region17
  $region16: #{network_forward.1} parent=0 // pred_region
    _
  $region17: #{network_forward.1} parent=0 // pred_fallthru
    _
  // Predicated region
  $region18: #{network_forward.1} parent=0 // pred_check
    _
  $region19: #{network_forward.1} parent=0 // pred_check_branch
    %26 = sbr.rel (0) target = $region21
  $region20: #{network_forward.1} parent=0 // pred_region
    _
  $region21: #{network_forward.1} parent=0 // pred_fallthru
    _
  // Predicated region
  $region22: #{network_forward.1} parent=0 // pred_check
    _
  $region23: #{network_forward.1} parent=0 // pred_check_branch
    %28 = sbr.rel (0) target = $region25
  $region24: #{network_forward.1} parent=0 // pred_region
    _
  $region25: #{network_forward.1} parent=0 // pred_fallthru
    _
  // Predicated region
  $region26: #{network_forward.1} parent=0 // pred_check
    _
  $region27: #{network_forward.1} parent=0 // pred_check_branch
    %30 = sbr.rel (0) target = $region29
  $region28: #{network_forward.1} parent=0 // pred_region
    _
  $region29: #{network_forward.1} parent=0 // pred_fallthru
    _
  // Predicated region
  $region30: #{network_forward.1} parent=0 // pred_check
    _
  $region31: #{network_forward.1} parent=0 // pred_check_branch
    %32 = sbr.rel (0) target = $region33
  $region32: #{network_forward.1} parent=0 // pred_region
    _
  $region33: #{network_forward.1} parent=0 // pred_fallthru
    _
  // Predicated region
  $region34: #{network_forward.1} parent=0 // pred_check
    _
  $region35: #{network_forward.1} parent=0 // pred_check_branch
    %34 = sbr.rel (0) target = $region37
  $region36: #{network_forward.1} parent=0 // pred_region
    _
  $region37: #{network_forward.1} parent=0 // pred_fallthru
    _
  // Predicated region
  $region38: #{network_forward.1} parent=0 // pred_check
    _
  $region39: #{network_forward.1} parent=0 // pred_check_branch
    %36 = sbr.rel (0) target = $region41
  $region40: #{network_forward.1} parent=0 // pred_region
    _
  $region41: #{network_forward.1} parent=0 // pred_fallthru
    _
  // Predicated region
  $region42: #{network_forward.1} parent=0 // pred_check
    _
  $region43: #{network_forward.1} parent=0 // pred_check_branch
    %38 = sbr.rel (0) target = $region45
  $region44: #{network_forward.1} parent=0 // pred_region
    _
  $region45: #{network_forward.1} parent=0 // pred_fallthru
    _
  // Predicated region
  $region46: #{network_forward.1} parent=0 // pred_check
    _
  $region47: #{network_forward.1} parent=0 // pred_check_branch
    %40 = sbr.rel (0) target = $region49
  $region48: #{network_forward.1} parent=0 // pred_region
    _
  $region49: #{network_forward.1} parent=0 // pred_fallthru
    _
  %v41 = vld [vmem:[%s0] sm:$0xff]
  %v42 = vld [vmem:[%s0 + $0x8] sm:$0xff]
  %v43 = vld [vmem:[%s0 + $0x10] sm:$0xff]
  %v44 = vld [vmem:[%s0 + $0x18] sm:$0xff]
  %v45 = vld [vmem:[%s0 + $0x20] sm:$0xff]
  %v46 = vld [vmem:[%s0 + $0x28] sm:$0xff]
  %v47 = vld [vmem:[%s0 + $0x30] sm:$0xff]
  %v48 = vld [vmem:[%s0 + $0x38] sm:$0xff]
  %v49 = vld [vmem:[%s1] sm:$0xff]
  %v50 = vld [vmem:[%s1 + $0x8] sm:$0xff]
  %v51 = vld [vmem:[%s1 + $0x10] sm:$0xff]
  %v52 = vld [vmem:[%s1 + $0x18] sm:$0xff]
  %v53 = vld [vmem:[%s2] sm:$0xff]
  %v54 = vld [vmem:[%s2 + $0x8] sm:$0xff]
  %v55 = vld [vmem:[%s2 + $0x10] sm:$0xff]
  %v56 = vld [vmem:[%s2 + $0x18] sm:$0xff]
  %v57 = vld [vmem:[%s3] sm:$0xff]
  %v58 = vld [vmem:[%s3 + $0x8] sm:$0xff]
  %v59 = vld [vmem:[%s3 + $0x10] sm:$0xff]
  %v60 = vld [vmem:[%s3 + $0x18] sm:$0xff]
  %v61 = vld [vmem:[%s4] sm:$0x1]
  %v63 = vlaneseq
  %v64 = vshrl.u32 %v63, 7
  %v65 = vsub.s32 0, %v64
  %v66 = vrot.slane %v61, %v65
  %v68 = vlaneseq
  %v69 = vand.u32 %v68, 127
  %vm70 = vcmp.ge.s32.totalorder %v69, 64
  %vm71 = vcmp.lt.s32.totalorder %v69, 96
  %vm72 = vmand %vm70, %vm71
  %vm73 = vcmask 261120
  %v75 = vsel %vm73, 0.0, 0
  %77 = vmatprep.subr.mxu0 0.0
  %78 = vmatpush1.msra.mxu0 0.0
  %79 = vmatprep.subr.mxu0 0.0
  %80 = vmatpush1.msra.mxu0 0.0
  %81 = vmatprep.subr.mxu0 0.0
  %82 = vmatpush1.msra.mxu0 0.0
  %83 = vmatprep.subr.mxu0 0.0
  %84 = vmatpush1.msra.mxu0 0.0
  %85 = vmatprep.subr.mxu0 0.0
  %86 = vmatpush1.msra.mxu0 0.0
  %87 = vmatprep.subr.mxu0 0.0
  %88 = vmatpush1.msra.mxu0 0.0
  %89 = vmatprep.subr.mxu0 0.0
  %90 = vmatpush1.msra.mxu0 0.0
  %91 = vmatprep.subr.mxu0 0.0
  %92 = vmatpush1.msra.mxu0 0.0
  %93 = vmatprep.subr.mxu0 0.0
  %94 = vmatpush1.msra.mxu0 0.0
  %95 = vmatprep.subr.mxu0 0.0
  %96 = vmatpush1.msra.mxu0 0.0
  %97 = vmatprep.subr.mxu0 0.0
  %98 = vmatpush1.msra.mxu0 0.0
  %99 = vmatprep.subr.mxu0 0.0
  %100 = vmatpush1.msra.mxu0 0.0
  %101 = vmatprep.subr.mxu0 0.0
  %102 = vmatpush1.msra.mxu0 %v52
  %103 = vmatprep.subr.mxu0 0.0
  %104 = vmatpush1.msra.mxu0 %v51
  %105 = vmatprep.subr.mxu0 0.0
  %106 = vmatpush1.msra.mxu0 %v50
  %107 = vmatprep.subr.mxu0 0.0
  %108 = vmatpush1.msra.mxu0 %v49
  %109 = vmatprep.subr.mxu0 0.0
  %110 = vmatpush2.msra.mxu0 0.0
  %111 = vmatprep.subr.mxu0 0.0
  %112 = vmatpush2.msra.mxu0 0.0
  %113 = vmatprep.subr.mxu0 0.0
  %114 = vmatpush2.msra.mxu0 0.0
  %115 = vmatprep.subr.mxu0 0.0
  %116 = vmatpush2.msra.mxu0 0.0
  %117 = vmatprep.subr.mxu0 0.0
  %118 = vmatpush2.msra.mxu0 0.0
  %119 = vmatprep.subr.mxu0 0.0
  %120 = vmatpush2.msra.mxu0 0.0
  %121 = vmatprep.subr.mxu0 0.0
  %122 = vmatpush2.msra.mxu0 0.0
  %123 = vmatprep.subr.mxu0 0.0
  %124 = vmatpush2.msra.mxu0 0.0
  %125 = vmatprep.subr.mxu0 0.0
  %126 = vmatpush2.msra.mxu0 0.0
  %127 = vmatprep.subr.mxu0 0.0
  %128 = vmatpush2.msra.mxu0 0.0
  %129 = vmatprep.subr.mxu0 0.0
  %130 = vmatpush2.msra.mxu0 0.0
  %131 = vmatprep.subr.mxu0 0.0
  %132 = vmatpush2.msra.mxu0 0.0
  %133 = vmatprep.subr.mxu0 0.0
  %134 = vmatpush2.msra.mxu0 0.0
  %135 = vmatprep.subr.mxu0 0.0
  %136 = vmatpush2.msra.mxu0 0.0
  %137 = vmatprep.subr.mxu0 0.0
  %138 = vmatpush2.msra.mxu0 0.0
  %139 = vmatprep.subr.mxu0 0.0
  %140 = vmatpush2.msra.mxu0 0.0
  %141 = vmatprep.mubr.f32.mxu0 0.0
  %142 = vmatmul.mubr.f32.gmra.mxu0 %v75
  %v143 = vpop.f32.mrf.mxu0
  %v144 = vadd.f32 0.0, %v143
  %v145 = vpop.f32.mrf.mxu0
  %146 = vdwg.mxu0
  %v147 = vadd.f32 %v41, %v144
  %v148 = vmul.f32 %v147, 0.5
  %v149 = vsel %vm72, %v147, %v148
  %v150 = vtanh.pop %v149
  %v151 = vmul.f32 %v150, 0.5
  %v152 = vadd.f32 %v151, 0.5
  %v153 = vsel %vm72, %v150, %v152
  %v154 = vmul.f32 %v153, 0.0
  %156 = vrot.lane.b32.xlu0 %v153, 64
  %v157 = vpop.permute.xlu0 %156
  %v159 = vmul.f32 %v153, %v157
  %161 = vrot.lane.b32.xlu0 %v159, 32
  %v162 = vpop.permute.xlu0 %161
  %v164 = vadd.f32 %v154, %v162
  %v165 = vtanh.pop %v164
  %167 = vrot.lane.b32.xlu0 %v165, 64
  %v168 = vpop.permute.xlu0 %167
  %v170 = vmul.f32 %v153, %v168
  %171 = vmatprep.subr.mxu0 0.0
  %172 = vmatpush1.msra.mxu0 0.0
  %173 = vmatprep.subr.mxu0 0.0
  %174 = vmatpush1.msra.mxu0 0.0
  %175 = vmatprep.subr.mxu0 0.0
  %176 = vmatpush1.msra.mxu0 0.0
  %177 = vmatprep.subr.mxu0 0.0
  %178 = vmatpush1.msra.mxu0 0.0
  %179 = vmatprep.subr.mxu0 0.0
  %180 = vmatpush1.msra.mxu0 0.0
  %181 = vmatprep.subr.mxu0 0.0
  %182 = vmatpush1.msra.mxu0 0.0
  %183 = vmatprep.subr.mxu0 0.0
  %184 = vmatpush1.msra.mxu0 0.0
  %185 = vmatprep.subr.mxu0 0.0
  %186 = vmatpush1.msra.mxu0 0.0
  %187 = vmatprep.subr.mxu0 0.0
  %188 = vmatpush1.msra.mxu0 0.0
  %189 = vmatprep.subr.mxu0 0.0
  %190 = vmatpush1.msra.mxu0 0.0
  %191 = vmatprep.subr.mxu0 0.0
  %192 = vmatpush1.msra.mxu0 0.0
  %193 = vmatprep.subr.mxu0 0.0
  %194 = vmatpush1.msra.mxu0 0.0
  %195 = vmatprep.subr.mxu0 0.0
  %196 = vmatpush1.msra.mxu0 %v60
  %197 = vmatprep.subr.mxu0 0.0
  %198 = vmatpush1.msra.mxu0 %v59
  %199 = vmatprep.subr.mxu0 0.0
  %200 = vmatpush1.msra.mxu0 %v58
  %201 = vmatprep.subr.mxu0 0.0
  %202 = vmatpush1.msra.mxu0 %v57
  %203 = vmatprep.subr.mxu0 0.0
  %204 = vmatpush2.msra.mxu0 0.0
  %205 = vmatprep.subr.mxu0 0.0
  %206 = vmatpush2.msra.mxu0 0.0
  %207 = vmatprep.subr.mxu0 0.0
  %208 = vmatpush2.msra.mxu0 0.0
  %209 = vmatprep.subr.mxu0 0.0
  %210 = vmatpush2.msra.mxu0 0.0
  %211 = vmatprep.subr.mxu0 0.0
  %212 = vmatpush2.msra.mxu0 0.0
  %213 = vmatprep.subr.mxu0 0.0
  %214 = vmatpush2.msra.mxu0 0.0
  %215 = vmatprep.subr.mxu0 0.0
  %216 = vmatpush2.msra.mxu0 0.0
  %217 = vmatprep.subr.mxu0 0.0
  %218 = vmatpush2.msra.mxu0 0.0
  %219 = vmatprep.subr.mxu0 0.0
  %220 = vmatpush2.msra.mxu0 0.0
  %221 = vmatprep.subr.mxu0 0.0
  %222 = vmatpush2.msra.mxu0 0.0
  %223 = vmatprep.subr.mxu0 0.0
  %224 = vmatpush2.msra.mxu0 0.0
  %225 = vmatprep.subr.mxu0 0.0
  %226 = vmatpush2.msra.mxu0 0.0
  %227 = vmatprep.subr.mxu0 0.0
  %228 = vmatpush2.msra.mxu0 0.0
  %229 = vmatprep.subr.mxu0 0.0
  %230 = vmatpush2.msra.mxu0 0.0
  %231 = vmatprep.subr.mxu0 0.0
  %232 = vmatpush2.msra.mxu0 0.0
  %233 = vmatprep.subr.mxu0 0.0
  %234 = vmatpush2.msra.mxu0 0.0
  %235 = vmatprep.mubr.f32.mxu0 0.0
  %236 = vmatmul.mubr.f32.gmra.mxu0 %v75
  %v237 = vpop.f32.mrf.mxu0
  %v238 = vadd.f32 0.0, %v237
  %v239 = vpop.f32.mrf.mxu0
  %240 = vdwg.mxu0
  %242 = vrot.lane.b32.xlu0 %v170, 32
  %v243 = vpop.permute.xlu0 %242
  %v244 = vsel %vm73, %v243, 0
  %246 = vmatprep.subr.mxu0 0.0
  %247 = vmatpush1.msra.mxu0 0.0
  %248 = vmatprep.subr.mxu0 0.0
  %249 = vmatpush1.msra.mxu0 0.0
  %250 = vmatprep.subr.mxu0 0.0
  %251 = vmatpush1.msra.mxu0 0.0
  %252 = vmatprep.subr.mxu0 0.0
  %253 = vmatpush1.msra.mxu0 0.0
  %254 = vmatprep.subr.mxu0 0.0
  %255 = vmatpush1.msra.mxu0 0.0
  %256 = vmatprep.subr.mxu0 0.0
  %257 = vmatpush1.msra.mxu0 0.0
  %258 = vmatprep.subr.mxu0 0.0
  %259 = vmatpush1.msra.mxu0 0.0
  %260 = vmatprep.subr.mxu0 0.0
  %261 = vmatpush1.msra.mxu0 0.0
  %262 = vmatprep.subr.mxu0 0.0
  %263 = vmatpush1.msra.mxu0 0.0
  %264 = vmatprep.subr.mxu0 0.0
  %265 = vmatpush1.msra.mxu0 0.0
  %266 = vmatprep.subr.mxu0 0.0
  %267 = vmatpush1.msra.mxu0 0.0
  %268 = vmatprep.subr.mxu0 0.0
  %269 = vmatpush1.msra.mxu0 0.0
  %270 = vmatprep.subr.mxu0 0.0
  %271 = vmatpush1.msra.mxu0 %v56
  %272 = vmatprep.subr.mxu0 0.0
  %273 = vmatpush1.msra.mxu0 %v55
  %274 = vmatprep.subr.mxu0 0.0
  %275 = vmatpush1.msra.mxu0 %v54
  %276 = vmatprep.subr.mxu0 0.0
  %277 = vmatpush1.msra.mxu0 %v53
  %278 = vmatprep.subr.mxu0 0.0
  %279 = vmatpush2.msra.mxu0 0.0
  %280 = vmatprep.subr.mxu0 0.0
  %281 = vmatpush2.msra.mxu0 0.0
  %282 = vmatprep.subr.mxu0 0.0
  %283 = vmatpush2.msra.mxu0 0.0
  %284 = vmatprep.subr.mxu0 0.0
  %285 = vmatpush2.msra.mxu0 0.0
  %286 = vmatprep.subr.mxu0 0.0
  %287 = vmatpush2.msra.mxu0 0.0
  %288 = vmatprep.subr.mxu0 0.0
  %289 = vmatpush2.msra.mxu0 0.0
  %290 = vmatprep.subr.mxu0 0.0
  %291 = vmatpush2.msra.mxu0 0.0
  %292 = vmatprep.subr.mxu0 0.0
  %293 = vmatpush2.msra.mxu0 0.0
  %294 = vmatprep.subr.mxu0 0.0
  %295 = vmatpush2.msra.mxu0 0.0
  %296 = vmatprep.subr.mxu0 0.0
  %297 = vmatpush2.msra.mxu0 0.0
  %298 = vmatprep.subr.mxu0 0.0
  %299 = vmatpush2.msra.mxu0 0.0
  %300 = vmatprep.subr.mxu0 0.0
  %301 = vmatpush2.msra.mxu0 0.0
  %302 = vmatprep.subr.mxu0 0.0
  %303 = vmatpush2.msra.mxu0 0.0
  %304 = vmatprep.subr.mxu0 0.0
  %305 = vmatpush2.msra.mxu0 0.0
  %306 = vmatprep.subr.mxu0 0.0
  %307 = vmatpush2.msra.mxu0 0.0
  %308 = vmatprep.subr.mxu0 0.0
  %309 = vmatpush2.msra.mxu0 0.0
  %310 = vmatprep.mubr.f32.mxu0 0.0
  %311 = vmatmul.mubr.f32.gmra.mxu0 %v244
  %v312 = vpop.f32.mrf.mxu0
  %v313 = vadd.f32 %v238, %v312
  %v314 = vpop.f32.mrf.mxu0
  %315 = vdwg.mxu0
  %v316 = vadd.f32 %v313, %v66
  %v317 = vmul.f32 %v316, 0.5
  %v318 = vsel %vm72, %v316, %v317
  %v319 = vtanh.pop %v318
  %v320 = vmul.f32 %v319, 0.5
  %v321 = vadd.f32 %v320, 0.5
  %v322 = vsel %vm72, %v319, %v321
  %v323 = vmul.f32 %v322, 0.0
  %325 = vrot.lane.b32.xlu0 %v322, 64
  %v326 = vpop.permute.xlu0 %325
  %v328 = vmul.f32 %v322, %v326
  %330 = vrot.lane.b32.xlu0 %v328, 32
  %v331 = vpop.permute.xlu0 %330
  %v333 = vadd.f32 %v323, %v331
  %v334 = vtanh.pop %v333
  %336 = vrot.lane.b32.xlu0 %v334, 64
  %v337 = vpop.permute.xlu0 %336
  %v339 = vmul.f32 %v322, %v337
  %340 = vmatprep.subr.mxu0 0.0
  %341 = vmatpush1.msra.mxu0 0.0
  %342 = vmatprep.subr.mxu0 0.0
  %343 = vmatpush1.msra.mxu0 0.0
  %344 = vmatprep.subr.mxu0 0.0
  %345 = vmatpush1.msra.mxu0 0.0
  %346 = vmatprep.subr.mxu0 0.0
  %347 = vmatpush1.msra.mxu0 0.0
  %348 = vmatprep.subr.mxu0 0.0
  %349 = vmatpush1.msra.mxu0 0.0
  %350 = vmatprep.subr.mxu0 0.0
  %351 = vmatpush1.msra.mxu0 0.0
  %352 = vmatprep.subr.mxu0 0.0
  %353 = vmatpush1.msra.mxu0 0.0
  %354 = vmatprep.subr.mxu0 0.0
  %355 = vmatpush1.msra.mxu0 0.0
  %356 = vmatprep.subr.mxu0 0.0
  %357 = vmatpush1.msra.mxu0 0.0
  %358 = vmatprep.subr.mxu0 0.0
  %359 = vmatpush1.msra.mxu0 0.0
  %360 = vmatprep.subr.mxu0 0.0
  %361 = vmatpush1.msra.mxu0 0.0
  %362 = vmatprep.subr.mxu0 0.0
  %363 = vmatpush1.msra.mxu0 0.0
  %364 = vmatprep.subr.mxu0 0.0
  %365 = vmatpush1.msra.mxu0 %v52
  %366 = vmatprep.subr.mxu0 0.0
  %367 = vmatpush1.msra.mxu0 %v51
  %368 = vmatprep.subr.mxu0 0.0
  %369 = vmatpush1.msra.mxu0 %v50
  %370 = vmatprep.subr.mxu0 0.0
  %371 = vmatpush1.msra.mxu0 %v49
  %372 = vmatprep.subr.mxu0 0.0
  %373 = vmatpush2.msra.mxu0 0.0
  %374 = vmatprep.subr.mxu0 0.0
  %375 = vmatpush2.msra.mxu0 0.0
  %376 = vmatprep.subr.mxu0 0.0
  %377 = vmatpush2.msra.mxu0 0.0
  %378 = vmatprep.subr.mxu0 0.0
  %379 = vmatpush2.msra.mxu0 0.0
  %380 = vmatprep.subr.mxu0 0.0
  %381 = vmatpush2.msra.mxu0 0.0
  %382 = vmatprep.subr.mxu0 0.0
  %383 = vmatpush2.msra.mxu0 0.0
  %384 = vmatprep.subr.mxu0 0.0
  %385 = vmatpush2.msra.mxu0 0.0
  %386 = vmatprep.subr.mxu0 0.0
  %387 = vmatpush2.msra.mxu0 0.0
  %388 = vmatprep.subr.mxu0 0.0
  %389 = vmatpush2.msra.mxu0 0.0
  %390 = vmatprep.subr.mxu0 0.0
  %391 = vmatpush2.msra.mxu0 0.0
  %392 = vmatprep.subr.mxu0 0.0
  %393 = vmatpush2.msra.mxu0 0.0
  %394 = vmatprep.subr.mxu0 0.0
  %395 = vmatpush2.msra.mxu0 0.0
  %396 = vmatprep.subr.mxu0 0.0
  %397 = vmatpush2.msra.mxu0 0.0
  %398 = vmatprep.subr.mxu0 0.0
  %399 = vmatpush2.msra.mxu0 0.0
  %400 = vmatprep.subr.mxu0 0.0
  %401 = vmatpush2.msra.mxu0 0.0
  %402 = vmatprep.subr.mxu0 0.0
  %403 = vmatpush2.msra.mxu0 0.0
  %404 = vmatprep.mubr.f32.mxu0 0.0
  %405 = vmatmul.mubr.f32.gmra.mxu0 %v244
  %v406 = vpop.f32.mrf.mxu0
  %v407 = vadd.f32 0.0, %v406
  %v408 = vpop.f32.mrf.mxu0
  %409 = vdwg.mxu0
  %v410 = vadd.f32 %v42, %v407
  %v411 = vmul.f32 %v410, 0.5
  %v412 = vsel %vm72, %v410, %v411
  %v413 = vtanh.pop %v412
  %v414 = vmul.f32 %v413, 0.5
  %v415 = vadd.f32 %v414, 0.5
  %v416 = vsel %vm72, %v413, %v415
  %v417 = vmul.f32 %v416, %v164
  %419 = vrot.lane.b32.xlu0 %v416, 64
  %v420 = vpop.permute.xlu0 %419
  %v422 = vmul.f32 %v416, %v420
  %424 = vrot.lane.b32.xlu0 %v422, 32
  %v425 = vpop.permute.xlu0 %424
  %v427 = vadd.f32 %v417, %v425
  %v428 = vtanh.pop %v427
  %430 = vrot.lane.b32.xlu0 %v428, 64
  %v431 = vpop.permute.xlu0 %430
  %v433 = vmul.f32 %v416, %v431
  %435 = vrot.lane.b32.xlu0 %v339, 32
  %v436 = vpop.permute.xlu0 %435
  %v437 = vsel %vm73, %v436, 0
  %439 = vmatprep.subr.mxu0 0.0
  %440 = vmatpush1.msra.mxu0 0.0
  %441 = vmatprep.subr.mxu0 0.0
  %442 = vmatpush1.msra.mxu0 0.0
  %443 = vmatprep.subr.mxu0 0.0
  %444 = vmatpush1.msra.mxu0 0.0
  %445 = vmatprep.subr.mxu0 0.0
  %446 = vmatpush1.msra.mxu0 0.0
  %447 = vmatprep.subr.mxu0 0.0
  %448 = vmatpush1.msra.mxu0 0.0
  %449 = vmatprep.subr.mxu0 0.0
  %450 = vmatpush1.msra.mxu0 0.0
  %451 = vmatprep.subr.mxu0 0.0
  %452 = vmatpush1.msra.mxu0 0.0
  %453 = vmatprep.subr.mxu0 0.0
  %454 = vmatpush1.msra.mxu0 0.0
  %455 = vmatprep.subr.mxu0 0.0
  %456 = vmatpush1.msra.mxu0 0.0
  %457 = vmatprep.subr.mxu0 0.0
  %458 = vmatpush1.msra.mxu0 0.0
  %459 = vmatprep.subr.mxu0 0.0
  %460 = vmatpush1.msra.mxu0 0.0
  %461 = vmatprep.subr.mxu0 0.0
  %462 = vmatpush1.msra.mxu0 0.0
  %463 = vmatprep.subr.mxu0 0.0
  %464 = vmatpush1.msra.mxu0 %v60
  %465 = vmatprep.subr.mxu0 0.0
  %466 = vmatpush1.msra.mxu0 %v59
  %467 = vmatprep.subr.mxu0 0.0
  %468 = vmatpush1.msra.mxu0 %v58
  %469 = vmatprep.subr.mxu0 0.0
  %470 = vmatpush1.msra.mxu0 %v57
  %471 = vmatprep.subr.mxu0 0.0
  %472 = vmatpush2.msra.mxu0 0.0
  %473 = vmatprep.subr.mxu0 0.0
  %474 = vmatpush2.msra.mxu0 0.0
  %475 = vmatprep.subr.mxu0 0.0
  %476 = vmatpush2.msra.mxu0 0.0
  %477 = vmatprep.subr.mxu0 0.0
  %478 = vmatpush2.msra.mxu0 0.0
  %479 = vmatprep.subr.mxu0 0.0
  %480 = vmatpush2.msra.mxu0 0.0
  %481 = vmatprep.subr.mxu0 0.0
  %482 = vmatpush2.msra.mxu0 0.0
  %483 = vmatprep.subr.mxu0 0.0
  %484 = vmatpush2.msra.mxu0 0.0
  %485 = vmatprep.subr.mxu0 0.0
  %486 = vmatpush2.msra.mxu0 0.0
  %487 = vmatprep.subr.mxu0 0.0
  %488 = vmatpush2.msra.mxu0 0.0
  %489 = vmatprep.subr.mxu0 0.0
  %490 = vmatpush2.msra.mxu0 0.0
  %491 = vmatprep.subr.mxu0 0.0
  %492 = vmatpush2.msra.mxu0 0.0
  %493 = vmatprep.subr.mxu0 0.0
  %494 = vmatpush2.msra.mxu0 0.0
  %495 = vmatprep.subr.mxu0 0.0
  %496 = vmatpush2.msra.mxu0 0.0
  %497 = vmatprep.subr.mxu0 0.0
  %498 = vmatpush2.msra.mxu0 0.0
  %499 = vmatprep.subr.mxu0 0.0
  %500 = vmatpush2.msra.mxu0 0.0
  %501 = vmatprep.subr.mxu0 0.0
  %502 = vmatpush2.msra.mxu0 0.0
  %503 = vmatprep.mubr.f32.mxu0 0.0
  %504 = vmatmul.mubr.f32.gmra.mxu0 %v437
  %v505 = vpop.f32.mrf.mxu0
  %v506 = vadd.f32 0.0, %v505
  %v507 = vpop.f32.mrf.mxu0
  %508 = vdwg.mxu0
  %510 = vrot.lane.b32.xlu0 %v433, 32
  %v511 = vpop.permute.xlu0 %510
  %v512 = vsel %vm73, %v511, 0
  %514 = vmatprep.subr.mxu0 0.0
  %515 = vmatpush1.msra.mxu0 0.0
  %516 = vmatprep.subr.mxu0 0.0
  %517 = vmatpush1.msra.mxu0 0.0
  %518 = vmatprep.subr.mxu0 0.0
  %519 = vmatpush1.msra.mxu0 0.0
  %520 = vmatprep.subr.mxu0 0.0
  %521 = vmatpush1.msra.mxu0 0.0
  %522 = vmatprep.subr.mxu0 0.0
  %523 = vmatpush1.msra.mxu0 0.0
  %524 = vmatprep.subr.mxu0 0.0
  %525 = vmatpush1.msra.mxu0 0.0
  %526 = vmatprep.subr.mxu0 0.0
  %527 = vmatpush1.msra.mxu0 0.0
  %528 = vmatprep.subr.mxu0 0.0
  %529 = vmatpush1.msra.mxu0 0.0
  %530 = vmatprep.subr.mxu0 0.0
  %531 = vmatpush1.msra.mxu0 0.0
  %532 = vmatprep.subr.mxu0 0.0
  %533 = vmatpush1.msra.mxu0 0.0
  %534 = vmatprep.subr.mxu0 0.0
  %535 = vmatpush1.msra.mxu0 0.0
  %536 = vmatprep.subr.mxu0 0.0
  %537 = vmatpush1.msra.mxu0 0.0
  %538 = vmatprep.subr.mxu0 0.0
  %539 = vmatpush1.msra.mxu0 %v56
  %540 = vmatprep.subr.mxu0 0.0
  %541 = vmatpush1.msra.mxu0 %v55
  %542 = vmatprep.subr.mxu0 0.0
  %543 = vmatpush1.msra.mxu0 %v54
  %544 = vmatprep.subr.mxu0 0.0
  %545 = vmatpush1.msra.mxu0 %v53
  %546 = vmatprep.subr.mxu0 0.0
  %547 = vmatpush2.msra.mxu0 0.0
  %548 = vmatprep.subr.mxu0 0.0
  %549 = vmatpush2.msra.mxu0 0.0
  %550 = vmatprep.subr.mxu0 0.0
  %551 = vmatpush2.msra.mxu0 0.0
  %552 = vmatprep.subr.mxu0 0.0
  %553 = vmatpush2.msra.mxu0 0.0
  %554 = vmatprep.subr.mxu0 0.0
  %555 = vmatpush2.msra.mxu0 0.0
  %556 = vmatprep.subr.mxu0 0.0
  %557 = vmatpush2.msra.mxu0 0.0
  %558 = vmatprep.subr.mxu0 0.0
  %559 = vmatpush2.msra.mxu0 0.0
  %560 = vmatprep.subr.mxu0 0.0
  %561 = vmatpush2.msra.mxu0 0.0
  %562 = vmatprep.subr.mxu0 0.0
  %563 = vmatpush2.msra.mxu0 0.0
  %564 = vmatprep.subr.mxu0 0.0
  %565 = vmatpush2.msra.mxu0 0.0
  %566 = vmatprep.subr.mxu0 0.0
  %567 = vmatpush2.msra.mxu0 0.0
  %568 = vmatprep.subr.mxu0 0.0
  %569 = vmatpush2.msra.mxu0 0.0
  %570 = vmatprep.subr.mxu0 0.0
  %571 = vmatpush2.msra.mxu0 0.0
  %572 = vmatprep.subr.mxu0 0.0
  %573 = vmatpush2.msra.mxu0 0.0
  %574 = vmatprep.subr.mxu0 0.0
  %575 = vmatpush2.msra.mxu0 0.0
  %576 = vmatprep.subr.mxu0 0.0
  %577 = vmatpush2.msra.mxu0 0.0
  %578 = vmatprep.mubr.f32.mxu0 0.0
  %579 = vmatmul.mubr.f32.gmra.mxu0 %v512
  %v580 = vpop.f32.mrf.mxu0
  %v581 = vadd.f32 %v506, %v580
  %v582 = vpop.f32.mrf.mxu0
  %583 = vdwg.mxu0
  %v584 = vadd.f32 %v581, %v66
  %v585 = vmul.f32 %v584, 0.5
  %v586 = vsel %vm72, %v584, %v585
  %v587 = vtanh.pop %v586
  %v588 = vmul.f32 %v587, 0.5
  %v589 = vadd.f32 %v588, 0.5
  %v590 = vsel %vm72, %v587, %v589
  %v591 = vmul.f32 %v590, %v333
  %593 = vrot.lane.b32.xlu0 %v590, 64
  %v594 = vpop.permute.xlu0 %593
  %v596 = vmul.f32 %v590, %v594
  %598 = vrot.lane.b32.xlu0 %v596, 32
  %v599 = vpop.permute.xlu0 %598
  %v601 = vadd.f32 %v591, %v599
  %v602 = vtanh.pop %v601
  %604 = vrot.lane.b32.xlu0 %v602, 64
  %v605 = vpop.permute.xlu0 %604
  %v607 = vmul.f32 %v590, %v605
  %608 = vmatprep.subr.mxu0 0.0
  %609 = vmatpush1.msra.mxu0 0.0
  %610 = vmatprep.subr.mxu0 0.0
  %611 = vmatpush1.msra.mxu0 0.0
  %612 = vmatprep.subr.mxu0 0.0
  %613 = vmatpush1.msra.mxu0 0.0
  %614 = vmatprep.subr.mxu0 0.0
  %615 = vmatpush1.msra.mxu0 0.0
  %616 = vmatprep.subr.mxu0 0.0
  %617 = vmatpush1.msra.mxu0 0.0
  %618 = vmatprep.subr.mxu0 0.0
  %619 = vmatpush1.msra.mxu0 0.0
  %620 = vmatprep.subr.mxu0 0.0
  %621 = vmatpush1.msra.mxu0 0.0
  %622 = vmatprep.subr.mxu0 0.0
  %623 = vmatpush1.msra.mxu0 0.0
  %624 = vmatprep.subr.mxu0 0.0
  %625 = vmatpush1.msra.mxu0 0.0
  %626 = vmatprep.subr.mxu0 0.0
  %627 = vmatpush1.msra.mxu0 0.0
  %628 = vmatprep.subr.mxu0 0.0
  %629 = vmatpush1.msra.mxu0 0.0
  %630 = vmatprep.subr.mxu0 0.0
  %631 = vmatpush1.msra.mxu0 0.0
  %632 = vmatprep.subr.mxu0 0.0
  %633 = vmatpush1.msra.mxu0 %v52
  %634 = vmatprep.subr.mxu0 0.0
  %635 = vmatpush1.msra.mxu0 %v51
  %636 = vmatprep.subr.mxu0 0.0
  %637 = vmatpush1.msra.mxu0 %v50
  %638 = vmatprep.subr.mxu0 0.0
  %639 = vmatpush1.msra.mxu0 %v49
  %640 = vmatprep.subr.mxu0 0.0
  %641 = vmatpush2.msra.mxu0 0.0
  %642 = vmatprep.subr.mxu0 0.0
  %643 = vmatpush2.msra.mxu0 0.0
  %644 = vmatprep.subr.mxu0 0.0
  %645 = vmatpush2.msra.mxu0 0.0
  %646 = vmatprep.subr.mxu0 0.0
  %647 = vmatpush2.msra.mxu0 0.0
  %648 = vmatprep.subr.mxu0 0.0
  %649 = vmatpush2.msra.mxu0 0.0
  %650 = vmatprep.subr.mxu0 0.0
  %651 = vmatpush2.msra.mxu0 0.0
  %652 = vmatprep.subr.mxu0 0.0
  %653 = vmatpush2.msra.mxu0 0.0
  %654 = vmatprep.subr.mxu0 0.0
  %655 = vmatpush2.msra.mxu0 0.0
  %656 = vmatprep.subr.mxu0 0.0
  %657 = vmatpush2.msra.mxu0 0.0
  %658 = vmatprep.subr.mxu0 0.0
  %659 = vmatpush2.msra.mxu0 0.0
  %660 = vmatprep.subr.mxu0 0.0
  %661 = vmatpush2.msra.mxu0 0.0
  %662 = vmatprep.subr.mxu0 0.0
  %663 = vmatpush2.msra.mxu0 0.0
  %664 = vmatprep.subr.mxu0 0.0
  %665 = vmatpush2.msra.mxu0 0.0
  %666 = vmatprep.subr.mxu0 0.0
  %667 = vmatpush2.msra.mxu0 0.0
  %668 = vmatprep.subr.mxu0 0.0
  %669 = vmatpush2.msra.mxu0 0.0
  %670 = vmatprep.subr.mxu0 0.0
  %671 = vmatpush2.msra.mxu0 0.0
  %672 = vmatprep.mubr.f32.mxu0 0.0
  %673 = vmatmul.mubr.f32.gmra.mxu0 %v512
  %v674 = vpop.f32.mrf.mxu0
  %v675 = vadd.f32 0.0, %v674
  %v676 = vpop.f32.mrf.mxu0
  %677 = vdwg.mxu0
  %v678 = vadd.f32 %v43, %v675
  %v679 = vmul.f32 %v678, 0.5
  %v680 = vsel %vm72, %v678, %v679
  %v681 = vtanh.pop %v680
  %v682 = vmul.f32 %v681, 0.5
  %v683 = vadd.f32 %v682, 0.5
  %v684 = vsel %vm72, %v681, %v683
  %v685 = vmul.f32 %v684, %v427
  %687 = vrot.lane.b32.xlu0 %v684, 64
  %v688 = vpop.permute.xlu0 %687
  %v690 = vmul.f32 %v684, %v688
  %692 = vrot.lane.b32.xlu0 %v690, 32
  %v693 = vpop.permute.xlu0 %692
  %v695 = vadd.f32 %v685, %v693
  %v696 = vtanh.pop %v695
  %698 = vrot.lane.b32.xlu0 %v696, 64
  %v699 = vpop.permute.xlu0 %698
  %v701 = vmul.f32 %v684, %v699
  %703 = vrot.lane.b32.xlu0 %v607, 32
  %v704 = vpop.permute.xlu0 %703
  %v705 = vsel %vm73, %v704, 0
  %707 = vmatprep.subr.mxu0 0.0
  %708 = vmatpush1.msra.mxu0 0.0
  %709 = vmatprep.subr.mxu0 0.0
  %710 = vmatpush1.msra.mxu0 0.0
  %711 = vmatprep.subr.mxu0 0.0
  %712 = vmatpush1.msra.mxu0 0.0
  %713 = vmatprep.subr.mxu0 0.0
  %714 = vmatpush1.msra.mxu0 0.0
  %715 = vmatprep.subr.mxu0 0.0
  %716 = vmatpush1.msra.mxu0 0.0
  %717 = vmatprep.subr.mxu0 0.0
  %718 = vmatpush1.msra.mxu0 0.0
  %719 = vmatprep.subr.mxu0 0.0
  %720 = vmatpush1.msra.mxu0 0.0
  %721 = vmatprep.subr.mxu0 0.0
  %722 = vmatpush1.msra.mxu0 0.0
  %723 = vmatprep.subr.mxu0 0.0
  %724 = vmatpush1.msra.mxu0 0.0
  %725 = vmatprep.subr.mxu0 0.0
  %726 = vmatpush1.msra.mxu0 0.0
  %727 = vmatprep.subr.mxu0 0.0
  %728 = vmatpush1.msra.mxu0 0.0
  %729 = vmatprep.subr.mxu0 0.0
  %730 = vmatpush1.msra.mxu0 0.0
  %731 = vmatprep.subr.mxu0 0.0
  %732 = vmatpush1.msra.mxu0 %v60
  %733 = vmatprep.subr.mxu0 0.0
  %734 = vmatpush1.msra.mxu0 %v59
  %735 = vmatprep.subr.mxu0 0.0
  %736 = vmatpush1.msra.mxu0 %v58
  %737 = vmatprep.subr.mxu0 0.0
  %738 = vmatpush1.msra.mxu0 %v57
  %739 = vmatprep.subr.mxu0 0.0
  %740 = vmatpush2.msra.mxu0 0.0
  %741 = vmatprep.subr.mxu0 0.0
  %742 = vmatpush2.msra.mxu0 0.0
  %743 = vmatprep.subr.mxu0 0.0
  %744 = vmatpush2.msra.mxu0 0.0
  %745 = vmatprep.subr.mxu0 0.0
  %746 = vmatpush2.msra.mxu0 0.0
  %747 = vmatprep.subr.mxu0 0.0
  %748 = vmatpush2.msra.mxu0 0.0
  %749 = vmatprep.subr.mxu0 0.0
  %750 = vmatpush2.msra.mxu0 0.0
  %751 = vmatprep.subr.mxu0 0.0
  %752 = vmatpush2.msra.mxu0 0.0
  %753 = vmatprep.subr.mxu0 0.0
  %754 = vmatpush2.msra.mxu0 0.0
  %755 = vmatprep.subr.mxu0 0.0
  %756 = vmatpush2.msra.mxu0 0.0
  %757 = vmatprep.subr.mxu0 0.0
  %758 = vmatpush2.msra.mxu0 0.0
  %759 = vmatprep.subr.mxu0 0.0
  %760 = vmatpush2.msra.mxu0 0.0
  %761 = vmatprep.subr.mxu0 0.0
  %762 = vmatpush2.msra.mxu0 0.0
  %763 = vmatprep.subr.mxu0 0.0
  %764 = vmatpush2.msra.mxu0 0.0
  %765 = vmatprep.subr.mxu0 0.0
  %766 = vmatpush2.msra.mxu0 0.0
  %767 = vmatprep.subr.mxu0 0.0
  %768 = vmatpush2.msra.mxu0 0.0
  %769 = vmatprep.subr.mxu0 0.0
  %770 = vmatpush2.msra.mxu0 0.0
  %771 = vmatprep.mubr.f32.mxu0 0.0
  %772 = vmatmul.mubr.f32.gmra.mxu0 %v705
  %v773 = vpop.f32.mrf.mxu0
  %v774 = vadd.f32 0.0, %v773
  %v775 = vpop.f32.mrf.mxu0
  %776 = vdwg.mxu0
  %778 = vrot.lane.b32.xlu0 %v701, 32
  %v779 = vpop.permute.xlu0 %778
  %v780 = vsel %vm73, %v779, 0
  %782 = vmatprep.subr.mxu0 0.0
  %783 = vmatpush1.msra.mxu0 0.0
  %784 = vmatprep.subr.mxu0 0.0
  %785 = vmatpush1.msra.mxu0 0.0
  %786 = vmatprep.subr.mxu0 0.0
  %787 = vmatpush1.msra.mxu0 0.0
  %788 = vmatprep.subr.mxu0 0.0
  %789 = vmatpush1.msra.mxu0 0.0
  %790 = vmatprep.subr.mxu0 0.0
  %791 = vmatpush1.msra.mxu0 0.0
  %792 = vmatprep.subr.mxu0 0.0
  %793 = vmatpush1.msra.mxu0 0.0
  %794 = vmatprep.subr.mxu0 0.0
  %795 = vmatpush1.msra.mxu0 0.0
  %796 = vmatprep.subr.mxu0 0.0
  %797 = vmatpush1.msra.mxu0 0.0
  %798 = vmatprep.subr.mxu0 0.0
  %799 = vmatpush1.msra.mxu0 0.0
  %800 = vmatprep.subr.mxu0 0.0
  %801 = vmatpush1.msra.mxu0 0.0
  %802 = vmatprep.subr.mxu0 0.0
  %803 = vmatpush1.msra.mxu0 0.0
  %804 = vmatprep.subr.mxu0 0.0
  %805 = vmatpush1.msra.mxu0 0.0
  %806 = vmatprep.subr.mxu0 0.0
  %807 = vmatpush1.msra.mxu0 %v56
  %808 = vmatprep.subr.mxu0 0.0
  %809 = vmatpush1.msra.mxu0 %v55
  %810 = vmatprep.subr.mxu0 0.0
  %811 = vmatpush1.msra.mxu0 %v54
  %812 = vmatprep.subr.mxu0 0.0
  %813 = vmatpush1.msra.mxu0 %v53
  %814 = vmatprep.subr.mxu0 0.0
  %815 = vmatpush2.msra.mxu0 0.0
  %816 = vmatprep.subr.mxu0 0.0
  %817 = vmatpush2.msra.mxu0 0.0
  %818 = vmatprep.subr.mxu0 0.0
  %819 = vmatpush2.msra.mxu0 0.0
  %820 = vmatprep.subr.mxu0 0.0
  %821 = vmatpush2.msra.mxu0 0.0
  %822 = vmatprep.subr.mxu0 0.0
  %823 = vmatpush2.msra.mxu0 0.0
  %824 = vmatprep.subr.mxu0 0.0
  %825 = vmatpush2.msra.mxu0 0.0
  %826 = vmatprep.subr.mxu0 0.0
  %827 = vmatpush2.msra.mxu0 0.0
  %828 = vmatprep.subr.mxu0 0.0
  %829 = vmatpush2.msra.mxu0 0.0
  %830 = vmatprep.subr.mxu0 0.0
  %831 = vmatpush2.msra.mxu0 0.0
  %832 = vmatprep.subr.mxu0 0.0
  %833 = vmatpush2.msra.mxu0 0.0
  %834 = vmatprep.subr.mxu0 0.0
  %835 = vmatpush2.msra.mxu0 0.0
  %836 = vmatprep.subr.mxu0 0.0
  %837 = vmatpush2.msra.mxu0 0.0
  %838 = vmatprep.subr.mxu0 0.0
  %839 = vmatpush2.msra.mxu0 0.0
  %840 = vmatprep.subr.mxu0 0.0
  %841 = vmatpush2.msra.mxu0 0.0
  %842 = vmatprep.subr.mxu0 0.0
  %843 = vmatpush2.msra.mxu0 0.0
  %844 = vmatprep.subr.mxu0 0.0
  %845 = vmatpush2.msra.mxu0 0.0
  %846 = vmatprep.mubr.f32.mxu0 0.0
  %847 = vmatmul.mubr.f32.gmra.mxu0 %v780
  %v848 = vpop.f32.mrf.mxu0
  %v849 = vadd.f32 %v774, %v848
  %v850 = vpop.f32.mrf.mxu0
  %851 = vdwg.mxu0
  %v852 = vadd.f32 %v849, %v66
  %v853 = vmul.f32 %v852, 0.5
  %v854 = vsel %vm72, %v852, %v853
  %v855 = vtanh.pop %v854
  %v856 = vmul.f32 %v855, 0.5
  %v857 = vadd.f32 %v856, 0.5
  %v858 = vsel %vm72, %v855, %v857
  %v859 = vmul.f32 %v858, %v601
  %861 = vrot.lane.b32.xlu0 %v858, 64
  %v862 = vpop.permute.xlu0 %861
  %v864 = vmul.f32 %v858, %v862
  %866 = vrot.lane.b32.xlu0 %v864, 32
  %v867 = vpop.permute.xlu0 %866
  %v869 = vadd.f32 %v859, %v867
  %v870 = vtanh.pop %v869
  %872 = vrot.lane.b32.xlu0 %v870, 64
  %v873 = vpop.permute.xlu0 %872
  %v875 = vmul.f32 %v858, %v873
  %876 = vmatprep.subr.mxu0 0.0
  %877 = vmatpush1.msra.mxu0 0.0
  %878 = vmatprep.subr.mxu0 0.0
  %879 = vmatpush1.msra.mxu0 0.0
  %880 = vmatprep.subr.mxu0 0.0
  %881 = vmatpush1.msra.mxu0 0.0
  %882 = vmatprep.subr.mxu0 0.0
  %883 = vmatpush1.msra.mxu0 0.0
  %884 = vmatprep.subr.mxu0 0.0
  %885 = vmatpush1.msra.mxu0 0.0
  %886 = vmatprep.subr.mxu0 0.0
  %887 = vmatpush1.msra.mxu0 0.0
  %888 = vmatprep.subr.mxu0 0.0
  %889 = vmatpush1.msra.mxu0 0.0
  %890 = vmatprep.subr.mxu0 0.0
  %891 = vmatpush1.msra.mxu0 0.0
  %892 = vmatprep.subr.mxu0 0.0
  %893 = vmatpush1.msra.mxu0 0.0
  %894 = vmatprep.subr.mxu0 0.0
  %895 = vmatpush1.msra.mxu0 0.0
  %896 = vmatprep.subr.mxu0 0.0
  %897 = vmatpush1.msra.mxu0 0.0
  %898 = vmatprep.subr.mxu0 0.0
  %899 = vmatpush1.msra.mxu0 0.0
  %900 = vmatprep.subr.mxu0 0.0
  %901 = vmatpush1.msra.mxu0 %v52
  %902 = vmatprep.subr.mxu0 0.0
  %903 = vmatpush1.msra.mxu0 %v51
  %904 = vmatprep.subr.mxu0 0.0
  %905 = vmatpush1.msra.mxu0 %v50
  %906 = vmatprep.subr.mxu0 0.0
  %907 = vmatpush1.msra.mxu0 %v49
  %908 = vmatprep.subr.mxu0 0.0
  %909 = vmatpush2.msra.mxu0 0.0
  %910 = vmatprep.subr.mxu0 0.0
  %911 = vmatpush2.msra.mxu0 0.0
  %912 = vmatprep.subr.mxu0 0.0
  %913 = vmatpush2.msra.mxu0 0.0
  %914 = vmatprep.subr.mxu0 0.0
  %915 = vmatpush2.msra.mxu0 0.0
  %916 = vmatprep.subr.mxu0 0.0
  %917 = vmatpush2.msra.mxu0 0.0
  %918 = vmatprep.subr.mxu0 0.0
  %919 = vmatpush2.msra.mxu0 0.0
  %920 = vmatprep.subr.mxu0 0.0
  %921 = vmatpush2.msra.mxu0 0.0
  %922 = vmatprep.subr.mxu0 0.0
  %923 = vmatpush2.msra.mxu0 0.0
  %924 = vmatprep.subr.mxu0 0.0
  %925 = vmatpush2.msra.mxu0 0.0
  %926 = vmatprep.subr.mxu0 0.0
  %927 = vmatpush2.msra.mxu0 0.0
  %928 = vmatprep.subr.mxu0 0.0
  %929 = vmatpush2.msra.mxu0 0.0
  %930 = vmatprep.subr.mxu0 0.0
  %931 = vmatpush2.msra.mxu0 0.0
  %932 = vmatprep.subr.mxu0 0.0
  %933 = vmatpush2.msra.mxu0 0.0
  %934 = vmatprep.subr.mxu0 0.0
  %935 = vmatpush2.msra.mxu0 0.0
  %936 = vmatprep.subr.mxu0 0.0
  %937 = vmatpush2.msra.mxu0 0.0
  %938 = vmatprep.subr.mxu0 0.0
  %939 = vmatpush2.msra.mxu0 0.0
  %940 = vmatprep.mubr.f32.mxu0 0.0
  %941 = vmatmul.mubr.f32.gmra.mxu0 %v780
  %v942 = vpop.f32.mrf.mxu0
  %v943 = vadd.f32 0.0, %v942
  %v944 = vpop.f32.mrf.mxu0
  %945 = vdwg.mxu0
  %v946 = vadd.f32 %v44, %v943
  %v947 = vmul.f32 %v946, 0.5
  %v948 = vsel %vm72, %v946, %v947
  %v949 = vtanh.pop %v948
  %v950 = vmul.f32 %v949, 0.5
  %v951 = vadd.f32 %v950, 0.5
  %v952 = vsel %vm72, %v949, %v951
  %v953 = vmul.f32 %v952, %v695
  %955 = vrot.lane.b32.xlu0 %v952, 64
  %v956 = vpop.permute.xlu0 %955
  %v958 = vmul.f32 %v952, %v956
  %960 = vrot.lane.b32.xlu0 %v958, 32
  %v961 = vpop.permute.xlu0 %960
  %v963 = vadd.f32 %v953, %v961
  %v964 = vtanh.pop %v963
  %966 = vrot.lane.b32.xlu0 %v964, 64
  %v967 = vpop.permute.xlu0 %966
  %v969 = vmul.f32 %v952, %v967
  %971 = vrot.lane.b32.xlu0 %v875, 32
  %v972 = vpop.permute.xlu0 %971
  %v973 = vsel %vm73, %v972, 0
  %975 = vmatprep.subr.mxu0 0.0
  %976 = vmatpush1.msra.mxu0 0.0
  %977 = vmatprep.subr.mxu0 0.0
  %978 = vmatpush1.msra.mxu0 0.0
  %979 = vmatprep.subr.mxu0 0.0
  %980 = vmatpush1.msra.mxu0 0.0
  %981 = vmatprep.subr.mxu0 0.0
  %982 = vmatpush1.msra.mxu0 0.0
  %983 = vmatprep.subr.mxu0 0.0
  %984 = vmatpush1.msra.mxu0 0.0
  %985 = vmatprep.subr.mxu0 0.0
  %986 = vmatpush1.msra.mxu0 0.0
  %987 = vmatprep.subr.mxu0 0.0
  %988 = vmatpush1.msra.mxu0 0.0
  %989 = vmatprep.subr.mxu0 0.0
  %990 = vmatpush1.msra.mxu0 0.0
  %991 = vmatprep.subr.mxu0 0.0
  %992 = vmatpush1.msra.mxu0 0.0
  %993 = vmatprep.subr.mxu0 0.0
  %994 = vmatpush1.msra.mxu0 0.0
  %995 = vmatprep.subr.mxu0 0.0
  %996 = vmatpush1.msra.mxu0 0.0
  %997 = vmatprep.subr.mxu0 0.0
  %998 = vmatpush1.msra.mxu0 0.0
  %999 = vmatprep.subr.mxu0 0.0
  %1000 = vmatpush1.msra.mxu0 %v60
  %1001 = vmatprep.subr.mxu0 0.0
  %1002 = vmatpush1.msra.mxu0 %v59
  %1003 = vmatprep.subr.mxu0 0.0
  %1004 = vmatpush1.msra.mxu0 %v58
  %1005 = vmatprep.subr.mxu0 0.0
  %1006 = vmatpush1.msra.mxu0 %v57
  %1007 = vmatprep.subr.mxu0 0.0
  %1008 = vmatpush2.msra.mxu0 0.0
  %1009 = vmatprep.subr.mxu0 0.0
  %1010 = vmatpush2.msra.mxu0 0.0
  %1011 = vmatprep.subr.mxu0 0.0
  %1012 = vmatpush2.msra.mxu0 0.0
  %1013 = vmatprep.subr.mxu0 0.0
  %1014 = vmatpush2.msra.mxu0 0.0
  %1015 = vmatprep.subr.mxu0 0.0
  %1016 = vmatpush2.msra.mxu0 0.0
  %1017 = vmatprep.subr.mxu0 0.0
  %1018 = vmatpush2.msra.mxu0 0.0
  %1019 = vmatprep.subr.mxu0 0.0
  %1020 = vmatpush2.msra.mxu0 0.0
  %1021 = vmatprep.subr.mxu0 0.0
  %1022 = vmatpush2.msra.mxu0 0.0
  %1023 = vmatprep.subr.mxu0 0.0
  %1024 = vmatpush2.msra.mxu0 0.0
  %1025 = vmatprep.subr.mxu0 0.0
  %1026 = vmatpush2.msra.mxu0 0.0
  %1027 = vmatprep.subr.mxu0 0.0
  %1028 = vmatpush2.msra.mxu0 0.0
  %1029 = vmatprep.subr.mxu0 0.0
  %1030 = vmatpush2.msra.mxu0 0.0
  %1031 = vmatprep.subr.mxu0 0.0
  %1032 = vmatpush2.msra.mxu0 0.0
  %1033 = vmatprep.subr.mxu0 0.0
  %1034 = vmatpush2.msra.mxu0 0.0
  %1035 = vmatprep.subr.mxu0 0.0
  %1036 = vmatpush2.msra.mxu0 0.0
  %1037 = vmatprep.subr.mxu0 0.0
  %1038 = vmatpush2.msra.mxu0 0.0
  %1039 = vmatprep.mubr.f32.mxu0 0.0
  %1040 = vmatmul.mubr.f32.gmra.mxu0 %v973
  %v1041 = vpop.f32.mrf.mxu0
  %v1042 = vadd.f32 0.0, %v1041
  %v1043 = vpop.f32.mrf.mxu0
  %1044 = vdwg.mxu0
  %1046 = vrot.lane.b32.xlu0 %v969, 32
  %v1047 = vpop.permute.xlu0 %1046
  %v1048 = vsel %vm73, %v1047, 0
  %1050 = vmatprep.subr.mxu0 0.0
  %1051 = vmatpush1.msra.mxu0 0.0
  %1052 = vmatprep.subr.mxu0 0.0
  %1053 = vmatpush1.msra.mxu0 0.0
  %1054 = vmatprep.subr.mxu0 0.0
  %1055 = vmatpush1.msra.mxu0 0.0
  %1056 = vmatprep.subr.mxu0 0.0
  %1057 = vmatpush1.msra.mxu0 0.0
  %1058 = vmatprep.subr.mxu0 0.0
  %1059 = vmatpush1.msra.mxu0 0.0
  %1060 = vmatprep.subr.mxu0 0.0
  %1061 = vmatpush1.msra.mxu0 0.0
  %1062 = vmatprep.subr.mxu0 0.0
  %1063 = vmatpush1.msra.mxu0 0.0
  %1064 = vmatprep.subr.mxu0 0.0
  %1065 = vmatpush1.msra.mxu0 0.0
  %1066 = vmatprep.subr.mxu0 0.0
  %1067 = vmatpush1.msra.mxu0 0.0
  %1068 = vmatprep.subr.mxu0 0.0
  %1069 = vmatpush1.msra.mxu0 0.0
  %1070 = vmatprep.subr.mxu0 0.0
  %1071 = vmatpush1.msra.mxu0 0.0
  %1072 = vmatprep.subr.mxu0 0.0
  %1073 = vmatpush1.msra.mxu0 0.0
  %1074 = vmatprep.subr.mxu0 0.0
  %1075 = vmatpush1.msra.mxu0 %v56
  %1076 = vmatprep.subr.mxu0 0.0
  %1077 = vmatpush1.msra.mxu0 %v55
  %1078 = vmatprep.subr.mxu0 0.0
  %1079 = vmatpush1.msra.mxu0 %v54
  %1080 = vmatprep.subr.mxu0 0.0
  %1081 = vmatpush1.msra.mxu0 %v53
  %1082 = vmatprep.subr.mxu0 0.0
  %1083 = vmatpush2.msra.mxu0 0.0
  %1084 = vmatprep.subr.mxu0 0.0
  %1085 = vmatpush2.msra.mxu0 0.0
  %1086 = vmatprep.subr.mxu0 0.0
  %1087 = vmatpush2.msra.mxu0 0.0
  %1088 = vmatprep.subr.mxu0 0.0
  %1089 = vmatpush2.msra.mxu0 0.0
  %1090 = vmatprep.subr.mxu0 0.0
  %1091 = vmatpush2.msra.mxu0 0.0
  %1092 = vmatprep.subr.mxu0 0.0
  %1093 = vmatpush2.msra.mxu0 0.0
  %1094 = vmatprep.subr.mxu0 0.0
  %1095 = vmatpush2.msra.mxu0 0.0
  %1096 = vmatprep.subr.mxu0 0.0
  %1097 = vmatpush2.msra.mxu0 0.0
  %1098 = vmatprep.subr.mxu0 0.0
  %1099 = vmatpush2.msra.mxu0 0.0
  %1100 = vmatprep.subr.mxu0 0.0
  %1101 = vmatpush2.msra.mxu0 0.0
  %1102 = vmatprep.subr.mxu0 0.0
  %1103 = vmatpush2.msra.mxu0 0.0
  %1104 = vmatprep.subr.mxu0 0.0
  %1105 = vmatpush2.msra.mxu0 0.0
  %1106 = vmatprep.subr.mxu0 0.0
  %1107 = vmatpush2.msra.mxu0 0.0
  %1108 = vmatprep.subr.mxu0 0.0
  %1109 = vmatpush2.msra.mxu0 0.0
  %1110 = vmatprep.subr.mxu0 0.0
  %1111 = vmatpush2.msra.mxu0 0.0
  %1112 = vmatprep.subr.mxu0 0.0
  %1113 = vmatpush2.msra.mxu0 0.0
  %1114 = vmatprep.mubr.f32.mxu0 0.0
  %1115 = vmatmul.mubr.f32.gmra.mxu0 %v1048
  %v1116 = vpop.f32.mrf.mxu0
  %v1117 = vadd.f32 %v1042, %v1116
  %v1118 = vpop.f32.mrf.mxu0
  %1119 = vdwg.mxu0
  %v1120 = vadd.f32 %v1117, %v66
  %v1121 = vmul.f32 %v1120, 0.5
  %v1122 = vsel %vm72, %v1120, %v1121
  %v1123 = vtanh.pop %v1122
  %v1124 = vmul.f32 %v1123, 0.5
  %v1125 = vadd.f32 %v1124, 0.5
  %v1126 = vsel %vm72, %v1123, %v1125
  %v1127 = vmul.f32 %v1126, %v869
  %1129 = vrot.lane.b32.xlu0 %v1126, 64
  %v1130 = vpop.permute.xlu0 %1129
  %v1132 = vmul.f32 %v1126, %v1130
  %1134 = vrot.lane.b32.xlu0 %v1132, 32
  %v1135 = vpop.permute.xlu0 %1134
  %v1137 = vadd.f32 %v1127, %v1135
  %v1138 = vtanh.pop %v1137
  %1140 = vrot.lane.b32.xlu0 %v1138, 64
  %v1141 = vpop.permute.xlu0 %1140
  %v1143 = vmul.f32 %v1126, %v1141
  %1144 = vmatprep.subr.mxu0 0.0
  %1145 = vmatpush1.msra.mxu0 0.0
  %1146 = vmatprep.subr.mxu0 0.0
  %1147 = vmatpush1.msra.mxu0 0.0
  %1148 = vmatprep.subr.mxu0 0.0
  %1149 = vmatpush1.msra.mxu0 0.0
  %1150 = vmatprep.subr.mxu0 0.0
  %1151 = vmatpush1.msra.mxu0 0.0
  %1152 = vmatprep.subr.mxu0 0.0
  %1153 = vmatpush1.msra.mxu0 0.0
  %1154 = vmatprep.subr.mxu0 0.0
  %1155 = vmatpush1.msra.mxu0 0.0
  %1156 = vmatprep.subr.mxu0 0.0
  %1157 = vmatpush1.msra.mxu0 0.0
  %1158 = vmatprep.subr.mxu0 0.0
  %1159 = vmatpush1.msra.mxu0 0.0
  %1160 = vmatprep.subr.mxu0 0.0
  %1161 = vmatpush1.msra.mxu0 0.0
  %1162 = vmatprep.subr.mxu0 0.0
  %1163 = vmatpush1.msra.mxu0 0.0
  %1164 = vmatprep.subr.mxu0 0.0
  %1165 = vmatpush1.msra.mxu0 0.0
  %1166 = vmatprep.subr.mxu0 0.0
  %1167 = vmatpush1.msra.mxu0 0.0
  %1168 = vmatprep.subr.mxu0 0.0
  %1169 = vmatpush1.msra.mxu0 %v52
  %1170 = vmatprep.subr.mxu0 0.0
  %1171 = vmatpush1.msra.mxu0 %v51
  %1172 = vmatprep.subr.mxu0 0.0
  %1173 = vmatpush1.msra.mxu0 %v50
  %1174 = vmatprep.subr.mxu0 0.0
  %1175 = vmatpush1.msra.mxu0 %v49
  %1176 = vmatprep.subr.mxu0 0.0
  %1177 = vmatpush2.msra.mxu0 0.0
  %1178 = vmatprep.subr.mxu0 0.0
  %1179 = vmatpush2.msra.mxu0 0.0
  %1180 = vmatprep.subr.mxu0 0.0
  %1181 = vmatpush2.msra.mxu0 0.0
  %1182 = vmatprep.subr.mxu0 0.0
  %1183 = vmatpush2.msra.mxu0 0.0
  %1184 = vmatprep.subr.mxu0 0.0
  %1185 = vmatpush2.msra.mxu0 0.0
  %1186 = vmatprep.subr.mxu0 0.0
  %1187 = vmatpush2.msra.mxu0 0.0
  %1188 = vmatprep.subr.mxu0 0.0
  %1189 = vmatpush2.msra.mxu0 0.0
  %1190 = vmatprep.subr.mxu0 0.0
  %1191 = vmatpush2.msra.mxu0 0.0
  %1192 = vmatprep.subr.mxu0 0.0
  %1193 = vmatpush2.msra.mxu0 0.0
  %1194 = vmatprep.subr.mxu0 0.0
  %1195 = vmatpush2.msra.mxu0 0.0
  %1196 = vmatprep.subr.mxu0 0.0
  %1197 = vmatpush2.msra.mxu0 0.0
  %1198 = vmatprep.subr.mxu0 0.0
  %1199 = vmatpush2.msra.mxu0 0.0
  %1200 = vmatprep.subr.mxu0 0.0
  %1201 = vmatpush2.msra.mxu0 0.0
  %1202 = vmatprep.subr.mxu0 0.0
  %1203 = vmatpush2.msra.mxu0 0.0
  %1204 = vmatprep.subr.mxu0 0.0
  %1205 = vmatpush2.msra.mxu0 0.0
  %1206 = vmatprep.subr.mxu0 0.0
  %1207 = vmatpush2.msra.mxu0 0.0
  %1208 = vmatprep.mubr.f32.mxu0 0.0
  %1209 = vmatmul.mubr.f32.gmra.mxu0 %v1048
  %v1210 = vpop.f32.mrf.mxu0
  %v1211 = vadd.f32 0.0, %v1210
  %v1212 = vpop.f32.mrf.mxu0
  %1213 = vdwg.mxu0
  %v1214 = vadd.f32 %v45, %v1211
  %v1215 = vmul.f32 %v1214, 0.5
  %v1216 = vsel %vm72, %v1214, %v1215
  %v1217 = vtanh.pop %v1216
  %v1218 = vmul.f32 %v1217, 0.5
  %v1219 = vadd.f32 %v1218, 0.5
  %v1220 = vsel %vm72, %v1217, %v1219
  %v1221 = vmul.f32 %v1220, %v963
  %1223 = vrot.lane.b32.xlu0 %v1220, 64
  %v1224 = vpop.permute.xlu0 %1223
  %v1226 = vmul.f32 %v1220, %v1224
  %1228 = vrot.lane.b32.xlu0 %v1226, 32
  %v1229 = vpop.permute.xlu0 %1228
  %v1231 = vadd.f32 %v1221, %v1229
  %v1232 = vtanh.pop %v1231
  %1234 = vrot.lane.b32.xlu0 %v1232, 64
  %v1235 = vpop.permute.xlu0 %1234
  %v1237 = vmul.f32 %v1220, %v1235
  %1239 = vrot.lane.b32.xlu0 %v1143, 32
  %v1240 = vpop.permute.xlu0 %1239
  %v1241 = vsel %vm73, %v1240, 0
  %1243 = vmatprep.subr.mxu0 0.0
  %1244 = vmatpush1.msra.mxu0 0.0
  %1245 = vmatprep.subr.mxu0 0.0
  %1246 = vmatpush1.msra.mxu0 0.0
  %1247 = vmatprep.subr.mxu0 0.0
  %1248 = vmatpush1.msra.mxu0 0.0
  %1249 = vmatprep.subr.mxu0 0.0
  %1250 = vmatpush1.msra.mxu0 0.0
  %1251 = vmatprep.subr.mxu0 0.0
  %1252 = vmatpush1.msra.mxu0 0.0
  %1253 = vmatprep.subr.mxu0 0.0
  %1254 = vmatpush1.msra.mxu0 0.0
  %1255 = vmatprep.subr.mxu0 0.0
  %1256 = vmatpush1.msra.mxu0 0.0
  %1257 = vmatprep.subr.mxu0 0.0
  %1258 = vmatpush1.msra.mxu0 0.0
  %1259 = vmatprep.subr.mxu0 0.0
  %1260 = vmatpush1.msra.mxu0 0.0
  %1261 = vmatprep.subr.mxu0 0.0
  %1262 = vmatpush1.msra.mxu0 0.0
  %1263 = vmatprep.subr.mxu0 0.0
  %1264 = vmatpush1.msra.mxu0 0.0
  %1265 = vmatprep.subr.mxu0 0.0
  %1266 = vmatpush1.msra.mxu0 0.0
  %1267 = vmatprep.subr.mxu0 0.0
  %1268 = vmatpush1.msra.mxu0 %v60
  %1269 = vmatprep.subr.mxu0 0.0
  %1270 = vmatpush1.msra.mxu0 %v59
  %1271 = vmatprep.subr.mxu0 0.0
  %1272 = vmatpush1.msra.mxu0 %v58
  %1273 = vmatprep.subr.mxu0 0.0
  %1274 = vmatpush1.msra.mxu0 %v57
  %1275 = vmatprep.subr.mxu0 0.0
  %1276 = vmatpush2.msra.mxu0 0.0
  %1277 = vmatprep.subr.mxu0 0.0
  %1278 = vmatpush2.msra.mxu0 0.0
  %1279 = vmatprep.subr.mxu0 0.0
  %1280 = vmatpush2.msra.mxu0 0.0
  %1281 = vmatprep.subr.mxu0 0.0
  %1282 = vmatpush2.msra.mxu0 0.0
  %1283 = vmatprep.subr.mxu0 0.0
  %1284 = vmatpush2.msra.mxu0 0.0
  %1285 = vmatprep.subr.mxu0 0.0
  %1286 = vmatpush2.msra.mxu0 0.0
  %1287 = vmatprep.subr.mxu0 0.0
  %1288 = vmatpush2.msra.mxu0 0.0
  %1289 = vmatprep.subr.mxu0 0.0
  %1290 = vmatpush2.msra.mxu0 0.0
  %1291 = vmatprep.subr.mxu0 0.0
  %1292 = vmatpush2.msra.mxu0 0.0
  %1293 = vmatprep.subr.mxu0 0.0
  %1294 = vmatpush2.msra.mxu0 0.0
  %1295 = vmatprep.subr.mxu0 0.0
  %1296 = vmatpush2.msra.mxu0 0.0
  %1297 = vmatprep.subr.mxu0 0.0
  %1298 = vmatpush2.msra.mxu0 0.0
  %1299 = vmatprep.subr.mxu0 0.0
  %1300 = vmatpush2.msra.mxu0 0.0
  %1301 = vmatprep.subr.mxu0 0.0
  %1302 = vmatpush2.msra.mxu0 0.0
  %1303 = vmatprep.subr.mxu0 0.0
  %1304 = vmatpush2.msra.mxu0 0.0
  %1305 = vmatprep.subr.mxu0 0.0
  %1306 = vmatpush2.msra.mxu0 0.0
  %1307 = vmatprep.mubr.f32.mxu0 0.0
  %1308 = vmatmul.mubr.f32.gmra.mxu0 %v1241
  %v1309 = vpop.f32.mrf.mxu0
  %v1310 = vadd.f32 0.0, %v1309
  %v1311 = vpop.f32.mrf.mxu0
  %1312 = vdwg.mxu0
  %1314 = vrot.lane.b32.xlu0 %v1237, 32
  %v1315 = vpop.permute.xlu0 %1314
  %v1316 = vsel %vm73, %v1315, 0
  %1318 = vmatprep.subr.mxu0 0.0
  %1319 = vmatpush1.msra.mxu0 0.0
  %1320 = vmatprep.subr.mxu0 0.0
  %1321 = vmatpush1.msra.mxu0 0.0
  %1322 = vmatprep.subr.mxu0 0.0
  %1323 = vmatpush1.msra.mxu0 0.0
  %1324 = vmatprep.subr.mxu0 0.0
  %1325 = vmatpush1.msra.mxu0 0.0
  %1326 = vmatprep.subr.mxu0 0.0
  %1327 = vmatpush1.msra.mxu0 0.0
  %1328 = vmatprep.subr.mxu0 0.0
  %1329 = vmatpush1.msra.mxu0 0.0
  %1330 = vmatprep.subr.mxu0 0.0
  %1331 = vmatpush1.msra.mxu0 0.0
  %1332 = vmatprep.subr.mxu0 0.0
  %1333 = vmatpush1.msra.mxu0 0.0
  %1334 = vmatprep.subr.mxu0 0.0
  %1335 = vmatpush1.msra.mxu0 0.0
  %1336 = vmatprep.subr.mxu0 0.0
  %1337 = vmatpush1.msra.mxu0 0.0
  %1338 = vmatprep.subr.mxu0 0.0
  %1339 = vmatpush1.msra.mxu0 0.0
  %1340 = vmatprep.subr.mxu0 0.0
  %1341 = vmatpush1.msra.mxu0 0.0
  %1342 = vmatprep.subr.mxu0 0.0
  %1343 = vmatpush1.msra.mxu0 %v56
  %1344 = vmatprep.subr.mxu0 0.0
  %1345 = vmatpush1.msra.mxu0 %v55
  %1346 = vmatprep.subr.mxu0 0.0
  %1347 = vmatpush1.msra.mxu0 %v54
  %1348 = vmatprep.subr.mxu0 0.0
  %1349 = vmatpush1.msra.mxu0 %v53
  %1350 = vmatprep.subr.mxu0 0.0
  %1351 = vmatpush2.msra.mxu0 0.0
  %1352 = vmatprep.subr.mxu0 0.0
  %1353 = vmatpush2.msra.mxu0 0.0
  %1354 = vmatprep.subr.mxu0 0.0
  %1355 = vmatpush2.msra.mxu0 0.0
  %1356 = vmatprep.subr.mxu0 0.0
  %1357 = vmatpush2.msra.mxu0 0.0
  %1358 = vmatprep.subr.mxu0 0.0
  %1359 = vmatpush2.msra.mxu0 0.0
  %1360 = vmatprep.subr.mxu0 0.0
  %1361 = vmatpush2.msra.mxu0 0.0
  %1362 = vmatprep.subr.mxu0 0.0
  %1363 = vmatpush2.msra.mxu0 0.0
  %1364 = vmatprep.subr.mxu0 0.0
  %1365 = vmatpush2.msra.mxu0 0.0
  %1366 = vmatprep.subr.mxu0 0.0
  %1367 = vmatpush2.msra.mxu0 0.0
  %1368 = vmatprep.subr.mxu0 0.0
  %1369 = vmatpush2.msra.mxu0 0.0
  %1370 = vmatprep.subr.mxu0 0.0
  %1371 = vmatpush2.msra.mxu0 0.0
  %1372 = vmatprep.subr.mxu0 0.0
  %1373 = vmatpush2.msra.mxu0 0.0
  %1374 = vmatprep.subr.mxu0 0.0
  %1375 = vmatpush2.msra.mxu0 0.0
  %1376 = vmatprep.subr.mxu0 0.0
  %1377 = vmatpush2.msra.mxu0 0.0
  %1378 = vmatprep.subr.mxu0 0.0
  %1379 = vmatpush2.msra.mxu0 0.0
  %1380 = vmatprep.subr.mxu0 0.0
  %1381 = vmatpush2.msra.mxu0 0.0
  %1382 = vmatprep.mubr.f32.mxu0 0.0
  %1383 = vmatmul.mubr.f32.gmra.mxu0 %v1316
  %v1384 = vpop.f32.mrf.mxu0
  %v1385 = vadd.f32 %v1310, %v1384
  %v1386 = vpop.f32.mrf.mxu0
  %1387 = vdwg.mxu0
  %v1388 = vadd.f32 %v1385, %v66
  %v1389 = vmul.f32 %v1388, 0.5
  %v1390 = vsel %vm72, %v1388, %v1389
  %v1391 = vtanh.pop %v1390
  %v1392 = vmul.f32 %v1391, 0.5
  %v1393 = vadd.f32 %v1392, 0.5
  %v1394 = vsel %vm72, %v1391, %v1393
  %v1395 = vmul.f32 %v1394, %v1137
  %1397 = vrot.lane.b32.xlu0 %v1394, 64
  %v1398 = vpop.permute.xlu0 %1397
  %v1400 = vmul.f32 %v1394, %v1398
  %1402 = vrot.lane.b32.xlu0 %v1400, 32
  %v1403 = vpop.permute.xlu0 %1402
  %v1405 = vadd.f32 %v1395, %v1403
  %v1406 = vtanh.pop %v1405
  %1408 = vrot.lane.b32.xlu0 %v1406, 64
  %v1409 = vpop.permute.xlu0 %1408
  %v1411 = vmul.f32 %v1394, %v1409
  %1412 = vmatprep.subr.mxu0 0.0
  %1413 = vmatpush1.msra.mxu0 0.0
  %1414 = vmatprep.subr.mxu0 0.0
  %1415 = vmatpush1.msra.mxu0 0.0
  %1416 = vmatprep.subr.mxu0 0.0
  %1417 = vmatpush1.msra.mxu0 0.0
  %1418 = vmatprep.subr.mxu0 0.0
  %1419 = vmatpush1.msra.mxu0 0.0
  %1420 = vmatprep.subr.mxu0 0.0
  %1421 = vmatpush1.msra.mxu0 0.0
  %1422 = vmatprep.subr.mxu0 0.0
  %1423 = vmatpush1.msra.mxu0 0.0
  %1424 = vmatprep.subr.mxu0 0.0
  %1425 = vmatpush1.msra.mxu0 0.0
  %1426 = vmatprep.subr.mxu0 0.0
  %1427 = vmatpush1.msra.mxu0 0.0
  %1428 = vmatprep.subr.mxu0 0.0
  %1429 = vmatpush1.msra.mxu0 0.0
  %1430 = vmatprep.subr.mxu0 0.0
  %1431 = vmatpush1.msra.mxu0 0.0
  %1432 = vmatprep.subr.mxu0 0.0
  %1433 = vmatpush1.msra.mxu0 0.0
  %1434 = vmatprep.subr.mxu0 0.0
  %1435 = vmatpush1.msra.mxu0 0.0
  %1436 = vmatprep.subr.mxu0 0.0
  %1437 = vmatpush1.msra.mxu0 %v52
  %1438 = vmatprep.subr.mxu0 0.0
  %1439 = vmatpush1.msra.mxu0 %v51
  %1440 = vmatprep.subr.mxu0 0.0
  %1441 = vmatpush1.msra.mxu0 %v50
  %1442 = vmatprep.subr.mxu0 0.0
  %1443 = vmatpush1.msra.mxu0 %v49
  %1444 = vmatprep.subr.mxu0 0.0
  %1445 = vmatpush2.msra.mxu0 0.0
  %1446 = vmatprep.subr.mxu0 0.0
  %1447 = vmatpush2.msra.mxu0 0.0
  %1448 = vmatprep.subr.mxu0 0.0
  %1449 = vmatpush2.msra.mxu0 0.0
  %1450 = vmatprep.subr.mxu0 0.0
  %1451 = vmatpush2.msra.mxu0 0.0
  %1452 = vmatprep.subr.mxu0 0.0
  %1453 = vmatpush2.msra.mxu0 0.0
  %1454 = vmatprep.subr.mxu0 0.0
  %1455 = vmatpush2.msra.mxu0 0.0
  %1456 = vmatprep.subr.mxu0 0.0
  %1457 = vmatpush2.msra.mxu0 0.0
  %1458 = vmatprep.subr.mxu0 0.0
  %1459 = vmatpush2.msra.mxu0 0.0
  %1460 = vmatprep.subr.mxu0 0.0
  %1461 = vmatpush2.msra.mxu0 0.0
  %1462 = vmatprep.subr.mxu0 0.0
  %1463 = vmatpush2.msra.mxu0 0.0
  %1464 = vmatprep.subr.mxu0 0.0
  %1465 = vmatpush2.msra.mxu0 0.0
  %1466 = vmatprep.subr.mxu0 0.0
  %1467 = vmatpush2.msra.mxu0 0.0
  %1468 = vmatprep.subr.mxu0 0.0
  %1469 = vmatpush2.msra.mxu0 0.0
  %1470 = vmatprep.subr.mxu0 0.0
  %1471 = vmatpush2.msra.mxu0 0.0
  %1472 = vmatprep.subr.mxu0 0.0
  %1473 = vmatpush2.msra.mxu0 0.0
  %1474 = vmatprep.subr.mxu0 0.0
  %1475 = vmatpush2.msra.mxu0 0.0
  %1476 = vmatprep.mubr.f32.mxu0 0.0
  %1477 = vmatmul.mubr.f32.gmra.mxu0 %v1316
  %v1478 = vpop.f32.mrf.mxu0
  %v1479 = vadd.f32 0.0, %v1478
  %v1480 = vpop.f32.mrf.mxu0
  %1481 = vdwg.mxu0
  %v1482 = vadd.f32 %v46, %v1479
  %v1483 = vmul.f32 %v1482, 0.5
  %v1484 = vsel %vm72, %v1482, %v1483
  %v1485 = vtanh.pop %v1484
  %v1486 = vmul.f32 %v1485, 0.5
  %v1487 = vadd.f32 %v1486, 0.5
  %v1488 = vsel %vm72, %v1485, %v1487
  %v1489 = vmul.f32 %v1488, %v1231
  %1491 = vrot.lane.b32.xlu0 %v1488, 64
  %v1492 = vpop.permute.xlu0 %1491
  %v1494 = vmul.f32 %v1488, %v1492
  %1496 = vrot.lane.b32.xlu0 %v1494, 32
  %v1497 = vpop.permute.xlu0 %1496
  %v1499 = vadd.f32 %v1489, %v1497
  %v1500 = vtanh.pop %v1499
  %1502 = vrot.lane.b32.xlu0 %v1500, 64
  %v1503 = vpop.permute.xlu0 %1502
  %v1505 = vmul.f32 %v1488, %v1503
  %1507 = vrot.lane.b32.xlu0 %v1411, 32
  %v1508 = vpop.permute.xlu0 %1507
  %v1509 = vsel %vm73, %v1508, 0
  %1511 = vmatprep.subr.mxu0 0.0
  %1512 = vmatpush1.msra.mxu0 0.0
  %1513 = vmatprep.subr.mxu0 0.0
  %1514 = vmatpush1.msra.mxu0 0.0
  %1515 = vmatprep.subr.mxu0 0.0
  %1516 = vmatpush1.msra.mxu0 0.0
  %1517 = vmatprep.subr.mxu0 0.0
  %1518 = vmatpush1.msra.mxu0 0.0
  %1519 = vmatprep.subr.mxu0 0.0
  %1520 = vmatpush1.msra.mxu0 0.0
  %1521 = vmatprep.subr.mxu0 0.0
  %1522 = vmatpush1.msra.mxu0 0.0
  %1523 = vmatprep.subr.mxu0 0.0
  %1524 = vmatpush1.msra.mxu0 0.0
  %1525 = vmatprep.subr.mxu0 0.0
  %1526 = vmatpush1.msra.mxu0 0.0
  %1527 = vmatprep.subr.mxu0 0.0
  %1528 = vmatpush1.msra.mxu0 0.0
  %1529 = vmatprep.subr.mxu0 0.0
  %1530 = vmatpush1.msra.mxu0 0.0
  %1531 = vmatprep.subr.mxu0 0.0
  %1532 = vmatpush1.msra.mxu0 0.0
  %1533 = vmatprep.subr.mxu0 0.0
  %1534 = vmatpush1.msra.mxu0 0.0
  %1535 = vmatprep.subr.mxu0 0.0
  %1536 = vmatpush1.msra.mxu0 %v60
  %1537 = vmatprep.subr.mxu0 0.0
  %1538 = vmatpush1.msra.mxu0 %v59
  %1539 = vmatprep.subr.mxu0 0.0
  %1540 = vmatpush1.msra.mxu0 %v58
  %1541 = vmatprep.subr.mxu0 0.0
  %1542 = vmatpush1.msra.mxu0 %v57
  %1543 = vmatprep.subr.mxu0 0.0
  %1544 = vmatpush2.msra.mxu0 0.0
  %1545 = vmatprep.subr.mxu0 0.0
  %1546 = vmatpush2.msra.mxu0 0.0
  %1547 = vmatprep.subr.mxu0 0.0
  %1548 = vmatpush2.msra.mxu0 0.0
  %1549 = vmatprep.subr.mxu0 0.0
  %1550 = vmatpush2.msra.mxu0 0.0
  %1551 = vmatprep.subr.mxu0 0.0
  %1552 = vmatpush2.msra.mxu0 0.0
  %1553 = vmatprep.subr.mxu0 0.0
  %1554 = vmatpush2.msra.mxu0 0.0
  %1555 = vmatprep.subr.mxu0 0.0
  %1556 = vmatpush2.msra.mxu0 0.0
  %1557 = vmatprep.subr.mxu0 0.0
  %1558 = vmatpush2.msra.mxu0 0.0
  %1559 = vmatprep.subr.mxu0 0.0
  %1560 = vmatpush2.msra.mxu0 0.0
  %1561 = vmatprep.subr.mxu0 0.0
  %1562 = vmatpush2.msra.mxu0 0.0
  %1563 = vmatprep.subr.mxu0 0.0
  %1564 = vmatpush2.msra.mxu0 0.0
  %1565 = vmatprep.subr.mxu0 0.0
  %1566 = vmatpush2.msra.mxu0 0.0
  %1567 = vmatprep.subr.mxu0 0.0
  %1568 = vmatpush2.msra.mxu0 0.0
  %1569 = vmatprep.subr.mxu0 0.0
  %1570 = vmatpush2.msra.mxu0 0.0
  %1571 = vmatprep.subr.mxu0 0.0
  %1572 = vmatpush2.msra.mxu0 0.0
  %1573 = vmatprep.subr.mxu0 0.0
  %1574 = vmatpush2.msra.mxu0 0.0
  %1575 = vmatprep.mubr.f32.mxu0 0.0
  %1576 = vmatmul.mubr.f32.gmra.mxu0 %v1509
  %v1577 = vpop.f32.mrf.mxu0
  %v1578 = vadd.f32 0.0, %v1577
  %v1579 = vpop.f32.mrf.mxu0
  %1580 = vdwg.mxu0
  %1582 = vrot.lane.b32.xlu0 %v1505, 32
  %v1583 = vpop.permute.xlu0 %1582
  %v1584 = vsel %vm73, %v1583, 0
  %1586 = vmatprep.subr.mxu0 0.0
  %1587 = vmatpush1.msra.mxu0 0.0
  %1588 = vmatprep.subr.mxu0 0.0
  %1589 = vmatpush1.msra.mxu0 0.0
  %1590 = vmatprep.subr.mxu0 0.0
  %1591 = vmatpush1.msra.mxu0 0.0
  %1592 = vmatprep.subr.mxu0 0.0
  %1593 = vmatpush1.msra.mxu0 0.0
  %1594 = vmatprep.subr.mxu0 0.0
  %1595 = vmatpush1.msra.mxu0 0.0
  %1596 = vmatprep.subr.mxu0 0.0
  %1597 = vmatpush1.msra.mxu0 0.0
  %1598 = vmatprep.subr.mxu0 0.0
  %1599 = vmatpush1.msra.mxu0 0.0
  %1600 = vmatprep.subr.mxu0 0.0
  %1601 = vmatpush1.msra.mxu0 0.0
  %1602 = vmatprep.subr.mxu0 0.0
  %1603 = vmatpush1.msra.mxu0 0.0
  %1604 = vmatprep.subr.mxu0 0.0
  %1605 = vmatpush1.msra.mxu0 0.0
  %1606 = vmatprep.subr.mxu0 0.0
  %1607 = vmatpush1.msra.mxu0 0.0
  %1608 = vmatprep.subr.mxu0 0.0
  %1609 = vmatpush1.msra.mxu0 0.0
  %1610 = vmatprep.subr.mxu0 0.0
  %1611 = vmatpush1.msra.mxu0 %v56
  %1612 = vmatprep.subr.mxu0 0.0
  %1613 = vmatpush1.msra.mxu0 %v55
  %1614 = vmatprep.subr.mxu0 0.0
  %1615 = vmatpush1.msra.mxu0 %v54
  %1616 = vmatprep.subr.mxu0 0.0
  %1617 = vmatpush1.msra.mxu0 %v53
  %1618 = vmatprep.subr.mxu0 0.0
  %1619 = vmatpush2.msra.mxu0 0.0
  %1620 = vmatprep.subr.mxu0 0.0
  %1621 = vmatpush2.msra.mxu0 0.0
  %1622 = vmatprep.subr.mxu0 0.0
  %1623 = vmatpush2.msra.mxu0 0.0
  %1624 = vmatprep.subr.mxu0 0.0
  %1625 = vmatpush2.msra.mxu0 0.0
  %1626 = vmatprep.subr.mxu0 0.0
  %1627 = vmatpush2.msra.mxu0 0.0
  %1628 = vmatprep.subr.mxu0 0.0
  %1629 = vmatpush2.msra.mxu0 0.0
  %1630 = vmatprep.subr.mxu0 0.0
  %1631 = vmatpush2.msra.mxu0 0.0
  %1632 = vmatprep.subr.mxu0 0.0
  %1633 = vmatpush2.msra.mxu0 0.0
  %1634 = vmatprep.subr.mxu0 0.0
  %1635 = vmatpush2.msra.mxu0 0.0
  %1636 = vmatprep.subr.mxu0 0.0
  %1637 = vmatpush2.msra.mxu0 0.0
  %1638 = vmatprep.subr.mxu0 0.0
  %1639 = vmatpush2.msra.mxu0 0.0
  %1640 = vmatprep.subr.mxu0 0.0
  %1641 = vmatpush2.msra.mxu0 0.0
  %1642 = vmatprep.subr.mxu0 0.0
  %1643 = vmatpush2.msra.mxu0 0.0
  %1644 = vmatprep.subr.mxu0 0.0
  %1645 = vmatpush2.msra.mxu0 0.0
  %1646 = vmatprep.subr.mxu0 0.0
  %1647 = vmatpush2.msra.mxu0 0.0
  %1648 = vmatprep.subr.mxu0 0.0
  %1649 = vmatpush2.msra.mxu0 0.0
  %1650 = vmatprep.mubr.f32.mxu0 0.0
  %1651 = vmatmul.mubr.f32.gmra.mxu0 %v1584
  %v1652 = vpop.f32.mrf.mxu0
  %v1653 = vadd.f32 %v1578, %v1652
  %v1654 = vpop.f32.mrf.mxu0
  %1655 = vdwg.mxu0
  %v1656 = vadd.f32 %v1653, %v66
  %v1657 = vmul.f32 %v1656, 0.5
  %v1658 = vsel %vm72, %v1656, %v1657
  %v1659 = vtanh.pop %v1658
  %v1660 = vmul.f32 %v1659, 0.5
  %v1661 = vadd.f32 %v1660, 0.5
  %v1662 = vsel %vm72, %v1659, %v1661
  %v1663 = vmul.f32 %v1662, %v1405
  %1665 = vrot.lane.b32.xlu0 %v1662, 64
  %v1666 = vpop.permute.xlu0 %1665
  %v1668 = vmul.f32 %v1662, %v1666
  %1670 = vrot.lane.b32.xlu0 %v1668, 32
  %v1671 = vpop.permute.xlu0 %1670
  %v1673 = vadd.f32 %v1663, %v1671
  %v1674 = vtanh.pop %v1673
  %1676 = vrot.lane.b32.xlu0 %v1674, 64
  %v1677 = vpop.permute.xlu0 %1676
  %v1679 = vmul.f32 %v1662, %v1677
  %1680 = vmatprep.subr.mxu0 0.0
  %1681 = vmatpush1.msra.mxu0 0.0
  %1682 = vmatprep.subr.mxu0 0.0
  %1683 = vmatpush1.msra.mxu0 0.0
  %1684 = vmatprep.subr.mxu0 0.0
  %1685 = vmatpush1.msra.mxu0 0.0
  %1686 = vmatprep.subr.mxu0 0.0
  %1687 = vmatpush1.msra.mxu0 0.0
  %1688 = vmatprep.subr.mxu0 0.0
  %1689 = vmatpush1.msra.mxu0 0.0
  %1690 = vmatprep.subr.mxu0 0.0
  %1691 = vmatpush1.msra.mxu0 0.0
  %1692 = vmatprep.subr.mxu0 0.0
  %1693 = vmatpush1.msra.mxu0 0.0
  %1694 = vmatprep.subr.mxu0 0.0
  %1695 = vmatpush1.msra.mxu0 0.0
  %1696 = vmatprep.subr.mxu0 0.0
  %1697 = vmatpush1.msra.mxu0 0.0
  %1698 = vmatprep.subr.mxu0 0.0
  %1699 = vmatpush1.msra.mxu0 0.0
  %1700 = vmatprep.subr.mxu0 0.0
  %1701 = vmatpush1.msra.mxu0 0.0
  %1702 = vmatprep.subr.mxu0 0.0
  %1703 = vmatpush1.msra.mxu0 0.0
  %1704 = vmatprep.subr.mxu0 0.0
  %1705 = vmatpush1.msra.mxu0 %v52
  %1706 = vmatprep.subr.mxu0 0.0
  %1707 = vmatpush1.msra.mxu0 %v51
  %1708 = vmatprep.subr.mxu0 0.0
  %1709 = vmatpush1.msra.mxu0 %v50
  %1710 = vmatprep.subr.mxu0 0.0
  %1711 = vmatpush1.msra.mxu0 %v49
  %1712 = vmatprep.subr.mxu0 0.0
  %1713 = vmatpush2.msra.mxu0 0.0
  %1714 = vmatprep.subr.mxu0 0.0
  %1715 = vmatpush2.msra.mxu0 0.0
  %1716 = vmatprep.subr.mxu0 0.0
  %1717 = vmatpush2.msra.mxu0 0.0
  %1718 = vmatprep.subr.mxu0 0.0
  %1719 = vmatpush2.msra.mxu0 0.0
  %1720 = vmatprep.subr.mxu0 0.0
  %1721 = vmatpush2.msra.mxu0 0.0
  %1722 = vmatprep.subr.mxu0 0.0
  %1723 = vmatpush2.msra.mxu0 0.0
  %1724 = vmatprep.subr.mxu0 0.0
  %1725 = vmatpush2.msra.mxu0 0.0
  %1726 = vmatprep.subr.mxu0 0.0
  %1727 = vmatpush2.msra.mxu0 0.0
  %1728 = vmatprep.subr.mxu0 0.0
  %1729 = vmatpush2.msra.mxu0 0.0
  %1730 = vmatprep.subr.mxu0 0.0
  %1731 = vmatpush2.msra.mxu0 0.0
  %1732 = vmatprep.subr.mxu0 0.0
  %1733 = vmatpush2.msra.mxu0 0.0
  %1734 = vmatprep.subr.mxu0 0.0
  %1735 = vmatpush2.msra.mxu0 0.0
  %1736 = vmatprep.subr.mxu0 0.0
  %1737 = vmatpush2.msra.mxu0 0.0
  %1738 = vmatprep.subr.mxu0 0.0
  %1739 = vmatpush2.msra.mxu0 0.0
  %1740 = vmatprep.subr.mxu0 0.0
  %1741 = vmatpush2.msra.mxu0 0.0
  %1742 = vmatprep.subr.mxu0 0.0
  %1743 = vmatpush2.msra.mxu0 0.0
  %1744 = vmatprep.mubr.f32.mxu0 0.0
  %1745 = vmatmul.mubr.f32.gmra.mxu0 %v1584
  %v1746 = vpop.f32.mrf.mxu0
  %v1747 = vadd.f32 0.0, %v1746
  %v1748 = vpop.f32.mrf.mxu0
  %1749 = vdwg.mxu0
  %v1750 = vadd.f32 %v47, %v1747
  %v1751 = vmul.f32 %v1750, 0.5
  %v1752 = vsel %vm72, %v1750, %v1751
  %v1753 = vtanh.pop %v1752
  %v1754 = vmul.f32 %v1753, 0.5
  %v1755 = vadd.f32 %v1754, 0.5
  %v1756 = vsel %vm72, %v1753, %v1755
  %v1757 = vmul.f32 %v1756, %v1499
  %1759 = vrot.lane.b32.xlu0 %v1756, 64
  %v1760 = vpop.permute.xlu0 %1759
  %v1762 = vmul.f32 %v1756, %v1760
  %1764 = vrot.lane.b32.xlu0 %v1762, 32
  %v1765 = vpop.permute.xlu0 %1764
  %v1767 = vadd.f32 %v1757, %v1765
  %v1768 = vtanh.pop %v1767
  %1770 = vrot.lane.b32.xlu0 %v1768, 64
  %v1771 = vpop.permute.xlu0 %1770
  %v1773 = vmul.f32 %v1756, %v1771
  %1775 = vrot.lane.b32.xlu0 %v1679, 32
  %v1776 = vpop.permute.xlu0 %1775
  %v1777 = vsel %vm73, %v1776, 0
  %1779 = vmatprep.subr.mxu0 0.0
  %1780 = vmatpush1.msra.mxu0 0.0
  %1781 = vmatprep.subr.mxu0 0.0
  %1782 = vmatpush1.msra.mxu0 0.0
  %1783 = vmatprep.subr.mxu0 0.0
  %1784 = vmatpush1.msra.mxu0 0.0
  %1785 = vmatprep.subr.mxu0 0.0
  %1786 = vmatpush1.msra.mxu0 0.0
  %1787 = vmatprep.subr.mxu0 0.0
  %1788 = vmatpush1.msra.mxu0 0.0
  %1789 = vmatprep.subr.mxu0 0.0
  %1790 = vmatpush1.msra.mxu0 0.0
  %1791 = vmatprep.subr.mxu0 0.0
  %1792 = vmatpush1.msra.mxu0 0.0
  %1793 = vmatprep.subr.mxu0 0.0
  %1794 = vmatpush1.msra.mxu0 0.0
  %1795 = vmatprep.subr.mxu0 0.0
  %1796 = vmatpush1.msra.mxu0 0.0
  %1797 = vmatprep.subr.mxu0 0.0
  %1798 = vmatpush1.msra.mxu0 0.0
  %1799 = vmatprep.subr.mxu0 0.0
  %1800 = vmatpush1.msra.mxu0 0.0
  %1801 = vmatprep.subr.mxu0 0.0
  %1802 = vmatpush1.msra.mxu0 0.0
  %1803 = vmatprep.subr.mxu0 0.0
  %1804 = vmatpush1.msra.mxu0 %v60
  %1805 = vmatprep.subr.mxu0 0.0
  %1806 = vmatpush1.msra.mxu0 %v59
  %1807 = vmatprep.subr.mxu0 0.0
  %1808 = vmatpush1.msra.mxu0 %v58
  %1809 = vmatprep.subr.mxu0 0.0
  %1810 = vmatpush1.msra.mxu0 %v57
  %1811 = vmatprep.subr.mxu0 0.0
  %1812 = vmatpush2.msra.mxu0 0.0
  %1813 = vmatprep.subr.mxu0 0.0
  %1814 = vmatpush2.msra.mxu0 0.0
  %1815 = vmatprep.subr.mxu0 0.0
  %1816 = vmatpush2.msra.mxu0 0.0
  %1817 = vmatprep.subr.mxu0 0.0
  %1818 = vmatpush2.msra.mxu0 0.0
  %1819 = vmatprep.subr.mxu0 0.0
  %1820 = vmatpush2.msra.mxu0 0.0
  %1821 = vmatprep.subr.mxu0 0.0
  %1822 = vmatpush2.msra.mxu0 0.0
  %1823 = vmatprep.subr.mxu0 0.0
  %1824 = vmatpush2.msra.mxu0 0.0
  %1825 = vmatprep.subr.mxu0 0.0
  %1826 = vmatpush2.msra.mxu0 0.0
  %1827 = vmatprep.subr.mxu0 0.0
  %1828 = vmatpush2.msra.mxu0 0.0
  %1829 = vmatprep.subr.mxu0 0.0
  %1830 = vmatpush2.msra.mxu0 0.0
  %1831 = vmatprep.subr.mxu0 0.0
  %1832 = vmatpush2.msra.mxu0 0.0
  %1833 = vmatprep.subr.mxu0 0.0
  %1834 = vmatpush2.msra.mxu0 0.0
  %1835 = vmatprep.subr.mxu0 0.0
  %1836 = vmatpush2.msra.mxu0 0.0
  %1837 = vmatprep.subr.mxu0 0.0
  %1838 = vmatpush2.msra.mxu0 0.0
  %1839 = vmatprep.subr.mxu0 0.0
  %1840 = vmatpush2.msra.mxu0 0.0
  %1841 = vmatprep.subr.mxu0 0.0
  %1842 = vmatpush2.msra.mxu0 0.0
  %1843 = vmatprep.mubr.f32.mxu0 0.0
  %1844 = vmatmul.mubr.f32.gmra.mxu0 %v1777
  %v1845 = vpop.f32.mrf.mxu0
  %v1846 = vadd.f32 0.0, %v1845
  %v1847 = vpop.f32.mrf.mxu0
  %1848 = vdwg.mxu0
  %1850 = vrot.lane.b32.xlu0 %v1773, 32
  %v1851 = vpop.permute.xlu0 %1850
  %v1852 = vsel %vm73, %v1851, 0
  %1854 = vmatprep.subr.mxu0 0.0
  %1855 = vmatpush1.msra.mxu0 0.0
  %1856 = vmatprep.subr.mxu0 0.0
  %1857 = vmatpush1.msra.mxu0 0.0
  %1858 = vmatprep.subr.mxu0 0.0
  %1859 = vmatpush1.msra.mxu0 0.0
  %1860 = vmatprep.subr.mxu0 0.0
  %1861 = vmatpush1.msra.mxu0 0.0
  %1862 = vmatprep.subr.mxu0 0.0
  %1863 = vmatpush1.msra.mxu0 0.0
  %1864 = vmatprep.subr.mxu0 0.0
  %1865 = vmatpush1.msra.mxu0 0.0
  %1866 = vmatprep.subr.mxu0 0.0
  %1867 = vmatpush1.msra.mxu0 0.0
  %1868 = vmatprep.subr.mxu0 0.0
  %1869 = vmatpush1.msra.mxu0 0.0
  %1870 = vmatprep.subr.mxu0 0.0
  %1871 = vmatpush1.msra.mxu0 0.0
  %1872 = vmatprep.subr.mxu0 0.0
  %1873 = vmatpush1.msra.mxu0 0.0
  %1874 = vmatprep.subr.mxu0 0.0
  %1875 = vmatpush1.msra.mxu0 0.0
  %1876 = vmatprep.subr.mxu0 0.0
  %1877 = vmatpush1.msra.mxu0 0.0
  %1878 = vmatprep.subr.mxu0 0.0
  %1879 = vmatpush1.msra.mxu0 %v56
  %1880 = vmatprep.subr.mxu0 0.0
  %1881 = vmatpush1.msra.mxu0 %v55
  %1882 = vmatprep.subr.mxu0 0.0
  %1883 = vmatpush1.msra.mxu0 %v54
  %1884 = vmatprep.subr.mxu0 0.0
  %1885 = vmatpush1.msra.mxu0 %v53
  %1886 = vmatprep.subr.mxu0 0.0
  %1887 = vmatpush2.msra.mxu0 0.0
  %1888 = vmatprep.subr.mxu0 0.0
  %1889 = vmatpush2.msra.mxu0 0.0
  %1890 = vmatprep.subr.mxu0 0.0
  %1891 = vmatpush2.msra.mxu0 0.0
  %1892 = vmatprep.subr.mxu0 0.0
  %1893 = vmatpush2.msra.mxu0 0.0
  %1894 = vmatprep.subr.mxu0 0.0
  %1895 = vmatpush2.msra.mxu0 0.0
  %1896 = vmatprep.subr.mxu0 0.0
  %1897 = vmatpush2.msra.mxu0 0.0
  %1898 = vmatprep.subr.mxu0 0.0
  %1899 = vmatpush2.msra.mxu0 0.0
  %1900 = vmatprep.subr.mxu0 0.0
  %1901 = vmatpush2.msra.mxu0 0.0
  %1902 = vmatprep.subr.mxu0 0.0
  %1903 = vmatpush2.msra.mxu0 0.0
  %1904 = vmatprep.subr.mxu0 0.0
  %1905 = vmatpush2.msra.mxu0 0.0
  %1906 = vmatprep.subr.mxu0 0.0
  %1907 = vmatpush2.msra.mxu0 0.0
  %1908 = vmatprep.subr.mxu0 0.0
  %1909 = vmatpush2.msra.mxu0 0.0
  %1910 = vmatprep.subr.mxu0 0.0
  %1911 = vmatpush2.msra.mxu0 0.0
  %1912 = vmatprep.subr.mxu0 0.0
  %1913 = vmatpush2.msra.mxu0 0.0
  %1914 = vmatprep.subr.mxu0 0.0
  %1915 = vmatpush2.msra.mxu0 0.0
  %1916 = vmatprep.subr.mxu0 0.0
  %1917 = vmatpush2.msra.mxu0 0.0
  %1918 = vmatprep.mubr.f32.mxu0 0.0
  %1919 = vmatmul.mubr.f32.gmra.mxu0 %v1852
  %v1920 = vpop.f32.mrf.mxu0
  %v1921 = vadd.f32 %v1846, %v1920
  %v1922 = vpop.f32.mrf.mxu0
  %1923 = vdwg.mxu0
  %v1924 = vadd.f32 %v1921, %v66
  %v1925 = vmul.f32 %v1924, 0.5
  %v1926 = vsel %vm72, %v1924, %v1925
  %v1927 = vtanh.pop %v1926
  %v1928 = vmul.f32 %v1927, 0.5
  %v1929 = vadd.f32 %v1928, 0.5
  %v1930 = vsel %vm72, %v1927, %v1929
  %v1931 = vmul.f32 %v1930, %v1673
  %1933 = vrot.lane.b32.xlu0 %v1930, 64
  %v1934 = vpop.permute.xlu0 %1933
  %v1936 = vmul.f32 %v1930, %v1934
  %1938 = vrot.lane.b32.xlu0 %v1936, 32
  %v1939 = vpop.permute.xlu0 %1938
  %v1941 = vadd.f32 %v1931, %v1939
  %v1942 = vtanh.pop %v1941
  %1944 = vrot.lane.b32.xlu0 %v1942, 64
  %v1945 = vpop.permute.xlu0 %1944
  %v1947 = vmul.f32 %v1930, %v1945
  %1948 = vmatprep.subr.mxu0 0.0
  %1949 = vmatpush1.msra.mxu0 0.0
  %1950 = vmatprep.subr.mxu0 0.0
  %1951 = vmatpush1.msra.mxu0 0.0
  %1952 = vmatprep.subr.mxu0 0.0
  %1953 = vmatpush1.msra.mxu0 0.0
  %1954 = vmatprep.subr.mxu0 0.0
  %1955 = vmatpush1.msra.mxu0 0.0
  %1956 = vmatprep.subr.mxu0 0.0
  %1957 = vmatpush1.msra.mxu0 0.0
  %1958 = vmatprep.subr.mxu0 0.0
  %1959 = vmatpush1.msra.mxu0 0.0
  %1960 = vmatprep.subr.mxu0 0.0
  %1961 = vmatpush1.msra.mxu0 0.0
  %1962 = vmatprep.subr.mxu0 0.0
  %1963 = vmatpush1.msra.mxu0 0.0
  %1964 = vmatprep.subr.mxu0 0.0
  %1965 = vmatpush1.msra.mxu0 0.0
  %1966 = vmatprep.subr.mxu0 0.0
  %1967 = vmatpush1.msra.mxu0 0.0
  %1968 = vmatprep.subr.mxu0 0.0
  %1969 = vmatpush1.msra.mxu0 0.0
  %1970 = vmatprep.subr.mxu0 0.0
  %1971 = vmatpush1.msra.mxu0 0.0
  %1972 = vmatprep.subr.mxu0 0.0
  %1973 = vmatpush1.msra.mxu0 %v52
  %1974 = vmatprep.subr.mxu0 0.0
  %1975 = vmatpush1.msra.mxu0 %v51
  %1976 = vmatprep.subr.mxu0 0.0
  %1977 = vmatpush1.msra.mxu0 %v50
  %1978 = vmatprep.subr.mxu0 0.0
  %1979 = vmatpush1.msra.mxu0 %v49
  %1980 = vmatprep.subr.mxu0 0.0
  %1981 = vmatpush2.msra.mxu0 0.0
  %1982 = vmatprep.subr.mxu0 0.0
  %1983 = vmatpush2.msra.mxu0 0.0
  %1984 = vmatprep.subr.mxu0 0.0
  %1985 = vmatpush2.msra.mxu0 0.0
  %1986 = vmatprep.subr.mxu0 0.0
  %1987 = vmatpush2.msra.mxu0 0.0
  %1988 = vmatprep.subr.mxu0 0.0
  %1989 = vmatpush2.msra.mxu0 0.0
  %1990 = vmatprep.subr.mxu0 0.0
  %1991 = vmatpush2.msra.mxu0 0.0
  %1992 = vmatprep.subr.mxu0 0.0
  %1993 = vmatpush2.msra.mxu0 0.0
  %1994 = vmatprep.subr.mxu0 0.0
  %1995 = vmatpush2.msra.mxu0 0.0
  %1996 = vmatprep.subr.mxu0 0.0
  %1997 = vmatpush2.msra.mxu0 0.0
  %1998 = vmatprep.subr.mxu0 0.0
  %1999 = vmatpush2.msra.mxu0 0.0
  %2000 = vmatprep.subr.mxu0 0.0
  %2001 = vmatpush2.msra.mxu0 0.0
  %2002 = vmatprep.subr.mxu0 0.0
  %2003 = vmatpush2.msra.mxu0 0.0
  %2004 = vmatprep.subr.mxu0 0.0
  %2005 = vmatpush2.msra.mxu0 0.0
  %2006 = vmatprep.subr.mxu0 0.0
  %2007 = vmatpush2.msra.mxu0 0.0
  %2008 = vmatprep.subr.mxu0 0.0
  %2009 = vmatpush2.msra.mxu0 0.0
  %2010 = vmatprep.subr.mxu0 0.0
  %2011 = vmatpush2.msra.mxu0 0.0
  %2012 = vmatprep.mubr.f32.mxu0 0.0
  %2013 = vmatmul.mubr.f32.gmra.mxu0 %v1852
  %v2014 = vpop.f32.mrf.mxu0
  %v2015 = vadd.f32 0.0, %v2014
  %v2016 = vpop.f32.mrf.mxu0
  %2017 = vdwg.mxu0
  %v2018 = vadd.f32 %v48, %v2015
  %v2019 = vmul.f32 %v2018, 0.5
  %v2020 = vsel %vm72, %v2018, %v2019
  %v2021 = vtanh.pop %v2020
  %v2022 = vmul.f32 %v2021, 0.5
  %v2023 = vadd.f32 %v2022, 0.5
  %v2024 = vsel %vm72, %v2021, %v2023
  %v2025 = vmul.f32 %v2024, %v1767
  %2027 = vrot.lane.b32.xlu0 %v2024, 64
  %v2028 = vpop.permute.xlu0 %2027
  %v2030 = vmul.f32 %v2024, %v2028
  %2032 = vrot.lane.b32.xlu0 %v2030, 32
  %v2033 = vpop.permute.xlu0 %2032
  %v2035 = vadd.f32 %v2025, %v2033
  %v2036 = vtanh.pop %v2035
  %2038 = vrot.lane.b32.xlu0 %v2036, 64
  %v2039 = vpop.permute.xlu0 %2038
  %v2041 = vmul.f32 %v2024, %v2039
  %2043 = vrot.lane.b32.xlu0 %v1947, 32
  %v2044 = vpop.permute.xlu0 %2043
  %v2045 = vsel %vm73, %v2044, 0
  %2047 = vmatprep.subr.mxu0 0.0
  %2048 = vmatpush1.msra.mxu0 0.0
  %2049 = vmatprep.subr.mxu0 0.0
  %2050 = vmatpush1.msra.mxu0 0.0
  %2051 = vmatprep.subr.mxu0 0.0
  %2052 = vmatpush1.msra.mxu0 0.0
  %2053 = vmatprep.subr.mxu0 0.0
  %2054 = vmatpush1.msra.mxu0 0.0
  %2055 = vmatprep.subr.mxu0 0.0
  %2056 = vmatpush1.msra.mxu0 0.0
  %2057 = vmatprep.subr.mxu0 0.0
  %2058 = vmatpush1.msra.mxu0 0.0
  %2059 = vmatprep.subr.mxu0 0.0
  %2060 = vmatpush1.msra.mxu0 0.0
  %2061 = vmatprep.subr.mxu0 0.0
  %2062 = vmatpush1.msra.mxu0 0.0
  %2063 = vmatprep.subr.mxu0 0.0
  %2064 = vmatpush1.msra.mxu0 0.0
  %2065 = vmatprep.subr.mxu0 0.0
  %2066 = vmatpush1.msra.mxu0 0.0
  %2067 = vmatprep.subr.mxu0 0.0
  %2068 = vmatpush1.msra.mxu0 0.0
  %2069 = vmatprep.subr.mxu0 0.0
  %2070 = vmatpush1.msra.mxu0 0.0
  %2071 = vmatprep.subr.mxu0 0.0
  %2072 = vmatpush1.msra.mxu0 %v60
  %2073 = vmatprep.subr.mxu0 0.0
  %2074 = vmatpush1.msra.mxu0 %v59
  %2075 = vmatprep.subr.mxu0 0.0
  %2076 = vmatpush1.msra.mxu0 %v58
  %2077 = vmatprep.subr.mxu0 0.0
  %2078 = vmatpush1.msra.mxu0 %v57
  %2079 = vmatprep.subr.mxu0 0.0
  %2080 = vmatpush2.msra.mxu0 0.0
  %2081 = vmatprep.subr.mxu0 0.0
  %2082 = vmatpush2.msra.mxu0 0.0
  %2083 = vmatprep.subr.mxu0 0.0
  %2084 = vmatpush2.msra.mxu0 0.0
  %2085 = vmatprep.subr.mxu0 0.0
  %2086 = vmatpush2.msra.mxu0 0.0
  %2087 = vmatprep.subr.mxu0 0.0
  %2088 = vmatpush2.msra.mxu0 0.0
  %2089 = vmatprep.subr.mxu0 0.0
  %2090 = vmatpush2.msra.mxu0 0.0
  %2091 = vmatprep.subr.mxu0 0.0
  %2092 = vmatpush2.msra.mxu0 0.0
  %2093 = vmatprep.subr.mxu0 0.0
  %2094 = vmatpush2.msra.mxu0 0.0
  %2095 = vmatprep.subr.mxu0 0.0
  %2096 = vmatpush2.msra.mxu0 0.0
  %2097 = vmatprep.subr.mxu0 0.0
  %2098 = vmatpush2.msra.mxu0 0.0
  %2099 = vmatprep.subr.mxu0 0.0
  %2100 = vmatpush2.msra.mxu0 0.0
  %2101 = vmatprep.subr.mxu0 0.0
  %2102 = vmatpush2.msra.mxu0 0.0
  %2103 = vmatprep.subr.mxu0 0.0
  %2104 = vmatpush2.msra.mxu0 0.0
  %2105 = vmatprep.subr.mxu0 0.0
  %2106 = vmatpush2.msra.mxu0 0.0
  %2107 = vmatprep.subr.mxu0 0.0
  %2108 = vmatpush2.msra.mxu0 0.0
  %2109 = vmatprep.subr.mxu0 0.0
  %2110 = vmatpush2.msra.mxu0 0.0
  %2111 = vmatprep.mubr.f32.mxu0 0.0
  %2112 = vmatmul.mubr.f32.gmra.mxu0 %v2045
  %v2113 = vpop.f32.mrf.mxu0
  %v2114 = vadd.f32 0.0, %v2113
  %v2115 = vpop.f32.mrf.mxu0
  %2116 = vdwg.mxu0
  %2118 = vrot.lane.b32.xlu0 %v2041, 32
  %v2119 = vpop.permute.xlu0 %2118
  %v2120 = vsel %vm73, %v2119, 0
  %2122 = vmatprep.subr.mxu0 0.0
  %2123 = vmatpush1.msra.mxu0 0.0
  %2124 = vmatprep.subr.mxu0 0.0
  %2125 = vmatpush1.msra.mxu0 0.0
  %2126 = vmatprep.subr.mxu0 0.0
  %2127 = vmatpush1.msra.mxu0 0.0
  %2128 = vmatprep.subr.mxu0 0.0
  %2129 = vmatpush1.msra.mxu0 0.0
  %2130 = vmatprep.subr.mxu0 0.0
  %2131 = vmatpush1.msra.mxu0 0.0
  %2132 = vmatprep.subr.mxu0 0.0
  %2133 = vmatpush1.msra.mxu0 0.0
  %2134 = vmatprep.subr.mxu0 0.0
  %2135 = vmatpush1.msra.mxu0 0.0
  %2136 = vmatprep.subr.mxu0 0.0
  %2137 = vmatpush1.msra.mxu0 0.0
  %2138 = vmatprep.subr.mxu0 0.0
  %2139 = vmatpush1.msra.mxu0 0.0
  %2140 = vmatprep.subr.mxu0 0.0
  %2141 = vmatpush1.msra.mxu0 0.0
  %2142 = vmatprep.subr.mxu0 0.0
  %2143 = vmatpush1.msra.mxu0 0.0
  %2144 = vmatprep.subr.mxu0 0.0
  %2145 = vmatpush1.msra.mxu0 0.0
  %2146 = vmatprep.subr.mxu0 0.0
  %2147 = vmatpush1.msra.mxu0 %v56
  %2148 = vmatprep.subr.mxu0 0.0
  %2149 = vmatpush1.msra.mxu0 %v55
  %2150 = vmatprep.subr.mxu0 0.0
  %2151 = vmatpush1.msra.mxu0 %v54
  %2152 = vmatprep.subr.mxu0 0.0
  %2153 = vmatpush1.msra.mxu0 %v53
  %2154 = vmatprep.subr.mxu0 0.0
  %2155 = vmatpush2.msra.mxu0 0.0
  %2156 = vmatprep.subr.mxu0 0.0
  %2157 = vmatpush2.msra.mxu0 0.0
  %2158 = vmatprep.subr.mxu0 0.0
  %2159 = vmatpush2.msra.mxu0 0.0
  %2160 = vmatprep.subr.mxu0 0.0
  %2161 = vmatpush2.msra.mxu0 0.0
  %2162 = vmatprep.subr.mxu0 0.0
  %2163 = vmatpush2.msra.mxu0 0.0
  %2164 = vmatprep.subr.mxu0 0.0
  %2165 = vmatpush2.msra.mxu0 0.0
  %2166 = vmatprep.subr.mxu0 0.0
  %2167 = vmatpush2.msra.mxu0 0.0
  %2168 = vmatprep.subr.mxu0 0.0
  %2169 = vmatpush2.msra.mxu0 0.0
  %2170 = vmatprep.subr.mxu0 0.0
  %2171 = vmatpush2.msra.mxu0 0.0
  %2172 = vmatprep.subr.mxu0 0.0
  %2173 = vmatpush2.msra.mxu0 0.0
  %2174 = vmatprep.subr.mxu0 0.0
  %2175 = vmatpush2.msra.mxu0 0.0
  %2176 = vmatprep.subr.mxu0 0.0
  %2177 = vmatpush2.msra.mxu0 0.0
  %2178 = vmatprep.subr.mxu0 0.0
  %2179 = vmatpush2.msra.mxu0 0.0
  %2180 = vmatprep.subr.mxu0 0.0
  %2181 = vmatpush2.msra.mxu0 0.0
  %2182 = vmatprep.subr.mxu0 0.0
  %2183 = vmatpush2.msra.mxu0 0.0
  %2184 = vmatprep.subr.mxu0 0.0
  %2185 = vmatpush2.msra.mxu0 0.0
  %2186 = vmatprep.mubr.f32.mxu0 0.0
  %2187 = vmatmul.mubr.f32.gmra.mxu0 %v2120
  %v2188 = vpop.f32.mrf.mxu0
  %v2189 = vadd.f32 %v2114, %v2188
  %v2190 = vpop.f32.mrf.mxu0
  %2191 = vdwg.mxu0
  %v2192 = vadd.f32 %v2189, %v66
  %v2193 = vmul.f32 %v2192, 0.5
  %v2194 = vsel %vm72, %v2192, %v2193
  %v2195 = vtanh.pop %v2194
  %v2196 = vmul.f32 %v2195, 0.5
  %v2197 = vadd.f32 %v2196, 0.5
  %v2198 = vsel %vm72, %v2195, %v2197
  %v2199 = vmul.f32 %v2198, %v1941
  %2201 = vrot.lane.b32.xlu0 %v2198, 64
  %v2202 = vpop.permute.xlu0 %2201
  %v2204 = vmul.f32 %v2198, %v2202
  %2206 = vrot.lane.b32.xlu0 %v2204, 32
  %v2207 = vpop.permute.xlu0 %2206
  %v2209 = vadd.f32 %v2199, %v2207
  %v2210 = vtanh.pop %v2209
  %2212 = vrot.lane.b32.xlu0 %v2210, 64
  %v2213 = vpop.permute.xlu0 %2212
  %v2215 = vmul.f32 %v2198, %v2213
  %v2216 = vld [vmem:[%s5] sm:$0xff]
  %v2217 = vld [vmem:[%s5 + $0x8] sm:$0xff]
  %v2218 = vld [vmem:[%s5 + $0x10] sm:$0xff]
  %v2219 = vld [vmem:[%s5 + $0x18] sm:$0xff]
  %v2220 = vld [vmem:[%s5 + $0x20] sm:$0xff]
  %v2221 = vld [vmem:[%s5 + $0x28] sm:$0xff]
  %v2222 = vld [vmem:[%s5 + $0x30] sm:$0xff]
  %v2223 = vld [vmem:[%s5 + $0x38] sm:$0xff]
  %v2224 = vld [vmem:[%s6] sm:$0xff]
  %v2225 = vld [vmem:[%s6 + $0x8] sm:$0xff]
  %v2226 = vld [vmem:[%s6 + $0x10] sm:$0xff]
  %v2227 = vld [vmem:[%s6 + $0x18] sm:$0xff]
  %v2228 = vld [vmem:[%s6 + $0x20] sm:$0xff]
  %v2229 = vld [vmem:[%s6 + $0x28] sm:$0xff]
  %v2230 = vld [vmem:[%s6 + $0x30] sm:$0xff]
  %v2231 = vld [vmem:[%s6 + $0x38] sm:$0xff]
  %2233 = vrot.lane.b32.xlu0 %v2215, 32
  %v2234 = vpop.permute.xlu0 %2233
  %v2235 = vsel %vm73, %v2234, 0
  %2237 = vmatprep.subr.mxu0 0.0
  %2238 = vmatpush1.msra.mxu0 0.0
  %2239 = vmatprep.subr.mxu0 0.0
  %2240 = vmatpush1.msra.mxu0 0.0
  %2241 = vmatprep.subr.mxu0 0.0
  %2242 = vmatpush1.msra.mxu0 0.0
  %2243 = vmatprep.subr.mxu0 0.0
  %2244 = vmatpush1.msra.mxu0 0.0
  %2245 = vmatprep.subr.mxu0 0.0
  %2246 = vmatpush1.msra.mxu0 0.0
  %2247 = vmatprep.subr.mxu0 0.0
  %2248 = vmatpush1.msra.mxu0 0.0
  %2249 = vmatprep.subr.mxu0 0.0
  %2250 = vmatpush1.msra.mxu0 0.0
  %2251 = vmatprep.subr.mxu0 0.0
  %2252 = vmatpush1.msra.mxu0 0.0
  %2253 = vmatprep.subr.mxu0 0.0
  %2254 = vmatpush1.msra.mxu0 0.0
  %2255 = vmatprep.subr.mxu0 0.0
  %2256 = vmatpush1.msra.mxu0 0.0
  %2257 = vmatprep.subr.mxu0 0.0
  %2258 = vmatpush1.msra.mxu0 0.0
  %2259 = vmatprep.subr.mxu0 0.0
  %2260 = vmatpush1.msra.mxu0 0.0
  %2261 = vmatprep.subr.mxu0 %v2231
  %2262 = vmatpush1.msra.mxu0 %v2230
  %2263 = vmatprep.subr.mxu0 %v2229
  %2264 = vmatpush1.msra.mxu0 %v2228
  %2265 = vmatprep.subr.mxu0 %v2227
  %2266 = vmatpush1.msra.mxu0 %v2226
  %2267 = vmatprep.subr.mxu0 %v2225
  %2268 = vmatpush1.msra.mxu0 %v2224
  %2269 = vmatprep.subr.mxu0 0.0
  %2270 = vmatpush2.msra.mxu0 0.0
  %2271 = vmatprep.subr.mxu0 0.0
  %2272 = vmatpush2.msra.mxu0 0.0
  %2273 = vmatprep.subr.mxu0 0.0
  %2274 = vmatpush2.msra.mxu0 0.0
  %2275 = vmatprep.subr.mxu0 0.0
  %2276 = vmatpush2.msra.mxu0 0.0
  %2277 = vmatprep.subr.mxu0 0.0
  %2278 = vmatpush2.msra.mxu0 0.0
  %2279 = vmatprep.subr.mxu0 0.0
  %2280 = vmatpush2.msra.mxu0 0.0
  %2281 = vmatprep.subr.mxu0 0.0
  %2282 = vmatpush2.msra.mxu0 0.0
  %2283 = vmatprep.subr.mxu0 0.0
  %2284 = vmatpush2.msra.mxu0 0.0
  %2285 = vmatprep.subr.mxu0 0.0
  %2286 = vmatpush2.msra.mxu0 0.0
  %2287 = vmatprep.subr.mxu0 0.0
  %2288 = vmatpush2.msra.mxu0 0.0
  %2289 = vmatprep.subr.mxu0 0.0
  %2290 = vmatpush2.msra.mxu0 0.0
  %2291 = vmatprep.subr.mxu0 0.0
  %2292 = vmatpush2.msra.mxu0 0.0
  %2293 = vmatprep.subr.mxu0 0.0
  %2294 = vmatpush2.msra.mxu0 0.0
  %2295 = vmatprep.subr.mxu0 0.0
  %2296 = vmatpush2.msra.mxu0 0.0
  %2297 = vmatprep.subr.mxu0 0.0
  %2298 = vmatpush2.msra.mxu0 0.0
  %2299 = vmatprep.subr.mxu0 0.0
  %2300 = vmatpush2.msra.mxu0 0.0
  %2301 = vmatprep.mubr.f32.mxu0 0.0
  %2302 = vmatmul.mubr.f32.gmra.mxu0 %v2235
  %v2303 = vpop.f32.mrf.mxu0
  %v2304 = vadd.f32 0.0, %v2303
  %v2305 = vpop.f32.mrf.mxu0
  %v2306 = vadd.f32 0.0, %v2305
  %2307 = vdwg.mxu0
  %2308 = vmatprep.subr.mxu0 0.0
  %2309 = vmatpush1.msra.mxu0 0.0
  %2310 = vmatprep.subr.mxu0 0.0
  %2311 = vmatpush1.msra.mxu0 0.0
  %2312 = vmatprep.subr.mxu0 0.0
  %2313 = vmatpush1.msra.mxu0 0.0
  %2314 = vmatprep.subr.mxu0 0.0
  %2315 = vmatpush1.msra.mxu0 0.0
  %2316 = vmatprep.subr.mxu0 0.0
  %2317 = vmatpush1.msra.mxu0 0.0
  %2318 = vmatprep.subr.mxu0 0.0
  %2319 = vmatpush1.msra.mxu0 0.0
  %2320 = vmatprep.subr.mxu0 0.0
  %2321 = vmatpush1.msra.mxu0 0.0
  %2322 = vmatprep.subr.mxu0 0.0
  %2323 = vmatpush1.msra.mxu0 0.0
  %2324 = vmatprep.subr.mxu0 0.0
  %2325 = vmatpush1.msra.mxu0 0.0
  %2326 = vmatprep.subr.mxu0 0.0
  %2327 = vmatpush1.msra.mxu0 0.0
  %2328 = vmatprep.subr.mxu0 0.0
  %2329 = vmatpush1.msra.mxu0 0.0
  %2330 = vmatprep.subr.mxu0 0.0
  %2331 = vmatpush1.msra.mxu0 0.0
  %2332 = vmatprep.subr.mxu0 %v2223
  %2333 = vmatpush1.msra.mxu0 %v2222
  %2334 = vmatprep.subr.mxu0 %v2221
  %2335 = vmatpush1.msra.mxu0 %v2220
  %2336 = vmatprep.subr.mxu0 %v2219
  %2337 = vmatpush1.msra.mxu0 %v2218
  %2338 = vmatprep.subr.mxu0 %v2217
  %2339 = vmatpush1.msra.mxu0 %v2216
  %2340 = vmatprep.subr.mxu0 0.0
  %2341 = vmatpush2.msra.mxu0 0.0
  %2342 = vmatprep.subr.mxu0 0.0
  %2343 = vmatpush2.msra.mxu0 0.0
  %2344 = vmatprep.subr.mxu0 0.0
  %2345 = vmatpush2.msra.mxu0 0.0
  %2346 = vmatprep.subr.mxu0 0.0
  %2347 = vmatpush2.msra.mxu0 0.0
  %2348 = vmatprep.subr.mxu0 0.0
  %2349 = vmatpush2.msra.mxu0 0.0
  %2350 = vmatprep.subr.mxu0 0.0
  %2351 = vmatpush2.msra.mxu0 0.0
  %2352 = vmatprep.subr.mxu0 0.0
  %2353 = vmatpush2.msra.mxu0 0.0
  %2354 = vmatprep.subr.mxu0 0.0
  %2355 = vmatpush2.msra.mxu0 0.0
  %2356 = vmatprep.subr.mxu0 0.0
  %2357 = vmatpush2.msra.mxu0 0.0
  %2358 = vmatprep.subr.mxu0 0.0
  %2359 = vmatpush2.msra.mxu0 0.0
  %2360 = vmatprep.subr.mxu0 0.0
  %2361 = vmatpush2.msra.mxu0 0.0
  %2362 = vmatprep.subr.mxu0 0.0
  %2363 = vmatpush2.msra.mxu0 0.0
  %2364 = vmatprep.subr.mxu0 0.0
  %2365 = vmatpush2.msra.mxu0 0.0
  %2366 = vmatprep.subr.mxu0 0.0
  %2367 = vmatpush2.msra.mxu0 0.0
  %2368 = vmatprep.subr.mxu0 0.0
  %2369 = vmatpush2.msra.mxu0 0.0
  %2370 = vmatprep.subr.mxu0 0.0
  %2371 = vmatpush2.msra.mxu0 0.0
  %2372 = vmatprep.mubr.f32.mxu0 0.0
  %2373 = vmatmul.mubr.f32.gmra.mxu0 %v2120
  %v2374 = vpop.f32.mrf.mxu0
  %v2375 = vadd.f32 %v2304, %v2374
  %v2376 = vpop.f32.mrf.mxu0
  %v2377 = vadd.f32 %v2306, %v2376
  %2378 = vdwg.mxu0
  %v2379 = vld [vmem:[%s7] sm:$0x3]
  %v2381 = vlaneseq
  %v2382 = vshrl.u32 %v2381, 7
  %v2383 = vsub.s32 0, %v2382
  %v2384 = vrot.slane %v2379, %v2383
  %v2385 = vlaneseq
  %v2386 = vshrl.u32 %v2385, 7
  %v2387 = vsub.s32 1, %v2386
  %v2388 = vrot.slane %v2379, %v2387
  %v2391 = vadd.f32 %v2375, %v2384
  %v2392 = vadd.f32 %v2377, %v2388
  %v2393 = vmax.f32 %v2391, 0.0
  %v2394 = vmax.f32 %v2392, 0.0
  %v2395 = vld [vmem:[%s8] sm:$0xff]
  %v2396 = vld [vmem:[%s8 + $0x8] sm:$0xff]
  %v2397 = vld [vmem:[%s8 + $0x10] sm:$0xff]
  %v2398 = vld [vmem:[%s8 + $0x18] sm:$0xff]
  %v2399 = vld [vmem:[%s8 + $0x20] sm:$0xff]
  %v2400 = vld [vmem:[%s8 + $0x28] sm:$0xff]
  %v2401 = vld [vmem:[%s8 + $0x30] sm:$0xff]
  %v2402 = vld [vmem:[%s8 + $0x38] sm:$0xff]
  %v2403 = vld [vmem:[%s8 + $0x40] sm:$0xff]
  %v2404 = vld [vmem:[%s8 + $0x48] sm:$0xff]
  %v2405 = vld [vmem:[%s8 + $0x50] sm:$0xff]
  %v2406 = vld [vmem:[%s8 + $0x58] sm:$0xff]
  %v2407 = vld [vmem:[%s8 + $0x60] sm:$0xff]
  %v2408 = vld [vmem:[%s8 + $0x68] sm:$0xff]
  %v2409 = vld [vmem:[%s8 + $0x70] sm:$0xff]
  %v2410 = vld [vmem:[%s8 + $0x78] sm:$0xff]
  %v2411 = vld [vmem:[%s8 + $0x80] sm:$0xff]
  %v2412 = vld [vmem:[%s8 + $0x88] sm:$0xff]
  %v2413 = vld [vmem:[%s8 + $0x90] sm:$0xff]
  %v2414 = vld [vmem:[%s8 + $0x98] sm:$0xff]
  %v2415 = vld [vmem:[%s8 + $0xa0] sm:$0xff]
  %v2416 = vld [vmem:[%s8 + $0xa8] sm:$0xff]
  %v2417 = vld [vmem:[%s8 + $0xb0] sm:$0xff]
  %v2418 = vld [vmem:[%s8 + $0xb8] sm:$0xff]
  %v2419 = vld [vmem:[%s8 + $0xc0] sm:$0xff]
  %v2420 = vld [vmem:[%s8 + $0xc8] sm:$0xff]
  %v2421 = vld [vmem:[%s8 + $0xd0] sm:$0xff]
  %v2422 = vld [vmem:[%s8 + $0xd8] sm:$0xff]
  %v2423 = vld [vmem:[%s8 + $0xe0] sm:$0xff]
  %v2424 = vld [vmem:[%s8 + $0xe8] sm:$0xff]
  %v2425 = vld [vmem:[%s8 + $0xf0] sm:$0xff]
  %v2426 = vld [vmem:[%s8 + $0xf8] sm:$0xff]
  %v2427 = vld [vmem:[%s9] sm:$0x1]
  %v2429 = vlaneseq
  %v2430 = vshrl.u32 %v2429, 7
  %v2431 = vsub.s32 0, %v2430
  %v2432 = vrot.slane %v2427, %v2431
  %2434 = vmatprep.subr.mxu0 0.0
  %2435 = vmatpush1.msra.mxu0 %v2410
  %2436 = vmatprep.subr.mxu0 0.0
  %2437 = vmatpush1.msra.mxu0 %v2409
  %2438 = vmatprep.subr.mxu0 0.0
  %2439 = vmatpush1.msra.mxu0 %v2408
  %2440 = vmatprep.subr.mxu0 0.0
  %2441 = vmatpush1.msra.mxu0 %v2407
  %2442 = vmatprep.subr.mxu0 0.0
  %2443 = vmatpush1.msra.mxu0 %v2406
  %2444 = vmatprep.subr.mxu0 0.0
  %2445 = vmatpush1.msra.mxu0 %v2405
  %2446 = vmatprep.subr.mxu0 0.0
  %2447 = vmatpush1.msra.mxu0 %v2404
  %2448 = vmatprep.subr.mxu0 0.0
  %2449 = vmatpush1.msra.mxu0 %v2403
  %2450 = vmatprep.subr.mxu0 0.0
  %2451 = vmatpush1.msra.mxu0 %v2402
  %2452 = vmatprep.subr.mxu0 0.0
  %2453 = vmatpush1.msra.mxu0 %v2401
  %2454 = vmatprep.subr.mxu0 0.0
  %2455 = vmatpush1.msra.mxu0 %v2400
  %2456 = vmatprep.subr.mxu0 0.0
  %2457 = vmatpush1.msra.mxu0 %v2399
  %2458 = vmatprep.subr.mxu0 0.0
  %2459 = vmatpush1.msra.mxu0 %v2398
  %2460 = vmatprep.subr.mxu0 0.0
  %2461 = vmatpush1.msra.mxu0 %v2397
  %2462 = vmatprep.subr.mxu0 0.0
  %2463 = vmatpush1.msra.mxu0 %v2396
  %2464 = vmatprep.subr.mxu0 0.0
  %2465 = vmatpush1.msra.mxu0 %v2395
  %2466 = vmatprep.subr.mxu0 0.0
  %2467 = vmatpush2.msra.mxu0 %v2426
  %2468 = vmatprep.subr.mxu0 0.0
  %2469 = vmatpush2.msra.mxu0 %v2425
  %2470 = vmatprep.subr.mxu0 0.0
  %2471 = vmatpush2.msra.mxu0 %v2424
  %2472 = vmatprep.subr.mxu0 0.0
  %2473 = vmatpush2.msra.mxu0 %v2423
  %2474 = vmatprep.subr.mxu0 0.0
  %2475 = vmatpush2.msra.mxu0 %v2422
  %2476 = vmatprep.subr.mxu0 0.0
  %2477 = vmatpush2.msra.mxu0 %v2421
  %2478 = vmatprep.subr.mxu0 0.0
  %2479 = vmatpush2.msra.mxu0 %v2420
  %2480 = vmatprep.subr.mxu0 0.0
  %2481 = vmatpush2.msra.mxu0 %v2419
  %2482 = vmatprep.subr.mxu0 0.0
  %2483 = vmatpush2.msra.mxu0 %v2418
  %2484 = vmatprep.subr.mxu0 0.0
  %2485 = vmatpush2.msra.mxu0 %v2417
  %2486 = vmatprep.subr.mxu0 0.0
  %2487 = vmatpush2.msra.mxu0 %v2416
  %2488 = vmatprep.subr.mxu0 0.0
  %2489 = vmatpush2.msra.mxu0 %v2415
  %2490 = vmatprep.subr.mxu0 0.0
  %2491 = vmatpush2.msra.mxu0 %v2414
  %2492 = vmatprep.subr.mxu0 0.0
  %2493 = vmatpush2.msra.mxu0 %v2413
  %2494 = vmatprep.subr.mxu0 0.0
  %2495 = vmatpush2.msra.mxu0 %v2412
  %2496 = vmatprep.subr.mxu0 0.0
  %2497 = vmatpush2.msra.mxu0 %v2411
  %2498 = vmatprep.mubr.f32.mxu0 %v2394
  %2499 = vmatmul.mubr.f32.gmra.mxu0 %v2393
  %v2500 = vpop.f32.mrf.mxu0
  %v2501 = vadd.f32 %v2432, %v2500
  %v2502 = vpop.f32.mrf.mxu0
  %2503 = vdwg.mxu0
  %v2504 = vmax.f32 %v2501, 0.0
  %v2505 = vld [vmem:[%s10] sm:$0xff]
  %v2506 = vld [vmem:[%s10 + $0x8] sm:$0xff]
  %v2507 = vld [vmem:[%s10 + $0x10] sm:$0xff]
  %v2508 = vld [vmem:[%s10 + $0x18] sm:$0xff]
  %v2509 = vld [vmem:[%s10 + $0x20] sm:$0xff]
  %v2510 = vld [vmem:[%s10 + $0x28] sm:$0xff]
  %v2511 = vld [vmem:[%s10 + $0x30] sm:$0xff]
  %v2512 = vld [vmem:[%s10 + $0x38] sm:$0xff]
  %v2513 = vld [vmem:[%s11] sm:$0x1]
  %v2515 = vlaneseq
  %v2516 = vshrl.u32 %v2515, 7
  %v2517 = vsub.s32 0, %v2516
  %v2518 = vrot.slane %v2513, %v2517
  %vm2520 = vcmask 523264
  %v2522 = vsel %vm2520, %v2504, 0
  %2524 = vmatprep.subr.mxu0 0.0
  %2525 = vmatpush1.msra.mxu0 0.0
  %2526 = vmatprep.subr.mxu0 0.0
  %2527 = vmatpush1.msra.mxu0 0.0
  %2528 = vmatprep.subr.mxu0 0.0
  %2529 = vmatpush1.msra.mxu0 0.0
  %2530 = vmatprep.subr.mxu0 0.0
  %2531 = vmatpush1.msra.mxu0 0.0
  %2532 = vmatprep.subr.mxu0 0.0
  %2533 = vmatpush1.msra.mxu0 0.0
  %2534 = vmatprep.subr.mxu0 0.0
  %2535 = vmatpush1.msra.mxu0 0.0
  %2536 = vmatprep.subr.mxu0 0.0
  %2537 = vmatpush1.msra.mxu0 0.0
  %2538 = vmatprep.subr.mxu0 0.0
  %2539 = vmatpush1.msra.mxu0 0.0
  %2540 = vmatprep.subr.mxu0 0.0
  %2541 = vmatpush1.msra.mxu0 %v2512
  %2542 = vmatprep.subr.mxu0 0.0
  %2543 = vmatpush1.msra.mxu0 %v2511
  %2544 = vmatprep.subr.mxu0 0.0
  %2545 = vmatpush1.msra.mxu0 %v2510
  %2546 = vmatprep.subr.mxu0 0.0
  %2547 = vmatpush1.msra.mxu0 %v2509
  %2548 = vmatprep.subr.mxu0 0.0
  %2549 = vmatpush1.msra.mxu0 %v2508
  %2550 = vmatprep.subr.mxu0 0.0
  %2551 = vmatpush1.msra.mxu0 %v2507
  %2552 = vmatprep.subr.mxu0 0.0
  %2553 = vmatpush1.msra.mxu0 %v2506
  %2554 = vmatprep.subr.mxu0 0.0
  %2555 = vmatpush1.msra.mxu0 %v2505
  %2556 = vmatprep.subr.mxu0 0.0
  %2557 = vmatpush2.msra.mxu0 0.0
  %2558 = vmatprep.subr.mxu0 0.0
  %2559 = vmatpush2.msra.mxu0 0.0
  %2560 = vmatprep.subr.mxu0 0.0
  %2561 = vmatpush2.msra.mxu0 0.0
  %2562 = vmatprep.subr.mxu0 0.0
  %2563 = vmatpush2.msra.mxu0 0.0
  %2564 = vmatprep.subr.mxu0 0.0
  %2565 = vmatpush2.msra.mxu0 0.0
  %2566 = vmatprep.subr.mxu0 0.0
  %2567 = vmatpush2.msra.mxu0 0.0
  %2568 = vmatprep.subr.mxu0 0.0
  %2569 = vmatpush2.msra.mxu0 0.0
  %2570 = vmatprep.subr.mxu0 0.0
  %2571 = vmatpush2.msra.mxu0 0.0
  %2572 = vmatprep.subr.mxu0 0.0
  %2573 = vmatpush2.msra.mxu0 0.0
  %2574 = vmatprep.subr.mxu0 0.0
  %2575 = vmatpush2.msra.mxu0 0.0
  %2576 = vmatprep.subr.mxu0 0.0
  %2577 = vmatpush2.msra.mxu0 0.0
  %2578 = vmatprep.subr.mxu0 0.0
  %2579 = vmatpush2.msra.mxu0 0.0
  %2580 = vmatprep.subr.mxu0 0.0
  %2581 = vmatpush2.msra.mxu0 0.0
  %2582 = vmatprep.subr.mxu0 0.0
  %2583 = vmatpush2.msra.mxu0 0.0
  %2584 = vmatprep.subr.mxu0 0.0
  %2585 = vmatpush2.msra.mxu0 0.0
  %2586 = vmatprep.subr.mxu0 0.0
  %2587 = vmatpush2.msra.mxu0 0.0
  %2588 = vmatprep.mubr.f32.mxu0 0.0
  %2589 = vmatmul.mubr.f32.gmra.mxu0 %v2522
  %v2590 = vpop.f32.mrf.mxu0
  %v2591 = vadd.f32 %v2518, %v2590
  %v2592 = vpop.f32.mrf.mxu0
  %2593 = vdwg.mxu0
  %vm2594 = vcmask 31744
  %2595 = vst.msk [vmem:[%s12] sm:$0xff] %vm2594, %v2591
  // Predicated region
  $region50: #{network_forward.1} parent=0 // pred_check
    _
  $region51: #{network_forward.1} parent=0 // pred_check_branch
    %2597 = sbr.rel (0) target = $region53
  $region52: #{network_forward.1} parent=0 // pred_region
    _
  $region53: #{network_forward.1} parent=0 // pred_fallthru
    _
  // Predicated region
  $region54: #{network_forward.1} parent=0 // pred_check
    _
  $region55: #{network_forward.1} parent=0 // pred_check_branch
    %2599 = sbr.rel (0) target = $region57
  $region56: #{network_forward.1} parent=0 // pred_region
    _
  $region57: #{network_forward.1} parent=0 // pred_fallthru
    _

</llo_original>
